<compile_context>
chip_gen: v7x
topology: tpu7x:2x2x1
jax: 0.10.0
libtpu: 0.0.40
codegen_flags: <defaults>
</compile_context>

<pallas_src>
import functools
import math

import jax
import jax.numpy as jnp
from jax.experimental import pallas as pl
from jax.experimental.pallas import tpu as pltpu

_LN_EPS = 1e-5  # torch.nn.LayerNorm default


# ----------------------------- kernel helpers ------------------------------

def _layernorm(z, gamma, beta, eps):
    mean = jnp.mean(z, axis=-1, keepdims=True)
    var = jnp.mean(jnp.square(z - mean), axis=-1, keepdims=True)
    zn = (z - mean) * jax.lax.rsqrt(var + eps)
    return zn * gamma + beta


def _attention_out_ln(q, k, v, bias, wo, bo, residual, gamma, beta, o_ref,
                      *, num_heads, scale, eps):
    """Scaled-dot attention (all heads in one block, lane-dense context),
    output projection, residual add + LayerNorm.  Writes o_ref[0]."""
    sq, d = q.shape
    sk = k.shape[0]
    dh = d // num_heads
    q3 = q.reshape(sq, num_heads, dh)
    k3 = k.reshape(sk, num_heads, dh)
    v3 = v.reshape(sk, num_heads, dh)
    # [H, Sq, Sk]; contraction over dh, heads as batch dim (no explicit K^T).
    s = jnp.einsum("qhd,khd->hqk", q3, k3,
                   preferred_element_type=jnp.float32) * scale
    if bias is not None:
        s = s + bias[None, :, :]
    s = s - jnp.max(s, axis=-1, keepdims=True)
    p = jnp.exp(s)
    p = p * pl.reciprocal(jnp.sum(p, axis=-1, keepdims=True), approx=True)
    # lane-dense context: [Sq, H*dh] == [Sq, D]
    ctx = jnp.einsum("hqk,khd->qhd", p, v3,
                     preferred_element_type=jnp.float32).reshape(sq, d)
    out = jnp.dot(ctx, wo, preferred_element_type=jnp.float32) + bo
    z = residual + out
    o_ref[0] = _layernorm(z, gamma, beta, eps).astype(o_ref.dtype)


# ------------------------------ fused kernels -------------------------------

def _self_attn_ln_kernel(x_ref, pad_ref, wqkv_ref, bqkv_ref, wo_ref, bo_ref,
                         g_ref, b_ref, o_ref, *, num_heads, scale, eps):
    # One batch element per grid step: x [1,S,D], pad [1,1,S] (1.0 = key is padding)
    x = x_ref[0]                                     # [S, D]
    s_len, d = x.shape
    qkv = jnp.dot(x, wqkv_ref[...],
                  preferred_element_type=jnp.float32) + bqkv_ref[...]
    q, k, v = qkv[:, :d], qkv[:, d:2 * d], qkv[:, 2 * d:]
    # Build causal + key-padding mask in-kernel as an additive bias.
    row = jax.lax.broadcasted_iota(jnp.int32, (s_len, s_len), 0)
    col = jax.lax.broadcasted_iota(jnp.int32, (s_len, s_len), 1)
    masked = jnp.logical_or(col > row, pad_ref[0] > 0.0)     # [S,S] | [1,S]
    bias = jnp.where(masked, jnp.float32(-1e9), jnp.float32(0.0))
    _attention_out_ln(q, k, v, bias, wo_ref[...], bo_ref[...], x,
                      g_ref[...], b_ref[...], o_ref,
                      num_heads=num_heads, scale=scale, eps=eps)


def _cross_attn_ln_kernel(q_in_ref, kv_in_ref, wqkv_ref, bqkv_ref, wo_ref,
                          bo_ref, g_ref, b_ref, o_ref,
                          *, num_heads, scale, eps):
    # context_attn_mask is None in the reference -> no masking in cross attention.
    xq = q_in_ref[0]                                 # [Sq, D] (decoder state)
    xkv = kv_in_ref[0]                               # [Sk, D] (encoder output)
    d = xq.shape[1]
    q = jnp.dot(xq, wqkv_ref[:, :d],
                preferred_element_type=jnp.float32) + bqkv_ref[:, :d]
    kv = jnp.dot(xkv, wqkv_ref[:, d:],
                 preferred_element_type=jnp.float32) + bqkv_ref[:, d:]
    k, v = kv[:, :d], kv[:, d:]
    _attention_out_ln(q, k, v, None, wo_ref[...], bo_ref[...], xq,
                      g_ref[...], b_ref[...], o_ref,
                      num_heads=num_heads, scale=scale, eps=eps)


def _ffn_ln_kernel(x_ref, w1_ref, b1_ref, w2_ref, b2_ref, g_ref, b_ref, o_ref,
                   *, eps):
    # Conv1d(k=1) == linear over features: w1 + ReLU + w2 + residual + LayerNorm.
    x = x_ref[...]
    h = jnp.maximum(
        jnp.dot(x, w1_ref[...], preferred_element_type=jnp.float32) + b1_ref[...],
        0.0)
    y = jnp.dot(h, w2_ref[...], preferred_element_type=jnp.float32) + b2_ref[...]
    o_ref[...] = _layernorm(x + y, g_ref[...], b_ref[...], eps).astype(o_ref.dtype)


# ------------------------------ pallas wrappers ------------------------------

def fused_self_attention(x, pad, p, num_heads):
    b, s, d = x.shape
    scale = 1.0 / math.sqrt(d // num_heads)
    const2 = lambda i: (0, 0)
    return pl.pallas_call(
        functools.partial(_self_attn_ln_kernel,
                          num_heads=num_heads, scale=scale, eps=_LN_EPS),
        out_shape=jax.ShapeDtypeStruct((b, s, d), x.dtype),
        grid=(b,),
        in_specs=[
            pl.BlockSpec((1, s, d), lambda i: (i, 0, 0)),       # x
            pl.BlockSpec((1, 1, s), lambda i: (i, 0, 0)),       # key-pad vector
            pl.BlockSpec((d, 3 * d), const2),                   # Wqkv (fused)
            pl.BlockSpec((1, 3 * d), const2),                   # bqkv
            pl.BlockSpec((d, d), const2),                       # Wo
            pl.BlockSpec((1, d), const2),                       # bo
            pl.BlockSpec((1, d), const2),                       # ln gamma
            pl.BlockSpec((1, d), const2),                       # ln beta
        ],
        out_specs=pl.BlockSpec((1, s, d), lambda i: (i, 0, 0)),
        compiler_params=pltpu.CompilerParams(
            dimension_semantics=("parallel",)),
    )(x, pad, p["wqkv"], p["bqkv"], p["wo"], p["bo"], p["ln_g"], p["ln_b"])


def fused_cross_attention(dec, enc, p, num_heads):
    b, sq, d = dec.shape
    sk = enc.shape[1]
    scale = 1.0 / math.sqrt(d // num_heads)
    const2 = lambda i: (0, 0)
    return pl.pallas_call(
        functools.partial(_cross_attn_ln_kernel,
                          num_heads=num_heads, scale=scale, eps=_LN_EPS),
        out_shape=jax.ShapeDtypeStruct((b, sq, d), dec.dtype),
        grid=(b,),
        in_specs=[
            pl.BlockSpec((1, sq, d), lambda i: (i, 0, 0)),      # query source (decoder)
            pl.BlockSpec((1, sk, d), lambda i: (i, 0, 0)),      # key/value source (encoder)
            pl.BlockSpec((d, 3 * d), const2),                   # shared Wqkv (tutorial reuses module)
            pl.BlockSpec((1, 3 * d), const2),
            pl.BlockSpec((d, d), const2),
            pl.BlockSpec((1, d), const2),
            pl.BlockSpec((1, d), const2),
            pl.BlockSpec((1, d), const2),
        ],
        out_specs=pl.BlockSpec((1, sq, d), lambda i: (i, 0, 0)),
        compiler_params=pltpu.CompilerParams(
            dimension_semantics=("parallel",)),
    )(dec, enc, p["wqkv"], p["bqkv"], p["wo"], p["bo"], p["ln_g"], p["ln_b"])


def _pick_token_tile(m):
    for t in (512, 256, 128):
        if m % t == 0:
            return t
    return m


def fused_ffn(x, p):
    b, s, d = x.shape
    m = b * s
    dff = p["w1"].shape[1]
    tm = _pick_token_tile(m)
    x2 = x.reshape(m, d)
    const2 = lambda i: (0, 0)
    out = pl.pallas_call(
        functools.partial(_ffn_ln_kernel, eps=_LN_EPS),
        out_shape=jax.ShapeDtypeStruct((m, d), x.dtype),
        grid=(m // tm,),
        in_specs=[
            pl.BlockSpec((tm, d), lambda i: (i, 0)),            # tokens tile
            pl.BlockSpec((d, dff), const2),                     # W1
            pl.BlockSpec((1, dff), const2),                     # b1
            pl.BlockSpec((dff, d), const2),                     # W2
            pl.BlockSpec((1, d), const2),                       # b2
            pl.BlockSpec((1, d), const2),                       # ln gamma
            pl.BlockSpec((1, d), const2),                       # ln beta
        ],
        out_specs=pl.BlockSpec((tm, d), lambda i: (i, 0)),
        compiler_params=pltpu.CompilerParams(
            dimension_semantics=("parallel",)),
    )(x2, p["w1"], p["b1"], p["w2"], p["b2"], p["ln_g"], p["ln_b"])
    return out.reshape(b, s, d)


# --------------------------- model building blocks --------------------------

def decoder_layer(p, dec_input, enc_output, pad, num_heads):
    # Tutorial DecoderLayer: attention(dec,dec,dec,self_mask) ->
    # attention(enc,enc,out,None) -> FFN; same attention module for both.
    out = fused_self_attention(dec_input, pad, p["attn"], num_heads)
    out = fused_cross_attention(out, enc_output, p["attn"], num_heads)
    return fused_ffn(out, p["ffn"])


def positional_encoding(seq_len, d_model):
    pos = jnp.arange(seq_len, dtype=jnp.float32)[:, None]
    i = jnp.arange(d_model, dtype=jnp.float32)[None, :]
    angle = pos / jnp.power(10000.0, 2.0 * jnp.floor(i / 2.0) / d_model)
    even = (jnp.arange(d_model) % 2) == 0
    return jnp.where(even[None, :], jnp.sin(angle), jnp.cos(angle))  # [S, D]


def decoder_forward(params, inputs, enc_output, firstmask, num_heads):
    b, s = inputs.shape
    d = params["embedding"].shape[1]
    output = params["embedding"][inputs]                       # seq_embedding (gather in XLA)
    output = output + positional_encoding(s, d)[None]          # pos_embedding(S)
    # Only a thin [B,1,S] key-padding vector is shipped to the kernels; the
    # causal part of self_attn_mask is rebuilt in-kernel.  Firstmask is only
    # consulted for the query length in the tutorial, and Lq == S here.
    del firstmask
    pad = (inputs == 0).astype(jnp.float32).reshape(b, 1, s)
    for layer_p in params["layers"]:
        output = decoder_layer(layer_p, output, enc_output, pad, num_heads)
    return output


# ------------------------------- parameters --------------------------------

def init_params(key, vocab_size, num_layers, model_dim, ffn_dim):
    keys = iter(jax.random.split(key, 1 + 4 * num_layers))
    emb = 0.02 * jax.random.normal(next(keys), (vocab_size, model_dim), jnp.float32)
    emb = emb.at[0].set(0.0)                                   # padding_idx=0
    layers = []
    for _ in range(num_layers):
        attn = dict(
            wqkv=0.02 * jax.random.normal(next(keys), (model_dim, 3 * model_dim), jnp.float32),
            bqkv=jnp.zeros((1, 3 * model_dim), jnp.float32),
            wo=0.02 * jax.random.normal(next(keys), (model_dim, model_dim), jnp.float32),
            bo=jnp.zeros((1, model_dim), jnp.float32),
            ln_g=jnp.ones((1, model_dim), jnp.float32),
            ln_b=jnp.zeros((1, model_dim), jnp.float32),
        )
        ffn = dict(
            w1=0.02 * jax.random.normal(next(keys), (model_dim, ffn_dim), jnp.float32),
            b1=jnp.zeros((1, ffn_dim), jnp.float32),
            w2=0.02 * jax.random.normal(next(keys), (ffn_dim, model_dim), jnp.float32),
            b2=jnp.zeros((1, model_dim), jnp.float32),
            ln_g=jnp.ones((1, model_dim), jnp.float32),
            ln_b=jnp.zeros((1, model_dim), jnp.float32),
        )
        layers.append({"attn": attn, "ffn": ffn})
    return {"embedding": emb, "layers": layers}


# ---------------------------------- main ------------------------------------

if __name__ == "__main__":
    vocab_size, max_len = 50, 16
    num_layers, model_dim, num_heads, ffn_dim = 2, 32, 4, 64
    B, S = 2, 8

    root = jax.random.PRNGKey(0)
    pkey, ikey, ekey = jax.random.split(root, 3)

    params = init_params(pkey, vocab_size, num_layers, model_dim, ffn_dim)

    inputs = jax.random.randint(ikey, (B, S), 1, vocab_size, dtype=jnp.int32)
    inputs = inputs.at[:, -2:].set(0)                 # trailing padding tokens
    enc_output = jax.random.normal(ekey, (B, S, model_dim), jnp.float32)
    firstmask = jnp.zeros((B, S, S), jnp.float32)     # only its seq-len is used

    fwd = jax.jit(decoder_forward, static_argnums=(4,))
    out = fwd(params, inputs, enc_output, firstmask, num_heads)
    out = jax.block_until_ready(out)
    assert out.shape == (B, S, model_dim) and out.dtype == jnp.float32
    assert bool(jnp.all(jnp.isfinite(out)))
    print("KERNEL_OK")
</pallas_src>

<mosaic_0001>
module attributes {stable_mosaic.version = 11 : i64} {
  func.func @_self_attn_ln_kernel(%arg0: i32, %arg1: memref<1x8x32xf32, #tpu.memory_space<vmem>>, %arg2: memref<1x1x8xf32, #tpu.memory_space<vmem>>, %arg3: memref<32x96xf32, #tpu.memory_space<vmem>>, %arg4: memref<1x96xf32, #tpu.memory_space<vmem>>, %arg5: memref<32x32xf32, #tpu.memory_space<vmem>>, %arg6: memref<1x32xf32, #tpu.memory_space<vmem>>, %arg7: memref<1x32xf32, #tpu.memory_space<vmem>>, %arg8: memref<1x32xf32, #tpu.memory_space<vmem>>, %arg9: memref<1x8x32xf32, #tpu.memory_space<vmem>>) attributes {dimension_semantics = [#tpu.dimension_semantics<parallel>], iteration_bounds = array<i64: 2>, scalar_prefetch = 0 : i64, scratch_operands = 0 : i64, tpu.core_type = #tpu.core_type<tc>, window_params = [{transform_indices = @transform_0, window_bounds = array<i64: 1, 8, 32>}, {transform_indices = @transform_1, window_bounds = array<i64: 1, 1, 8>}, {pipeline_mode = #tpu.pipeline_mode<synchronous>, transform_indices = @transform_2, window_bounds = array<i64: 32, 96>}, {pipeline_mode = #tpu.pipeline_mode<synchronous>, transform_indices = @transform_3, window_bounds = array<i64: 1, 96>}, {pipeline_mode = #tpu.pipeline_mode<synchronous>, transform_indices = @transform_4, window_bounds = array<i64: 32, 32>}, {pipeline_mode = #tpu.pipeline_mode<synchronous>, transform_indices = @transform_5, window_bounds = array<i64: 1, 32>}, {pipeline_mode = #tpu.pipeline_mode<synchronous>, transform_indices = @transform_6, window_bounds = array<i64: 1, 32>}, {pipeline_mode = #tpu.pipeline_mode<synchronous>, transform_indices = @transform_7, window_bounds = array<i64: 1, 32>}, {transform_indices = @transform_8, window_bounds = array<i64: 1, 8, 32>}]} {
    %c0 = arith.constant 0 : index
    %c0_0 = arith.constant 0 : index
    %c0_1 = arith.constant 0 : index
    %0 = vector.load %arg1[%c0, %c0_0, %c0_1] : memref<1x8x32xf32, #tpu.memory_space<vmem>>, vector<1x8x32xf32>
    %1 = vector.shape_cast %0 : vector<1x8x32xf32> to vector<8x32xf32>
    %c0_2 = arith.constant 0 : index
    %c0_3 = arith.constant 0 : index
    %2 = vector.load %arg3[%c0_2, %c0_3] : memref<32x96xf32, #tpu.memory_space<vmem>>, vector<32x96xf32>
    %cst = arith.constant dense<0.000000e+00> : vector<8x96xf32>
    %3 = tpu.matmul %1, %2, %cst {dimension_numbers = #tpu.dot_dimension_numbers<[1], [0], [0], [1], [0, 0, 1, 1], [], []>} : vector<8x32xf32>, vector<32x96xf32>, vector<8x96xf32> -> vector<8x96xf32>
    %c0_4 = arith.constant 0 : index
    %c0_5 = arith.constant 0 : index
    %4 = vector.load %arg4[%c0_4, %c0_5] : memref<1x96xf32, #tpu.memory_space<vmem>>, vector<1x96xf32>
    %5 = vector.broadcast %4 : vector<1x96xf32> to vector<8x96xf32>
    %6 = arith.addf %3, %5 : vector<8x96xf32>
    %7 = vector.extract_strided_slice %6 {offsets = [0, 0], sizes = [8, 32], strides = [1, 1]} : vector<8x96xf32> to vector<8x32xf32>
    %8 = vector.extract_strided_slice %6 {offsets = [0, 32], sizes = [8, 32], strides = [1, 1]} : vector<8x96xf32> to vector<8x32xf32>
    %9 = vector.extract_strided_slice %6 {offsets = [0, 64], sizes = [8, 32], strides = [1, 1]} : vector<8x96xf32> to vector<8x32xf32>
    %10 = tpu.iota {dimensions = array<i32: 0>} : vector<8x8xi32>
    %11 = tpu.iota {dimensions = array<i32: 1>} : vector<8x8xi32>
    %12 = arith.cmpi sgt, %11, %10 : vector<8x8xi32>
    %c0_6 = arith.constant 0 : index
    %c0_7 = arith.constant 0 : index
    %c0_8 = arith.constant 0 : index
    %13 = vector.load %arg2[%c0_6, %c0_7, %c0_8] : memref<1x1x8xf32, #tpu.memory_space<vmem>>, vector<1x1x8xf32>
    %14 = vector.shape_cast %13 : vector<1x1x8xf32> to vector<1x8xf32>
    %cst_9 = arith.constant 0.000000e+00 : f32
    %15 = vector.broadcast %cst_9 : f32 to vector<1x8xf32>
    %16 = arith.cmpf ogt, %14, %15 : vector<1x8xf32>
    %17 = vector.broadcast %16 : vector<1x8xi1> to vector<8x8xi1>
    %18 = arith.ori %12, %17 : vector<8x8xi1>
    %cst_10 = arith.constant -1.000000e+09 : f32
    %cst_11 = arith.constant 0.000000e+00 : f32
    %19 = vector.broadcast %cst_10 : f32 to vector<8x8xf32>
    %20 = vector.broadcast %cst_11 : f32 to vector<8x8xf32>
    %21 = arith.select %18, %19, %20 : vector<8x8xi1>, vector<8x8xf32>
    %c0_12 = arith.constant 0 : index
    %c0_13 = arith.constant 0 : index
    %22 = vector.load %arg5[%c0_12, %c0_13] : memref<32x32xf32, #tpu.memory_space<vmem>>, vector<32x32xf32>
    %c0_14 = arith.constant 0 : index
    %c0_15 = arith.constant 0 : index
    %23 = vector.load %arg6[%c0_14, %c0_15] : memref<1x32xf32, #tpu.memory_space<vmem>>, vector<1x32xf32>
    %c0_16 = arith.constant 0 : index
    %c0_17 = arith.constant 0 : index
    %24 = vector.load %arg7[%c0_16, %c0_17] : memref<1x32xf32, #tpu.memory_space<vmem>>, vector<1x32xf32>
    %c0_18 = arith.constant 0 : index
    %c0_19 = arith.constant 0 : index
    %25 = vector.load %arg8[%c0_18, %c0_19] : memref<1x32xf32, #tpu.memory_space<vmem>>, vector<1x32xf32>
    %26 = vector.shape_cast %7 : vector<8x32xf32> to vector<8x4x8xf32>
    %27 = vector.shape_cast %8 : vector<8x32xf32> to vector<8x4x8xf32>
    %28 = vector.shape_cast %9 : vector<8x32xf32> to vector<8x4x8xf32>
    "tpu.trace_start"() <{level = 10 : i32, message = "qhd,khd->hqk"}> : () -> ()
    %cst_20 = arith.constant dense<0.000000e+00> : vector<4x8x8xf32>
    %29 = tpu.matmul %26, %27, %cst_20 {dimension_numbers = #tpu.dot_dimension_numbers<[2], [2], [0], [0], [0, 1, 0, 0, 1, 0], [1], [1]>} : vector<8x4x8xf32>, vector<8x4x8xf32>, vector<4x8x8xf32> -> vector<4x8x8xf32>
    "tpu.trace_stop"() : () -> ()
    %cst_21 = arith.constant 0.353553385 : f32
    %30 = vector.broadcast %cst_21 : f32 to vector<4x8x8xf32>
    %31 = arith.mulf %29, %30 : vector<4x8x8xf32>
    %32 = vector.shape_cast %21 : vector<8x8xf32> to vector<1x8x8xf32>
    %33 = vector.broadcast %32 : vector<1x8x8xf32> to vector<4x8x8xf32>
    %34 = arith.addf %31, %33 : vector<4x8x8xf32>
    %cst_22 = arith.constant dense<0xFF800000> : vector<4x8xf32>
    %35 = vector.multi_reduction <maximumf>, %34, %cst_22 [2] : vector<4x8x8xf32> to vector<4x8xf32>
    %36 = vector.shape_cast %35 : vector<4x8xf32> to vector<4x8x1xf32>
    %37 = vector.broadcast %36 : vector<4x8x1xf32> to vector<4x8x8xf32>
    %38 = arith.subf %34, %37 : vector<4x8x8xf32>
    %39 = math.exp %38 : vector<4x8x8xf32>
    %cst_23 = arith.constant dense<0.000000e+00> : vector<4x8xf32>
    %40 = vector.multi_reduction <add>, %39, %cst_23 [2] : vector<4x8x8xf32> to vector<4x8xf32>
    %41 = vector.shape_cast %40 : vector<4x8xf32> to vector<4x8x1xf32>
    %42 = tpu.reciprocal %41 {approx = true} : vector<4x8x1xf32> -> vector<4x8x1xf32>
    %43 = vector.broadcast %42 : vector<4x8x1xf32> to vector<4x8x8xf32>
    %44 = arith.mulf %39, %43 : vector<4x8x8xf32>
    "tpu.trace_start"() <{level = 10 : i32, message = "hqk,khd->qhd"}> : () -> ()
    %cst_24 = arith.constant dense<0.000000e+00> : vector<4x8x8xf32>
    %45 = tpu.matmul %28, %44, %cst_24 {dimension_numbers = #tpu.dot_dimension_numbers<[0], [2], [2], [1], [0, 1, 0, 2, 1, 1], [1], [0]>} : vector<8x4x8xf32>, vector<4x8x8xf32>, vector<4x8x8xf32> -> vector<4x8x8xf32>
    %46 = tpu.transpose %45, [2, 0, 1] : vector<4x8x8xf32> -> vector<8x4x8xf32>
    "tpu.trace_stop"() : () -> ()
    %47 = vector.shape_cast %46 : vector<8x4x8xf32> to vector<8x32xf32>
    %cst_25 = arith.constant dense<0.000000e+00> : vector<8x32xf32>
    %48 = tpu.matmul %47, %22, %cst_25 {dimension_numbers = #tpu.dot_dimension_numbers<[1], [0], [0], [1], [0, 0, 1, 1], [], []>} : vector<8x32xf32>, vector<32x32xf32>, vector<8x32xf32> -> vector<8x32xf32>
    %49 = vector.broadcast %23 : vector<1x32xf32> to vector<8x32xf32>
    %50 = arith.addf %48, %49 : vector<8x32xf32>
    %51 = arith.addf %1, %50 : vector<8x32xf32>
    %cst_26 = arith.constant dense<0.000000e+00> : vector<8xf32>
    %52 = vector.multi_reduction <add>, %51, %cst_26 [1] : vector<8x32xf32> to vector<8xf32>
    %53 = vector.shape_cast %52 : vector<8xf32> to vector<8x1xf32>
    %cst_27 = arith.constant 3.200000e+01 : f32
    %54 = vector.broadcast %cst_27 : f32 to vector<8x1xf32>
    %55 = arith.divf %53, %54 : vector<8x1xf32>
    %56 = vector.broadcast %55 : vector<8x1xf32> to vector<8x32xf32>
    %57 = arith.subf %51, %56 : vector<8x32xf32>
    %58 = arith.mulf %57, %57 : vector<8x32xf32>
    %cst_28 = arith.constant dense<0.000000e+00> : vector<8xf32>
    %59 = vector.multi_reduction <add>, %58, %cst_28 [1] : vector<8x32xf32> to vector<8xf32>
    %60 = vector.shape_cast %59 : vector<8xf32> to vector<8x1xf32>
    %cst_29 = arith.constant 3.200000e+01 : f32
    %61 = vector.broadcast %cst_29 : f32 to vector<8x1xf32>
    %62 = arith.divf %60, %61 : vector<8x1xf32>
    %63 = vector.broadcast %55 : vector<8x1xf32> to vector<8x32xf32>
    %64 = arith.subf %51, %63 : vector<8x32xf32>
    %cst_30 = arith.constant 9.99999974E-6 : f32
    %65 = vector.broadcast %cst_30 : f32 to vector<8x1xf32>
    %66 = arith.addf %62, %65 : vector<8x1xf32>
    %67 = math.rsqrt %66 : vector<8x1xf32>
    %68 = vector.broadcast %67 : vector<8x1xf32> to vector<8x32xf32>
    %69 = arith.mulf %64, %68 : vector<8x32xf32>
    %70 = vector.broadcast %24 : vector<1x32xf32> to vector<8x32xf32>
    %71 = arith.mulf %69, %70 : vector<8x32xf32>
    %72 = vector.broadcast %25 : vector<1x32xf32> to vector<8x32xf32>
    %73 = arith.addf %71, %72 : vector<8x32xf32>
    %c0_31 = arith.constant 0 : index
    %c0_32 = arith.constant 0 : index
    %c0_33 = arith.constant 0 : index
    %74 = vector.load %arg9[%c0_31, %c0_32, %c0_33] : memref<1x8x32xf32, #tpu.memory_space<vmem>>, vector<1x8x32xf32>
    %75 = vector.shape_cast %74 : vector<1x8x32xf32> to vector<8x32xf32>
    %76 = vector.shape_cast %73 : vector<8x32xf32> to vector<1x8x32xf32>
    tpu.vector_store %arg9[%c0_31, %c0_32, %c0_33], %76 {strides = array<i32>} : memref<1x8x32xf32, #tpu.memory_space<vmem>>, vector<1x8x32xf32>,
    return
  }
  func.func @transform_0(%arg0: i32) -> (i32, i32, i32) {
    %c0_i32 = arith.constant 0 : i32
    %c0_i32_0 = arith.constant 0 : i32
    %c0_i32_1 = arith.constant 0 : i32
    return %arg0, %c0_i32, %c0_i32_0 : i32, i32, i32
  }
  func.func @transform_1(%arg0: i32) -> (i32, i32, i32) {
    %c0_i32 = arith.constant 0 : i32
    %c0_i32_0 = arith.constant 0 : i32
    %c0_i32_1 = arith.constant 0 : i32
    return %arg0, %c0_i32, %c0_i32_0 : i32, i32, i32
  }
  func.func @transform_2(%arg0: i32) -> (i32, i32) {
    %c0_i32 = arith.constant 0 : i32
    %c0_i32_0 = arith.constant 0 : i32
    %c0_i32_1 = arith.constant 0 : i32
    return %c0_i32, %c0_i32_0 : i32, i32
  }
  func.func @transform_3(%arg0: i32) -> (i32, i32) {
    %c0_i32 = arith.constant 0 : i32
    %c0_i32_0 = arith.constant 0 : i32
    %c0_i32_1 = arith.constant 0 : i32
    return %c0_i32, %c0_i32_0 : i32, i32
  }
  func.func @transform_4(%arg0: i32) -> (i32, i32) {
    %c0_i32 = arith.constant 0 : i32
    %c0_i32_0 = arith.constant 0 : i32
    %c0_i32_1 = arith.constant 0 : i32
    return %c0_i32, %c0_i32_0 : i32, i32
  }
  func.func @transform_5(%arg0: i32) -> (i32, i32) {
    %c0_i32 = arith.constant 0 : i32
    %c0_i32_0 = arith.constant 0 : i32
    %c0_i32_1 = arith.constant 0 : i32
    return %c0_i32, %c0_i32_0 : i32, i32
  }
  func.func @transform_6(%arg0: i32) -> (i32, i32) {
    %c0_i32 = arith.constant 0 : i32
    %c0_i32_0 = arith.constant 0 : i32
    %c0_i32_1 = arith.constant 0 : i32
    return %c0_i32, %c0_i32_0 : i32, i32
  }
  func.func @transform_7(%arg0: i32) -> (i32, i32) {
    %c0_i32 = arith.constant 0 : i32
    %c0_i32_0 = arith.constant 0 : i32
    %c0_i32_1 = arith.constant 0 : i32
    return %c0_i32, %c0_i32_0 : i32, i32
  }
  func.func @transform_8(%arg0: i32) -> (i32, i32, i32) {
    %c0_i32 = arith.constant 0 : i32
    %c0_i32_0 = arith.constant 0 : i32
    %c0_i32_1 = arith.constant 0 : i32
    return %arg0, %c0_i32, %c0_i32_0 : i32, i32, i32
  }
}

module attributes {stable_mosaic.version = 11 : i64} {
  func.func @_ffn_ln_kernel(%arg0: i32, %arg1: memref<16x32xf32, #tpu.memory_space<vmem>>, %arg2: memref<32x64xf32, #tpu.memory_space<vmem>>, %arg3: memref<1x64xf32, #tpu.memory_space<vmem>>, %arg4: memref<64x32xf32, #tpu.memory_space<vmem>>, %arg5: memref<1x32xf32, #tpu.memory_space<vmem>>, %arg6: memref<1x32xf32, #tpu.memory_space<vmem>>, %arg7: memref<1x32xf32, #tpu.memory_space<vmem>>, %arg8: memref<16x32xf32, #tpu.memory_space<vmem>>) attributes {dimension_semantics = [#tpu.dimension_semantics<parallel>], iteration_bounds = array<i64: 1>, scalar_prefetch = 0 : i64, scratch_operands = 0 : i64, tpu.core_type = #tpu.core_type<tc>, window_params = [{transform_indices = @transform_0, window_bounds = array<i64: 16, 32>}, {pipeline_mode = #tpu.pipeline_mode<synchronous>, transform_indices = @transform_1, window_bounds = array<i64: 32, 64>}, {pipeline_mode = #tpu.pipeline_mode<synchronous>, transform_indices = @transform_2, window_bounds = array<i64: 1, 64>}, {pipeline_mode = #tpu.pipeline_mode<synchronous>, transform_indices = @transform_3, window_bounds = array<i64: 64, 32>}, {pipeline_mode = #tpu.pipeline_mode<synchronous>, transform_indices = @transform_4, window_bounds = array<i64: 1, 32>}, {pipeline_mode = #tpu.pipeline_mode<synchronous>, transform_indices = @transform_5, window_bounds = array<i64: 1, 32>}, {pipeline_mode = #tpu.pipeline_mode<synchronous>, transform_indices = @transform_6, window_bounds = array<i64: 1, 32>}, {transform_indices = @transform_7, window_bounds = array<i64: 16, 32>}]} {
    %c0 = arith.constant 0 : index
    %c0_0 = arith.constant 0 : index
    %0 = vector.load %arg1[%c0, %c0_0] : memref<16x32xf32, #tpu.memory_space<vmem>>, vector<16x32xf32>
    %c0_1 = arith.constant 0 : index
    %c0_2 = arith.constant 0 : index
    %1 = vector.load %arg2[%c0_1, %c0_2] : memref<32x64xf32, #tpu.memory_space<vmem>>, vector<32x64xf32>
    %cst = arith.constant dense<0.000000e+00> : vector<16x64xf32>
    %2 = tpu.matmul %0, %1, %cst {dimension_numbers = #tpu.dot_dimension_numbers<[1], [0], [0], [1], [0, 0, 1, 1], [], []>} : vector<16x32xf32>, vector<32x64xf32>, vector<16x64xf32> -> vector<16x64xf32>
    %c0_3 = arith.constant 0 : index
    %c0_4 = arith.constant 0 : index
    %3 = vector.load %arg3[%c0_3, %c0_4] : memref<1x64xf32, #tpu.memory_space<vmem>>, vector<1x64xf32>
    %4 = vector.broadcast %3 : vector<1x64xf32> to vector<16x64xf32>
    %5 = arith.addf %2, %4 : vector<16x64xf32>
    %cst_5 = arith.constant 0.000000e+00 : f32
    %6 = vector.broadcast %cst_5 : f32 to vector<16x64xf32>
    %7 = arith.maximumf %5, %6 : vector<16x64xf32>
    %c0_6 = arith.constant 0 : index
    %c0_7 = arith.constant 0 : index
    %8 = vector.load %arg4[%c0_6, %c0_7] : memref<64x32xf32, #tpu.memory_space<vmem>>, vector<64x32xf32>
    %cst_8 = arith.constant dense<0.000000e+00> : vector<16x32xf32>
    %9 = tpu.matmul %7, %8, %cst_8 {dimension_numbers = #tpu.dot_dimension_numbers<[1], [0], [0], [1], [0, 0, 1, 1], [], []>} : vector<16x64xf32>, vector<64x32xf32>, vector<16x32xf32> -> vector<16x32xf32>
    %c0_9 = arith.constant 0 : index
    %c0_10 = arith.constant 0 : index
    %10 = vector.load %arg5[%c0_9, %c0_10] : memref<1x32xf32, #tpu.memory_space<vmem>>, vector<1x32xf32>
    %11 = vector.broadcast %10 : vector<1x32xf32> to vector<16x32xf32>
    %12 = arith.addf %9, %11 : vector<16x32xf32>
    %13 = arith.addf %0, %12 : vector<16x32xf32>
    %c0_11 = arith.constant 0 : index
    %c0_12 = arith.constant 0 : index
    %14 = vector.load %arg6[%c0_11, %c0_12] : memref<1x32xf32, #tpu.memory_space<vmem>>, vector<1x32xf32>
    %c0_13 = arith.constant 0 : index
    %c0_14 = arith.constant 0 : index
    %15 = vector.load %arg7[%c0_13, %c0_14] : memref<1x32xf32, #tpu.memory_space<vmem>>, vector<1x32xf32>
    %cst_15 = arith.constant dense<0.000000e+00> : vector<16xf32>
    %16 = vector.multi_reduction <add>, %13, %cst_15 [1] : vector<16x32xf32> to vector<16xf32>
    %17 = vector.shape_cast %16 : vector<16xf32> to vector<16x1xf32>
    %cst_16 = arith.constant 3.200000e+01 : f32
    %18 = vector.broadcast %cst_16 : f32 to vector<16x1xf32>
    %19 = arith.divf %17, %18 : vector<16x1xf32>
    %20 = vector.broadcast %19 : vector<16x1xf32> to vector<16x32xf32>
    %21 = arith.subf %13, %20 : vector<16x32xf32>
    %22 = arith.mulf %21, %21 : vector<16x32xf32>
    %cst_17 = arith.constant dense<0.000000e+00> : vector<16xf32>
    %23 = vector.multi_reduction <add>, %22, %cst_17 [1] : vector<16x32xf32> to vector<16xf32>
    %24 = vector.shape_cast %23 : vector<16xf32> to vector<16x1xf32>
    %cst_18 = arith.constant 3.200000e+01 : f32
    %25 = vector.broadcast %cst_18 : f32 to vector<16x1xf32>
    %26 = arith.divf %24, %25 : vector<16x1xf32>
    %27 = vector.broadcast %19 : vector<16x1xf32> to vector<16x32xf32>
    %28 = arith.subf %13, %27 : vector<16x32xf32>
    %cst_19 = arith.constant 9.99999974E-6 : f32
    %29 = vector.broadcast %cst_19 : f32 to vector<16x1xf32>
    %30 = arith.addf %26, %29 : vector<16x1xf32>
    %31 = math.rsqrt %30 : vector<16x1xf32>
    %32 = vector.broadcast %31 : vector<16x1xf32> to vector<16x32xf32>
    %33 = arith.mulf %28, %32 : vector<16x32xf32>
    %34 = vector.broadcast %14 : vector<1x32xf32> to vector<16x32xf32>
    %35 = arith.mulf %33, %34 : vector<16x32xf32>
    %36 = vector.broadcast %15 : vector<1x32xf32> to vector<16x32xf32>
    %37 = arith.addf %35, %36 : vector<16x32xf32>
    %c0_20 = arith.constant 0 : index
    %c0_21 = arith.constant 0 : index
    %38 = vector.load %arg8[%c0_20, %c0_21] : memref<16x32xf32, #tpu.memory_space<vmem>>, vector<16x32xf32>
    tpu.vector_store %arg8[%c0_20, %c0_21], %37 {strides = array<i32>} : memref<16x32xf32, #tpu.memory_space<vmem>>, vector<16x32xf32>,
    return
  }
  func.func @transform_0(%arg0: i32) -> (i32, i32) {
    %c0_i32 = arith.constant 0 : i32
    %c0_i32_0 = arith.constant 0 : i32
    return %arg0, %c0_i32 : i32, i32
  }
  func.func @transform_1(%arg0: i32) -> (i32, i32) {
    %c0_i32 = arith.constant 0 : i32
    %c0_i32_0 = arith.constant 0 : i32
    %c0_i32_1 = arith.constant 0 : i32
    return %c0_i32, %c0_i32_0 : i32, i32
  }
  func.func @transform_2(%arg0: i32) -> (i32, i32) {
    %c0_i32 = arith.constant 0 : i32
    %c0_i32_0 = arith.constant 0 : i32
    %c0_i32_1 = arith.constant 0 : i32
    return %c0_i32, %c0_i32_0 : i32, i32
  }
  func.func @transform_3(%arg0: i32) -> (i32, i32) {
    %c0_i32 = arith.constant 0 : i32
    %c0_i32_0 = arith.constant 0 : i32
    %c0_i32_1 = arith.constant 0 : i32
    return %c0_i32, %c0_i32_0 : i32, i32
  }
  func.func @transform_4(%arg0: i32) -> (i32, i32) {
    %c0_i32 = arith.constant 0 : i32
    %c0_i32_0 = arith.constant 0 : i32
    %c0_i32_1 = arith.constant 0 : i32
    return %c0_i32, %c0_i32_0 : i32, i32
  }
  func.func @transform_5(%arg0: i32) -> (i32, i32) {
    %c0_i32 = arith.constant 0 : i32
    %c0_i32_0 = arith.constant 0 : i32
    %c0_i32_1 = arith.constant 0 : i32
    return %c0_i32, %c0_i32_0 : i32, i32
  }
  func.func @transform_6(%arg0: i32) -> (i32, i32) {
    %c0_i32 = arith.constant 0 : i32
    %c0_i32_0 = arith.constant 0 : i32
    %c0_i32_1 = arith.constant 0 : i32
    return %c0_i32, %c0_i32_0 : i32, i32
  }
  func.func @transform_7(%arg0: i32) -> (i32, i32) {
    %c0_i32 = arith.constant 0 : i32
    %c0_i32_0 = arith.constant 0 : i32
    return %arg0, %c0_i32 : i32, i32
  }
}

module attributes {stable_mosaic.version = 11 : i64} {
  func.func @_ffn_ln_kernel(%arg0: i32, %arg1: memref<16x32xf32, #tpu.memory_space<vmem>>, %arg2: memref<32x64xf32, #tpu.memory_space<vmem>>, %arg3: memref<1x64xf32, #tpu.memory_space<vmem>>, %arg4: memref<64x32xf32, #tpu.memory_space<vmem>>, %arg5: memref<1x32xf32, #tpu.memory_space<vmem>>, %arg6: memref<1x32xf32, #tpu.memory_space<vmem>>, %arg7: memref<1x32xf32, #tpu.memory_space<vmem>>, %arg8: memref<16x32xf32, #tpu.memory_space<vmem>>) attributes {dimension_semantics = [#tpu.dimension_semantics<parallel>], iteration_bounds = array<i64: 1>, scalar_prefetch = 0 : i64, scratch_operands = 0 : i64, tpu.core_type = #tpu.core_type<tc>, window_params = [{transform_indices = @transform_0, window_bounds = array<i64: 16, 32>}, {pipeline_mode = #tpu.pipeline_mode<synchronous>, transform_indices = @transform_1, window_bounds = array<i64: 32, 64>}, {pipeline_mode = #tpu.pipeline_mode<synchronous>, transform_indices = @transform_2, window_bounds = array<i64: 1, 64>}, {pipeline_mode = #tpu.pipeline_mode<synchronous>, transform_indices = @transform_3, window_bounds = array<i64: 64, 32>}, {pipeline_mode = #tpu.pipeline_mode<synchronous>, transform_indices = @transform_4, window_bounds = array<i64: 1, 32>}, {pipeline_mode = #tpu.pipeline_mode<synchronous>, transform_indices = @transform_5, window_bounds = array<i64: 1, 32>}, {pipeline_mode = #tpu.pipeline_mode<synchronous>, transform_indices = @transform_6, window_bounds = array<i64: 1, 32>}, {transform_indices = @transform_7, window_bounds = array<i64: 16, 32>}]} {
    %c0 = arith.constant 0 : index
    %c0_0 = arith.constant 0 : index
    %0 = vector.load %arg1[%c0, %c0_0] : memref<16x32xf32, #tpu.memory_space<vmem>>, vector<16x32xf32>
    %c0_1 = arith.constant 0 : index
    %c0_2 = arith.constant 0 : index
    %1 = vector.load %arg2[%c0_1, %c0_2] : memref<32x64xf32, #tpu.memory_space<vmem>>, vector<32x64xf32>
    %cst = arith.constant dense<0.000000e+00> : vector<16x64xf32>
    %2 = tpu.matmul %0, %1, %cst {dimension_numbers = #tpu.dot_dimension_numbers<[1], [0], [0], [1], [0, 0, 1, 1], [], []>} : vector<16x32xf32>, vector<32x64xf32>, vector<16x64xf32> -> vector<16x64xf32>
    %c0_3 = arith.constant 0 : index
    %c0_4 = arith.constant 0 : index
    %3 = vector.load %arg3[%c0_3, %c0_4] : memref<1x64xf32, #tpu.memory_space<vmem>>, vector<1x64xf32>
    %4 = vector.broadcast %3 : vector<1x64xf32> to vector<16x64xf32>
    %5 = arith.addf %2, %4 : vector<16x64xf32>
    %cst_5 = arith.constant 0.000000e+00 : f32
    %6 = vector.broadcast %cst_5 : f32 to vector<16x64xf32>
    %7 = arith.maximumf %5, %6 : vector<16x64xf32>
    %c0_6 = arith.constant 0 : index
    %c0_7 = arith.constant 0 : index
    %8 = vector.load %arg4[%c0_6, %c0_7] : memref<64x32xf32, #tpu.memory_space<vmem>>, vector<64x32xf32>
    %cst_8 = arith.constant dense<0.000000e+00> : vector<16x32xf32>
    %9 = tpu.matmul %7, %8, %cst_8 {dimension_numbers = #tpu.dot_dimension_numbers<[1], [0], [0], [1], [0, 0, 1, 1], [], []>} : vector<16x64xf32>, vector<64x32xf32>, vector<16x32xf32> -> vector<16x32xf32>
    %c0_9 = arith.constant 0 : index
    %c0_10 = arith.constant 0 : index
    %10 = vector.load %arg5[%c0_9, %c0_10] : memref<1x32xf32, #tpu.memory_space<vmem>>, vector<1x32xf32>
    %11 = vector.broadcast %10 : vector<1x32xf32> to vector<16x32xf32>
    %12 = arith.addf %9, %11 : vector<16x32xf32>
    %13 = arith.addf %0, %12 : vector<16x32xf32>
    %c0_11 = arith.constant 0 : index
    %c0_12 = arith.constant 0 : index
    %14 = vector.load %arg6[%c0_11, %c0_12] : memref<1x32xf32, #tpu.memory_space<vmem>>, vector<1x32xf32>
    %c0_13 = arith.constant 0 : index
    %c0_14 = arith.constant 0 : index
    %15 = vector.load %arg7[%c0_13, %c0_14] : memref<1x32xf32, #tpu.memory_space<vmem>>, vector<1x32xf32>
    %cst_15 = arith.constant dense<0.000000e+00> : vector<16xf32>
    %16 = vector.multi_reduction <add>, %13, %cst_15 [1] : vector<16x32xf32> to vector<16xf32>
    %17 = vector.shape_cast %16 : vector<16xf32> to vector<16x1xf32>
    %cst_16 = arith.constant 3.200000e+01 : f32
    %18 = vector.broadcast %cst_16 : f32 to vector<16x1xf32>
    %19 = arith.divf %17, %18 : vector<16x1xf32>
    %20 = vector.broadcast %19 : vector<16x1xf32> to vector<16x32xf32>
    %21 = arith.subf %13, %20 : vector<16x32xf32>
    %22 = arith.mulf %21, %21 : vector<16x32xf32>
    %cst_17 = arith.constant dense<0.000000e+00> : vector<16xf32>
    %23 = vector.multi_reduction <add>, %22, %cst_17 [1] : vector<16x32xf32> to vector<16xf32>
    %24 = vector.shape_cast %23 : vector<16xf32> to vector<16x1xf32>
    %cst_18 = arith.constant 3.200000e+01 : f32
    %25 = vector.broadcast %cst_18 : f32 to vector<16x1xf32>
    %26 = arith.divf %24, %25 : vector<16x1xf32>
    %27 = vector.broadcast %19 : vector<16x1xf32> to vector<16x32xf32>
    %28 = arith.subf %13, %27 : vector<16x32xf32>
    %cst_19 = arith.constant 9.99999974E-6 : f32
    %29 = vector.broadcast %cst_19 : f32 to vector<16x1xf32>
    %30 = arith.addf %26, %29 : vector<16x1xf32>
    %31 = math.rsqrt %30 : vector<16x1xf32>
    %32 = vector.broadcast %31 : vector<16x1xf32> to vector<16x32xf32>
    %33 = arith.mulf %28, %32 : vector<16x32xf32>
    %34 = vector.broadcast %14 : vector<1x32xf32> to vector<16x32xf32>
    %35 = arith.mulf %33, %34 : vector<16x32xf32>
    %36 = vector.broadcast %15 : vector<1x32xf32> to vector<16x32xf32>
    %37 = arith.addf %35, %36 : vector<16x32xf32>
    %c0_20 = arith.constant 0 : index
    %c0_21 = arith.constant 0 : index
    %38 = vector.load %arg8[%c0_20, %c0_21] : memref<16x32xf32, #tpu.memory_space<vmem>>, vector<16x32xf32>
    tpu.vector_store %arg8[%c0_20, %c0_21], %37 {strides = array<i32>} : memref<16x32xf32, #tpu.memory_space<vmem>>, vector<16x32xf32>,
    return
  }
  func.func @transform_0(%arg0: i32) -> (i32, i32) {
    %c0_i32 = arith.constant 0 : i32
    %c0_i32_0 = arith.constant 0 : i32
    return %arg0, %c0_i32 : i32, i32
  }
  func.func @transform_1(%arg0: i32) -> (i32, i32) {
    %c0_i32 = arith.constant 0 : i32
    %c0_i32_0 = arith.constant 0 : i32
    %c0_i32_1 = arith.constant 0 : i32
    return %c0_i32, %c0_i32_0 : i32, i32
  }
  func.func @transform_2(%arg0: i32) -> (i32, i32) {
    %c0_i32 = arith.constant 0 : i32
    %c0_i32_0 = arith.constant 0 : i32
    %c0_i32_1 = arith.constant 0 : i32
    return %c0_i32, %c0_i32_0 : i32, i32
  }
  func.func @transform_3(%arg0: i32) -> (i32, i32) {
    %c0_i32 = arith.constant 0 : i32
    %c0_i32_0 = arith.constant 0 : i32
    %c0_i32_1 = arith.constant 0 : i32
    return %c0_i32, %c0_i32_0 : i32, i32
  }
  func.func @transform_4(%arg0: i32) -> (i32, i32) {
    %c0_i32 = arith.constant 0 : i32
    %c0_i32_0 = arith.constant 0 : i32
    %c0_i32_1 = arith.constant 0 : i32
    return %c0_i32, %c0_i32_0 : i32, i32
  }
  func.func @transform_5(%arg0: i32) -> (i32, i32) {
    %c0_i32 = arith.constant 0 : i32
    %c0_i32_0 = arith.constant 0 : i32
    %c0_i32_1 = arith.constant 0 : i32
    return %c0_i32, %c0_i32_0 : i32, i32
  }
  func.func @transform_6(%arg0: i32) -> (i32, i32) {
    %c0_i32 = arith.constant 0 : i32
    %c0_i32_0 = arith.constant 0 : i32
    %c0_i32_1 = arith.constant 0 : i32
    return %c0_i32, %c0_i32_0 : i32, i32
  }
  func.func @transform_7(%arg0: i32) -> (i32, i32) {
    %c0_i32 = arith.constant 0 : i32
    %c0_i32_0 = arith.constant 0 : i32
    return %arg0, %c0_i32 : i32, i32
  }
}

module attributes {stable_mosaic.version = 11 : i64} {
  func.func @_cross_attn_ln_kernel(%arg0: i32, %arg1: memref<1x8x32xf32, #tpu.memory_space<vmem>>, %arg2: memref<1x8x32xf32, #tpu.memory_space<vmem>>, %arg3: memref<32x96xf32, #tpu.memory_space<vmem>>, %arg4: memref<1x96xf32, #tpu.memory_space<vmem>>, %arg5: memref<32x32xf32, #tpu.memory_space<vmem>>, %arg6: memref<1x32xf32, #tpu.memory_space<vmem>>, %arg7: memref<1x32xf32, #tpu.memory_space<vmem>>, %arg8: memref<1x32xf32, #tpu.memory_space<vmem>>, %arg9: memref<1x8x32xf32, #tpu.memory_space<vmem>>) attributes {dimension_semantics = [#tpu.dimension_semantics<parallel>], iteration_bounds = array<i64: 2>, scalar_prefetch = 0 : i64, scratch_operands = 0 : i64, tpu.core_type = #tpu.core_type<tc>, window_params = [{transform_indices = @transform_0, window_bounds = array<i64: 1, 8, 32>}, {transform_indices = @transform_1, window_bounds = array<i64: 1, 8, 32>}, {pipeline_mode = #tpu.pipeline_mode<synchronous>, transform_indices = @transform_2, window_bounds = array<i64: 32, 96>}, {pipeline_mode = #tpu.pipeline_mode<synchronous>, transform_indices = @transform_3, window_bounds = array<i64: 1, 96>}, {pipeline_mode = #tpu.pipeline_mode<synchronous>, transform_indices = @transform_4, window_bounds = array<i64: 32, 32>}, {pipeline_mode = #tpu.pipeline_mode<synchronous>, transform_indices = @transform_5, window_bounds = array<i64: 1, 32>}, {pipeline_mode = #tpu.pipeline_mode<synchronous>, transform_indices = @transform_6, window_bounds = array<i64: 1, 32>}, {pipeline_mode = #tpu.pipeline_mode<synchronous>, transform_indices = @transform_7, window_bounds = array<i64: 1, 32>}, {transform_indices = @transform_8, window_bounds = array<i64: 1, 8, 32>}]} {
    %c0 = arith.constant 0 : index
    %c0_0 = arith.constant 0 : index
    %c0_1 = arith.constant 0 : index
    %0 = vector.load %arg1[%c0, %c0_0, %c0_1] : memref<1x8x32xf32, #tpu.memory_space<vmem>>, vector<1x8x32xf32>
    %1 = vector.shape_cast %0 : vector<1x8x32xf32> to vector<8x32xf32>
    %c0_2 = arith.constant 0 : index
    %c0_3 = arith.constant 0 : index
    %c0_4 = arith.constant 0 : index
    %2 = vector.load %arg2[%c0_2, %c0_3, %c0_4] : memref<1x8x32xf32, #tpu.memory_space<vmem>>, vector<1x8x32xf32>
    %3 = vector.shape_cast %2 : vector<1x8x32xf32> to vector<8x32xf32>
    %c0_5 = arith.constant 0 : index
    %c0_6 = arith.constant 0 : index
    %4 = vector.load %arg3[%c0_5, %c0_6] : memref<32x96xf32, #tpu.memory_space<vmem>>, vector<32x32xf32>
    %cst = arith.constant dense<0.000000e+00> : vector<8x32xf32>
    %5 = tpu.matmul %1, %4, %cst {dimension_numbers = #tpu.dot_dimension_numbers<[1], [0], [0], [1], [0, 0, 1, 1], [], []>} : vector<8x32xf32>, vector<32x32xf32>, vector<8x32xf32> -> vector<8x32xf32>
    %c0_7 = arith.constant 0 : index
    %c0_8 = arith.constant 0 : index
    %6 = vector.load %arg4[%c0_7, %c0_8] : memref<1x96xf32, #tpu.memory_space<vmem>>, vector<1x32xf32>
    %7 = vector.broadcast %6 : vector<1x32xf32> to vector<8x32xf32>
    %8 = arith.addf %5, %7 : vector<8x32xf32>
    %c0_9 = arith.constant 0 : index
    %c32 = arith.constant 32 : index
    %9 = vector.load %arg3[%c0_9, %c32] : memref<32x96xf32, #tpu.memory_space<vmem>>, vector<32x64xf32>
    %cst_10 = arith.constant dense<0.000000e+00> : vector<8x64xf32>
    %10 = tpu.matmul %3, %9, %cst_10 {dimension_numbers = #tpu.dot_dimension_numbers<[1], [0], [0], [1], [0, 0, 1, 1], [], []>} : vector<8x32xf32>, vector<32x64xf32>, vector<8x64xf32> -> vector<8x64xf32>
    %c0_11 = arith.constant 0 : index
    %c32_12 = arith.constant 32 : index
    %11 = vector.load %arg4[%c0_11, %c32_12] : memref<1x96xf32, #tpu.memory_space<vmem>>, vector<1x64xf32>
    %12 = vector.broadcast %11 : vector<1x64xf32> to vector<8x64xf32>
    %13 = arith.addf %10, %12 : vector<8x64xf32>
    %14 = vector.extract_strided_slice %13 {offsets = [0, 0], sizes = [8, 32], strides = [1, 1]} : vector<8x64xf32> to vector<8x32xf32>
    %15 = vector.extract_strided_slice %13 {offsets = [0, 32], sizes = [8, 32], strides = [1, 1]} : vector<8x64xf32> to vector<8x32xf32>
    %c0_13 = arith.constant 0 : index
    %c0_14 = arith.constant 0 : index
    %16 = vector.load %arg5[%c0_13, %c0_14] : memref<32x32xf32, #tpu.memory_space<vmem>>, vector<32x32xf32>
    %c0_15 = arith.constant 0 : index
    %c0_16 = arith.constant 0 : index
    %17 = vector.load %arg6[%c0_15, %c0_16] : memref<1x32xf32, #tpu.memory_space<vmem>>, vector<1x32xf32>
    %c0_17 = arith.constant 0 : index
    %c0_18 = arith.constant 0 : index
    %18 = vector.load %arg7[%c0_17, %c0_18] : memref<1x32xf32, #tpu.memory_space<vmem>>, vector<1x32xf32>
    %c0_19 = arith.constant 0 : index
    %c0_20 = arith.constant 0 : index
    %19 = vector.load %arg8[%c0_19, %c0_20] : memref<1x32xf32, #tpu.memory_space<vmem>>, vector<1x32xf32>
    %20 = vector.shape_cast %8 : vector<8x32xf32> to vector<8x4x8xf32>
    %21 = vector.shape_cast %14 : vector<8x32xf32> to vector<8x4x8xf32>
    %22 = vector.shape_cast %15 : vector<8x32xf32> to vector<8x4x8xf32>
    "tpu.trace_start"() <{level = 10 : i32, message = "qhd,khd->hqk"}> : () -> ()
    %cst_21 = arith.constant dense<0.000000e+00> : vector<4x8x8xf32>
    %23 = tpu.matmul %20, %21, %cst_21 {dimension_numbers = #tpu.dot_dimension_numbers<[2], [2], [0], [0], [0, 1, 0, 0, 1, 0], [1], [1]>} : vector<8x4x8xf32>, vector<8x4x8xf32>, vector<4x8x8xf32> -> vector<4x8x8xf32>
    "tpu.trace_stop"() : () -> ()
    %cst_22 = arith.constant 0.353553385 : f32
    %24 = vector.broadcast %cst_22 : f32 to vector<4x8x8xf32>
    %25 = arith.mulf %23, %24 : vector<4x8x8xf32>
    %cst_23 = arith.constant dense<0xFF800000> : vector<4x8xf32>
    %26 = vector.multi_reduction <maximumf>, %25, %cst_23 [2] : vector<4x8x8xf32> to vector<4x8xf32>
    %27 = vector.shape_cast %26 : vector<4x8xf32> to vector<4x8x1xf32>
    %28 = vector.broadcast %27 : vector<4x8x1xf32> to vector<4x8x8xf32>
    %29 = arith.subf %25, %28 : vector<4x8x8xf32>
    %30 = math.exp %29 : vector<4x8x8xf32>
    %cst_24 = arith.constant dense<0.000000e+00> : vector<4x8xf32>
    %31 = vector.multi_reduction <add>, %30, %cst_24 [2] : vector<4x8x8xf32> to vector<4x8xf32>
    %32 = vector.shape_cast %31 : vector<4x8xf32> to vector<4x8x1xf32>
    %33 = tpu.reciprocal %32 {approx = true} : vector<4x8x1xf32> -> vector<4x8x1xf32>
    %34 = vector.broadcast %33 : vector<4x8x1xf32> to vector<4x8x8xf32>
    %35 = arith.mulf %30, %34 : vector<4x8x8xf32>
    "tpu.trace_start"() <{level = 10 : i32, message = "hqk,khd->qhd"}> : () -> ()
    %cst_25 = arith.constant dense<0.000000e+00> : vector<4x8x8xf32>
    %36 = tpu.matmul %22, %35, %cst_25 {dimension_numbers = #tpu.dot_dimension_numbers<[0], [2], [2], [1], [0, 1, 0, 2, 1, 1], [1], [0]>} : vector<8x4x8xf32>, vector<4x8x8xf32>, vector<4x8x8xf32> -> vector<4x8x8xf32>
    %37 = tpu.transpose %36, [2, 0, 1] : vector<4x8x8xf32> -> vector<8x4x8xf32>
    "tpu.trace_stop"() : () -> ()
    %38 = vector.shape_cast %37 : vector<8x4x8xf32> to vector<8x32xf32>
    %cst_26 = arith.constant dense<0.000000e+00> : vector<8x32xf32>
    %39 = tpu.matmul %38, %16, %cst_26 {dimension_numbers = #tpu.dot_dimension_numbers<[1], [0], [0], [1], [0, 0, 1, 1], [], []>} : vector<8x32xf32>, vector<32x32xf32>, vector<8x32xf32> -> vector<8x32xf32>
    %40 = vector.broadcast %17 : vector<1x32xf32> to vector<8x32xf32>
    %41 = arith.addf %39, %40 : vector<8x32xf32>
    %42 = arith.addf %1, %41 : vector<8x32xf32>
    %cst_27 = arith.constant dense<0.000000e+00> : vector<8xf32>
    %43 = vector.multi_reduction <add>, %42, %cst_27 [1] : vector<8x32xf32> to vector<8xf32>
    %44 = vector.shape_cast %43 : vector<8xf32> to vector<8x1xf32>
    %cst_28 = arith.constant 3.200000e+01 : f32
    %45 = vector.broadcast %cst_28 : f32 to vector<8x1xf32>
    %46 = arith.divf %44, %45 : vector<8x1xf32>
    %47 = vector.broadcast %46 : vector<8x1xf32> to vector<8x32xf32>
    %48 = arith.subf %42, %47 : vector<8x32xf32>
    %49 = arith.mulf %48, %48 : vector<8x32xf32>
    %cst_29 = arith.constant dense<0.000000e+00> : vector<8xf32>
    %50 = vector.multi_reduction <add>, %49, %cst_29 [1] : vector<8x32xf32> to vector<8xf32>
    %51 = vector.shape_cast %50 : vector<8xf32> to vector<8x1xf32>
    %cst_30 = arith.constant 3.200000e+01 : f32
    %52 = vector.broadcast %cst_30 : f32 to vector<8x1xf32>
    %53 = arith.divf %51, %52 : vector<8x1xf32>
    %54 = vector.broadcast %46 : vector<8x1xf32> to vector<8x32xf32>
    %55 = arith.subf %42, %54 : vector<8x32xf32>
    %cst_31 = arith.constant 9.99999974E-6 : f32
    %56 = vector.broadcast %cst_31 : f32 to vector<8x1xf32>
    %57 = arith.addf %53, %56 : vector<8x1xf32>
    %58 = math.rsqrt %57 : vector<8x1xf32>
    %59 = vector.broadcast %58 : vector<8x1xf32> to vector<8x32xf32>
    %60 = arith.mulf %55, %59 : vector<8x32xf32>
    %61 = vector.broadcast %18 : vector<1x32xf32> to vector<8x32xf32>
    %62 = arith.mulf %60, %61 : vector<8x32xf32>
    %63 = vector.broadcast %19 : vector<1x32xf32> to vector<8x32xf32>
    %64 = arith.addf %62, %63 : vector<8x32xf32>
    %c0_32 = arith.constant 0 : index
    %c0_33 = arith.constant 0 : index
    %c0_34 = arith.constant 0 : index
    %65 = vector.load %arg9[%c0_32, %c0_33, %c0_34] : memref<1x8x32xf32, #tpu.memory_space<vmem>>, vector<1x8x32xf32>
    %66 = vector.shape_cast %65 : vector<1x8x32xf32> to vector<8x32xf32>
    %67 = vector.shape_cast %64 : vector<8x32xf32> to vector<1x8x32xf32>
    tpu.vector_store %arg9[%c0_32, %c0_33, %c0_34], %67 {strides = array<i32>} : memref<1x8x32xf32, #tpu.memory_space<vmem>>, vector<1x8x32xf32>,
    return
  }
  func.func @transform_0(%arg0: i32) -> (i32, i32, i32) {
    %c0_i32 = arith.constant 0 : i32
    %c0_i32_0 = arith.constant 0 : i32
    %c0_i32_1 = arith.constant 0 : i32
    return %arg0, %c0_i32, %c0_i32_0 : i32, i32, i32
  }
  func.func @transform_1(%arg0: i32) -> (i32, i32, i32) {
    %c0_i32 = arith.constant 0 : i32
    %c0_i32_0 = arith.constant 0 : i32
    %c0_i32_1 = arith.constant 0 : i32
    return %arg0, %c0_i32, %c0_i32_0 : i32, i32, i32
  }
  func.func @transform_2(%arg0: i32) -> (i32, i32) {
    %c0_i32 = arith.constant 0 : i32
    %c0_i32_0 = arith.constant 0 : i32
    %c0_i32_1 = arith.constant 0 : i32
    return %c0_i32, %c0_i32_0 : i32, i32
  }
  func.func @transform_3(%arg0: i32) -> (i32, i32) {
    %c0_i32 = arith.constant 0 : i32
    %c0_i32_0 = arith.constant 0 : i32
    %c0_i32_1 = arith.constant 0 : i32
    return %c0_i32, %c0_i32_0 : i32, i32
  }
  func.func @transform_4(%arg0: i32) -> (i32, i32) {
    %c0_i32 = arith.constant 0 : i32
    %c0_i32_0 = arith.constant 0 : i32
    %c0_i32_1 = arith.constant 0 : i32
    return %c0_i32, %c0_i32_0 : i32, i32
  }
  func.func @transform_5(%arg0: i32) -> (i32, i32) {
    %c0_i32 = arith.constant 0 : i32
    %c0_i32_0 = arith.constant 0 : i32
    %c0_i32_1 = arith.constant 0 : i32
    return %c0_i32, %c0_i32_0 : i32, i32
  }
  func.func @transform_6(%arg0: i32) -> (i32, i32) {
    %c0_i32 = arith.constant 0 : i32
    %c0_i32_0 = arith.constant 0 : i32
    %c0_i32_1 = arith.constant 0 : i32
    return %c0_i32, %c0_i32_0 : i32, i32
  }
  func.func @transform_7(%arg0: i32) -> (i32, i32) {
    %c0_i32 = arith.constant 0 : i32
    %c0_i32_0 = arith.constant 0 : i32
    %c0_i32_1 = arith.constant 0 : i32
    return %c0_i32, %c0_i32_0 : i32, i32
  }
  func.func @transform_8(%arg0: i32) -> (i32, i32, i32) {
    %c0_i32 = arith.constant 0 : i32
    %c0_i32_0 = arith.constant 0 : i32
    %c0_i32_1 = arith.constant 0 : i32
    return %arg0, %c0_i32, %c0_i32_0 : i32, i32, i32
  }
}

</mosaic_0001>

<llo_original>
// kernel: decoder_forward.11
$region0: #{decoder_forward.11}
  #allocation0 [shape = 'u32[]', space=smem, size = 0x4, offset = 0x4, fixed_abs, tag = 'smem constant byte address 0x4 - core index']
  #allocation1 [shape = 'u32[144,128]{1,0:T(1,128)}', space=vmem, size = 0x12000, scoped, tag = 'internal scratch']
  %s0 = inlined_call_operand.vmem [shape: f32[16,32], index: 0, kind: input, shape index: {}]
  %s1 = inlined_call_operand.vmem [shape: f32[32,64], index: 1, kind: input, shape index: {}]
  %s2 = inlined_call_operand.vmem [shape: f32[1,64], index: 2, kind: input, shape index: {}]
  %s3 = inlined_call_operand.vmem [shape: f32[64,32], index: 3, kind: input, shape index: {}]
  %s4 = inlined_call_operand.vmem [shape: f32[1,32], index: 4, kind: input, shape index: {}]
  %s5 = inlined_call_operand.vmem [shape: f32[1,32], index: 5, kind: input, shape index: {}]
  %s6 = inlined_call_operand.vmem [shape: f32[1,32], index: 6, kind: input, shape index: {}]
  %s7 = inlined_call_operand.hbm [shape: f32[16,32], index: 7, kind: output, shape index: {}]
  %s8 = sld [smem:[#allocation0]]
  $region38: #{decoder_forward.11} parent=0
    _
  %s10 = ssub.s32 1, %s8
  %s11 = scalar_select 0, %s10, %s8
  $region1: #{decoder_forward.11} parent=0
    #allocation2 [shape = 'u8[8192]{0}', space=vmem, size = 0x2000, scoped, tag = 'output window, operand 0, single buffered']
    #allocation3 [shape = 's32[1]{0}', space=sflag, size = 0x4, scoped, tag = 'scoped memory for decoder_forward.11']
    %12 = vsyncpa [#allocation3], 0
    // Predicated region
    $region2: #{decoder_forward.11} parent=1 // pred_check
      _
    $region3: #{decoder_forward.11} parent=1 // pred_check_branch
      %14 = sbr.rel (0) target = $region5
    $region4: #{decoder_forward.11} parent=1 // pred_region
      _
    $region5: #{decoder_forward.11} parent=1 // pred_fallthru
      _
    // Predicated region
    $region6: #{decoder_forward.11} parent=1 // pred_check
      _
    $region7: #{decoder_forward.11} parent=1 // pred_check_branch
      %16 = sbr.rel (0) target = $region9
    $region8: #{decoder_forward.11} parent=1 // pred_region
      _
    $region9: #{decoder_forward.11} parent=1 // pred_fallthru
      _
    // Predicated region
    $region10: #{decoder_forward.11} parent=1 // pred_check
      _
    $region11: #{decoder_forward.11} parent=1 // pred_check_branch
      %18 = sbr.rel (0) target = $region13
    $region12: #{decoder_forward.11} parent=1 // pred_region
      _
    $region13: #{decoder_forward.11} parent=1 // pred_fallthru
      _
    // Predicated region
    $region14: #{decoder_forward.11} parent=1 // pred_check
      _
    $region15: #{decoder_forward.11} parent=1 // pred_check_branch
      %20 = sbr.rel (0) target = $region17
    $region16: #{decoder_forward.11} parent=1 // pred_region
      _
    $region17: #{decoder_forward.11} parent=1 // pred_fallthru
      _
    // Predicated region
    $region18: #{decoder_forward.11} parent=1 // pred_check
      _
    $region19: #{decoder_forward.11} parent=1 // pred_check_branch
      %22 = sbr.rel (0) target = $region21
    $region20: #{decoder_forward.11} parent=1 // pred_region
      _
    $region21: #{decoder_forward.11} parent=1 // pred_fallthru
      _
    // Predicated region
    $region22: #{decoder_forward.11} parent=1 // pred_check
      _
    $region23: #{decoder_forward.11} parent=1 // pred_check_branch
      %24 = sbr.rel (0) target = $region25
    $region24: #{decoder_forward.11} parent=1 // pred_region
      _
    $region25: #{decoder_forward.11} parent=1 // pred_fallthru
      _
    // Predicated region
    $region26: #{decoder_forward.11} parent=1 // pred_check
      _
    $region27: #{decoder_forward.11} parent=1 // pred_check_branch
      %26 = sbr.rel (0) target = $region29
    $region28: #{decoder_forward.11} parent=1 // pred_region
      _
    $region29: #{decoder_forward.11} parent=1 // pred_fallthru
      _
    %v27 = vld [vmem:[%s0] sm:$0xff]
    %v28 = vld [vmem:[%s0 + $0x8] sm:$0xff]
    %v29 = vld [vmem:[%s1] sm:$0xff]
    %v30 = vld [vmem:[%s1 + $0x8] sm:$0xff]
    %v31 = vld [vmem:[%s1 + $0x10] sm:$0xff]
    %v32 = vld [vmem:[%s1 + $0x18] sm:$0xff]
    %v33 = vld [vmem:[%s2] sm:$0x1]
    %v35 = vlaneseq
    %v36 = vshrl.u32 %v35, 7
    %v37 = vsub.s32 0, %v36
    %v38 = vrot.slane %v33, %v37
    %vm40 = vcmask 261120
    %v42 = vsel %vm40, %v27, 0
    %v45 = vsel %vm40, %v28, 0
    %47 = vmatprep.subr.mxu0 0.0
    %48 = vmatpush1.msra.mxu0 %v29
    %49 = vmatprep.subr.mxu0 0.0
    %50 = vmatpush1.msra.mxu0 %v30
    %51 = vmatprep.subr.mxu0 0.0
    %52 = vmatpush1.msra.mxu0 %v31
    %53 = vmatprep.subr.mxu0 0.0
    %54 = vmatpush1.msra.mxu0 %v32
    %55 = vmatprep.subr.mxu0 0.0
    %56 = vmatpush1.msra.mxu0 0.0
    %57 = vmatprep.subr.mxu0 0.0
    %58 = vmatpush1.msra.mxu0 0.0
    %59 = vmatprep.subr.mxu0 0.0
    %60 = vmatpush1.msra.mxu0 0.0
    %61 = vmatprep.subr.mxu0 0.0
    %62 = vmatpush1.msra.mxu0 0.0
    %63 = vmatprep.subr.mxu0 0.0
    %64 = vmatpush1.msra.mxu0 0.0
    %65 = vmatprep.subr.mxu0 0.0
    %66 = vmatpush1.msra.mxu0 0.0
    %67 = vmatprep.subr.mxu0 0.0
    %68 = vmatpush1.msra.mxu0 0.0
    %69 = vmatprep.subr.mxu0 0.0
    %70 = vmatpush1.msra.mxu0 0.0
    %71 = vmatprep.subr.mxu0 0.0
    %72 = vmatpush1.msra.mxu0 0.0
    %73 = vmatprep.subr.mxu0 0.0
    %74 = vmatpush1.msra.mxu0 0.0
    %75 = vmatprep.subr.mxu0 0.0
    %76 = vmatpush1.msra.mxu0 0.0
    %77 = vmatprep.subr.mxu0 0.0
    %78 = vmatpush1.msra.mxu0 0.0
    %79 = vmatprep.subr.mxu0 0.0
    %80 = vmatpush1.msra.mxu0 0.0
    %81 = vmatprep.subr.mxu0 0.0
    %82 = vmatpush1.msra.mxu0 0.0
    %83 = vmatprep.subr.mxu0 0.0
    %84 = vmatpush1.msra.mxu0 0.0
    %85 = vmatprep.subr.mxu0 0.0
    %86 = vmatpush1.msra.mxu0 0.0
    %87 = vmatprep.subr.mxu0 0.0
    %88 = vmatpush1.msra.mxu0 0.0
    %89 = vmatprep.subr.mxu0 0.0
    %90 = vmatpush1.msra.mxu0 0.0
    %91 = vmatprep.subr.mxu0 0.0
    %92 = vmatpush1.msra.mxu0 0.0
    %93 = vmatprep.subr.mxu0 0.0
    %94 = vmatpush1.msra.mxu0 0.0
    %95 = vmatprep.subr.mxu0 0.0
    %96 = vmatpush1.msra.mxu0 0.0
    %97 = vmatprep.subr.mxu0 0.0
    %98 = vmatpush1.msra.mxu0 0.0
    %99 = vmatprep.subr.mxu0 0.0
    %100 = vmatpush1.msra.mxu0 0.0
    %101 = vmatprep.subr.mxu0 0.0
    %102 = vmatpush1.msra.mxu0 0.0
    %103 = vmatprep.subr.mxu0 0.0
    %104 = vmatpush1.msra.mxu0 0.0
    %105 = vmatprep.subr.mxu0 0.0
    %106 = vmatpush1.msra.mxu0 0.0
    %107 = vmatprep.subr.mxu0 0.0
    %108 = vmatpush1.msra.mxu0 0.0
    %109 = vmatprep.subr.mxu0 0.0
    %110 = vmatpush1.msra.mxu0 0.0
    %111 = vmatprep.mubr.f32.mxu0 0.0
    %112 = vmatmul.mubr.f32.gmra.mrb[0].mxu0 %v42
    %v113 = vpop.f32.mrb[0].mxu0
    %v114 = vadd.f32 %v38, %v113
    %v115 = vpop.f32.mrb[0].mxu0
    %116 = vmatprep.mubr.f32.mxu0 0.0
    %117 = vmatmul.mubr.f32.gmra.mrb[0].mxu0 %v45
    %v118 = vpop.f32.mrb[0].mxu0
    %v119 = vadd.f32 %v38, %v118
    %v120 = vpop.f32.mrb[0].mxu0
    %121 = vdwg.mxu0
    %v122 = vmax.f32 %v114, 0.0
    %v123 = vmax.f32 %v119, 0.0
    %v124 = vld [vmem:[%s3] sm:$0xff]
    %v125 = vld [vmem:[%s3 + $0x8] sm:$0xff]
    %v126 = vld [vmem:[%s3 + $0x10] sm:$0xff]
    %v127 = vld [vmem:[%s3 + $0x18] sm:$0xff]
    %v128 = vld [vmem:[%s3 + $0x20] sm:$0xff]
    %v129 = vld [vmem:[%s3 + $0x28] sm:$0xff]
    %v130 = vld [vmem:[%s3 + $0x30] sm:$0xff]
    %v131 = vld [vmem:[%s3 + $0x38] sm:$0xff]
    %v132 = vld [vmem:[%s4] sm:$0x1]
    %v134 = vlaneseq
    %v135 = vshrl.u32 %v134, 7
    %v136 = vsub.s32 0, %v135
    %v137 = vrot.slane %v132, %v136
    %vm139 = vcmask 523264
    %v141 = vsel %vm139, %v122, 0
    %v144 = vsel %vm139, %v123, 0
    %146 = vmatprep.subr.mxu0 0.0
    %147 = vmatpush1.msra.mxu0 %v124
    %148 = vmatprep.subr.mxu0 0.0
    %149 = vmatpush1.msra.mxu0 %v125
    %150 = vmatprep.subr.mxu0 0.0
    %151 = vmatpush1.msra.mxu0 %v126
    %152 = vmatprep.subr.mxu0 0.0
    %153 = vmatpush1.msra.mxu0 %v127
    %154 = vmatprep.subr.mxu0 0.0
    %155 = vmatpush1.msra.mxu0 %v128
    %156 = vmatprep.subr.mxu0 0.0
    %157 = vmatpush1.msra.mxu0 %v129
    %158 = vmatprep.subr.mxu0 0.0
    %159 = vmatpush1.msra.mxu0 %v130
    %160 = vmatprep.subr.mxu0 0.0
    %161 = vmatpush1.msra.mxu0 %v131
    %162 = vmatprep.subr.mxu0 0.0
    %163 = vmatpush1.msra.mxu0 0.0
    %164 = vmatprep.subr.mxu0 0.0
    %165 = vmatpush1.msra.mxu0 0.0
    %166 = vmatprep.subr.mxu0 0.0
    %167 = vmatpush1.msra.mxu0 0.0
    %168 = vmatprep.subr.mxu0 0.0
    %169 = vmatpush1.msra.mxu0 0.0
    %170 = vmatprep.subr.mxu0 0.0
    %171 = vmatpush1.msra.mxu0 0.0
    %172 = vmatprep.subr.mxu0 0.0
    %173 = vmatpush1.msra.mxu0 0.0
    %174 = vmatprep.subr.mxu0 0.0
    %175 = vmatpush1.msra.mxu0 0.0
    %176 = vmatprep.subr.mxu0 0.0
    %177 = vmatpush1.msra.mxu0 0.0
    %178 = vmatprep.subr.mxu0 0.0
    %179 = vmatpush1.msra.mxu0 0.0
    %180 = vmatprep.subr.mxu0 0.0
    %181 = vmatpush1.msra.mxu0 0.0
    %182 = vmatprep.subr.mxu0 0.0
    %183 = vmatpush1.msra.mxu0 0.0
    %184 = vmatprep.subr.mxu0 0.0
    %185 = vmatpush1.msra.mxu0 0.0
    %186 = vmatprep.subr.mxu0 0.0
    %187 = vmatpush1.msra.mxu0 0.0
    %188 = vmatprep.subr.mxu0 0.0
    %189 = vmatpush1.msra.mxu0 0.0
    %190 = vmatprep.subr.mxu0 0.0
    %191 = vmatpush1.msra.mxu0 0.0
    %192 = vmatprep.subr.mxu0 0.0
    %193 = vmatpush1.msra.mxu0 0.0
    %194 = vmatprep.subr.mxu0 0.0
    %195 = vmatpush1.msra.mxu0 0.0
    %196 = vmatprep.subr.mxu0 0.0
    %197 = vmatpush1.msra.mxu0 0.0
    %198 = vmatprep.subr.mxu0 0.0
    %199 = vmatpush1.msra.mxu0 0.0
    %200 = vmatprep.subr.mxu0 0.0
    %201 = vmatpush1.msra.mxu0 0.0
    %202 = vmatprep.subr.mxu0 0.0
    %203 = vmatpush1.msra.mxu0 0.0
    %204 = vmatprep.subr.mxu0 0.0
    %205 = vmatpush1.msra.mxu0 0.0
    %206 = vmatprep.subr.mxu0 0.0
    %207 = vmatpush1.msra.mxu0 0.0
    %208 = vmatprep.subr.mxu0 0.0
    %209 = vmatpush1.msra.mxu0 0.0
    %210 = vmatprep.mubr.f32.mxu0 0.0
    %211 = vmatmul.mubr.f32.gmra.mrb[0].mxu0 %v141
    %v212 = vpop.f32.mrb[0].mxu0
    %v213 = vadd.f32 %v137, %v212
    %v214 = vpop.f32.mrb[0].mxu0
    %215 = vmatprep.mubr.f32.mxu0 0.0
    %216 = vmatmul.mubr.f32.gmra.mrb[0].mxu0 %v144
    %v217 = vpop.f32.mrb[0].mxu0
    %v218 = vadd.f32 %v137, %v217
    %v219 = vpop.f32.mrb[0].mxu0
    %220 = vdwg.mxu0
    %v221 = vadd.f32 %v27, %v213
    %v222 = vadd.f32 %v28, %v218
    %v223 = vld [vmem:[%s5] sm:$0x1]
    %v224 = vld [vmem:[%s6] sm:$0x1]
    %v225 = vsel %vm40, %v221, 0.0
    %226 = vadd.xlane.f32.xlu0 %v225
    %v227 = vpop.xlane.xlu0 %226
    %v228 = vsel %vm40, %v222, 0.0
    %229 = vadd.xlane.f32.xlu0 %v228
    %v230 = vpop.xlane.xlu0 %229
    %v231 = vrcp.pop 32.0
    %v232 = vmul.f32 %v227, %v231
    %v233 = vmul.f32 %v230, %v231
    %v234 = vsub.f32 %v221, %v232
    %v235 = vsub.f32 %v222, %v233
    %v236 = vmul.f32 %v234, %v234
    %v237 = vmul.f32 %v235, %v235
    %v238 = vsel %vm40, %v236, 0.0
    %239 = vadd.xlane.f32.xlu0 %v238
    %v240 = vpop.xlane.xlu0 %239
    %v241 = vsel %vm40, %v237, 0.0
    %242 = vadd.xlane.f32.xlu0 %v241
    %v243 = vpop.xlane.xlu0 %242
    %v244 = vmul.f32 %v240, %v231
    %v245 = vmul.f32 %v243, %v231
    %v246 = vadd.f32 %v244, 1e-05
    %v247 = vadd.f32 %v245, 1e-05
    %v248 = vrsqrt.pop %v246
    %v249 = vrsqrt.pop %v247
    %v250 = vmul.f32 %v234, %v248
    %v251 = vmul.f32 %v235, %v249
    %v253 = vlaneseq
    %v254 = vshrl.u32 %v253, 7
    %v255 = vsub.s32 0, %v254
    %v256 = vrot.slane %v223, %v255
    %v258 = vmul.f32 %v250, %v256
    %v259 = vmul.f32 %v251, %v256
    %v261 = vlaneseq
    %v262 = vshrl.u32 %v261, 7
    %v263 = vsub.s32 0, %v262
    %v264 = vrot.slane %v224, %v263
    %v266 = vadd.f32 %v258, %v264
    %v267 = vadd.f32 %v259, %v264
    %268 = vst.msk [vmem:[#allocation2] sm:$0xff] %vm40, %v266
    %269 = vst.msk [vmem:[#allocation2 + $0x8] sm:$0xff] %vm40, %v267
    // Predicated region
    $region30: #{decoder_forward.11} parent=1 // pred_check
      _
    $region31: #{decoder_forward.11} parent=1 // pred_check_branch
      %271 = sbr.rel (0) target = $region33
    $region32: #{decoder_forward.11} parent=1 // pred_region
      %s273 = ssub.s32 256, 256
      %274 = vsyncadd [#allocation3], %s273
      %s275 = sshll.u32 [#allocation2], 4
      %s276 = int_to_ptr.vmem [resolvable:$true] %s275
      %281 = dma.vmem_to_hbm [thread:$0]  %s276, 256, %s7, [#allocation3], 128, 128, 8
    $region33: #{decoder_forward.11} parent=1 // pred_fallthru
      _
    // Predicated region
    $region34: #{decoder_forward.11} parent=1 // pred_check
      _
    $region35: #{decoder_forward.11} parent=1 // pred_check_branch
      %283 = sbr.rel (0) target = $region37
    $region36: #{decoder_forward.11} parent=1 // pred_region
      %284 = dma.done [#allocation3], 256
    $region37: #{decoder_forward.11} parent=1 // pred_fallthru
      _
    %285 = vsyncpa [#allocation3], 1

// kernel: decoder_forward.8
$region0: #{decoder_forward.8}
  #allocation0 [shape = 'u32[]', space=smem, size = 0x4, offset = 0x4, fixed_abs, tag = 'smem constant byte address 0x4 - core index']
  #allocation1 [shape = 'u32[144,128]{1,0:T(1,128)}', space=vmem, size = 0x12000, scoped, tag = 'internal scratch']
  %s0 = inlined_call_operand.vmem [shape: f32[16,32], index: 0, kind: input, shape index: {}]
  %s1 = inlined_call_operand.vmem [shape: f32[32,64], index: 1, kind: input, shape index: {}]
  %s2 = inlined_call_operand.vmem [shape: f32[1,64], index: 2, kind: input, shape index: {}]
  %s3 = inlined_call_operand.vmem [shape: f32[64,32], index: 3, kind: input, shape index: {}]
  %s4 = inlined_call_operand.vmem [shape: f32[1,32], index: 4, kind: input, shape index: {}]
  %s5 = inlined_call_operand.vmem [shape: f32[1,32], index: 5, kind: input, shape index: {}]
  %s6 = inlined_call_operand.vmem [shape: f32[1,32], index: 6, kind: input, shape index: {}]
  %s7 = inlined_call_operand.vmem [shape: f32[16,32], index: 7, kind: output, shape index: {}]
  %s8 = sld [smem:[#allocation0]]
  $region38: #{decoder_forward.8} parent=0
    _
  %s10 = ssub.s32 1, %s8
  %s11 = scalar_select 0, %s10, %s8
  // Predicated region
  $region2: #{decoder_forward.8} parent=0 // pred_check
    _
  $region3: #{decoder_forward.8} parent=0 // pred_check_branch
    %13 = sbr.rel (0) target = $region5
  $region4: #{decoder_forward.8} parent=0 // pred_region
    _
  $region5: #{decoder_forward.8} parent=0 // pred_fallthru
    _
  // Predicated region
  $region6: #{decoder_forward.8} parent=0 // pred_check
    _
  $region7: #{decoder_forward.8} parent=0 // pred_check_branch
    %15 = sbr.rel (0) target = $region9
  $region8: #{decoder_forward.8} parent=0 // pred_region
    _
  $region9: #{decoder_forward.8} parent=0 // pred_fallthru
    _
  // Predicated region
  $region10: #{decoder_forward.8} parent=0 // pred_check
    _
  $region11: #{decoder_forward.8} parent=0 // pred_check_branch
    %17 = sbr.rel (0) target = $region13
  $region12: #{decoder_forward.8} parent=0 // pred_region
    _
  $region13: #{decoder_forward.8} parent=0 // pred_fallthru
    _
  // Predicated region
  $region14: #{decoder_forward.8} parent=0 // pred_check
    _
  $region15: #{decoder_forward.8} parent=0 // pred_check_branch
    %19 = sbr.rel (0) target = $region17
  $region16: #{decoder_forward.8} parent=0 // pred_region
    _
  $region17: #{decoder_forward.8} parent=0 // pred_fallthru
    _
  // Predicated region
  $region18: #{decoder_forward.8} parent=0 // pred_check
    _
  $region19: #{decoder_forward.8} parent=0 // pred_check_branch
    %21 = sbr.rel (0) target = $region21
  $region20: #{decoder_forward.8} parent=0 // pred_region
    _
  $region21: #{decoder_forward.8} parent=0 // pred_fallthru
    _
  // Predicated region
  $region22: #{decoder_forward.8} parent=0 // pred_check
    _
  $region23: #{decoder_forward.8} parent=0 // pred_check_branch
    %23 = sbr.rel (0) target = $region25
  $region24: #{decoder_forward.8} parent=0 // pred_region
    _
  $region25: #{decoder_forward.8} parent=0 // pred_fallthru
    _
  // Predicated region
  $region26: #{decoder_forward.8} parent=0 // pred_check
    _
  $region27: #{decoder_forward.8} parent=0 // pred_check_branch
    %25 = sbr.rel (0) target = $region29
  $region28: #{decoder_forward.8} parent=0 // pred_region
    _
  $region29: #{decoder_forward.8} parent=0 // pred_fallthru
    _
  %v26 = vld [vmem:[%s0] sm:$0xff]
  %v27 = vld [vmem:[%s0 + $0x8] sm:$0xff]
  %v28 = vld [vmem:[%s1] sm:$0xff]
  %v29 = vld [vmem:[%s1 + $0x8] sm:$0xff]
  %v30 = vld [vmem:[%s1 + $0x10] sm:$0xff]
  %v31 = vld [vmem:[%s1 + $0x18] sm:$0xff]
  %v32 = vld [vmem:[%s2] sm:$0x1]
  %v34 = vlaneseq
  %v35 = vshrl.u32 %v34, 7
  %v36 = vsub.s32 0, %v35
  %v37 = vrot.slane %v32, %v36
  %vm39 = vcmask 261120
  %v41 = vsel %vm39, %v26, 0
  %v44 = vsel %vm39, %v27, 0
  %46 = vmatprep.subr.mxu0 0.0
  %47 = vmatpush1.msra.mxu0 %v28
  %48 = vmatprep.subr.mxu0 0.0
  %49 = vmatpush1.msra.mxu0 %v29
  %50 = vmatprep.subr.mxu0 0.0
  %51 = vmatpush1.msra.mxu0 %v30
  %52 = vmatprep.subr.mxu0 0.0
  %53 = vmatpush1.msra.mxu0 %v31
  %54 = vmatprep.subr.mxu0 0.0
  %55 = vmatpush1.msra.mxu0 0.0
  %56 = vmatprep.subr.mxu0 0.0
  %57 = vmatpush1.msra.mxu0 0.0
  %58 = vmatprep.subr.mxu0 0.0
  %59 = vmatpush1.msra.mxu0 0.0
  %60 = vmatprep.subr.mxu0 0.0
  %61 = vmatpush1.msra.mxu0 0.0
  %62 = vmatprep.subr.mxu0 0.0
  %63 = vmatpush1.msra.mxu0 0.0
  %64 = vmatprep.subr.mxu0 0.0
  %65 = vmatpush1.msra.mxu0 0.0
  %66 = vmatprep.subr.mxu0 0.0
  %67 = vmatpush1.msra.mxu0 0.0
  %68 = vmatprep.subr.mxu0 0.0
  %69 = vmatpush1.msra.mxu0 0.0
  %70 = vmatprep.subr.mxu0 0.0
  %71 = vmatpush1.msra.mxu0 0.0
  %72 = vmatprep.subr.mxu0 0.0
  %73 = vmatpush1.msra.mxu0 0.0
  %74 = vmatprep.subr.mxu0 0.0
  %75 = vmatpush1.msra.mxu0 0.0
  %76 = vmatprep.subr.mxu0 0.0
  %77 = vmatpush1.msra.mxu0 0.0
  %78 = vmatprep.subr.mxu0 0.0
  %79 = vmatpush1.msra.mxu0 0.0
  %80 = vmatprep.subr.mxu0 0.0
  %81 = vmatpush1.msra.mxu0 0.0
  %82 = vmatprep.subr.mxu0 0.0
  %83 = vmatpush1.msra.mxu0 0.0
  %84 = vmatprep.subr.mxu0 0.0
  %85 = vmatpush1.msra.mxu0 0.0
  %86 = vmatprep.subr.mxu0 0.0
  %87 = vmatpush1.msra.mxu0 0.0
  %88 = vmatprep.subr.mxu0 0.0
  %89 = vmatpush1.msra.mxu0 0.0
  %90 = vmatprep.subr.mxu0 0.0
  %91 = vmatpush1.msra.mxu0 0.0
  %92 = vmatprep.subr.mxu0 0.0
  %93 = vmatpush1.msra.mxu0 0.0
  %94 = vmatprep.subr.mxu0 0.0
  %95 = vmatpush1.msra.mxu0 0.0
  %96 = vmatprep.subr.mxu0 0.0
  %97 = vmatpush1.msra.mxu0 0.0
  %98 = vmatprep.subr.mxu0 0.0
  %99 = vmatpush1.msra.mxu0 0.0
  %100 = vmatprep.subr.mxu0 0.0
  %101 = vmatpush1.msra.mxu0 0.0
  %102 = vmatprep.subr.mxu0 0.0
  %103 = vmatpush1.msra.mxu0 0.0
  %104 = vmatprep.subr.mxu0 0.0
  %105 = vmatpush1.msra.mxu0 0.0
  %106 = vmatprep.subr.mxu0 0.0
  %107 = vmatpush1.msra.mxu0 0.0
  %108 = vmatprep.subr.mxu0 0.0
  %109 = vmatpush1.msra.mxu0 0.0
  %110 = vmatprep.mubr.f32.mxu0 0.0
  %111 = vmatmul.mubr.f32.gmra.mrb[0].mxu0 %v41
  %v112 = vpop.f32.mrb[0].mxu0
  %v113 = vadd.f32 %v37, %v112
  %v114 = vpop.f32.mrb[0].mxu0
  %115 = vmatprep.mubr.f32.mxu0 0.0
  %116 = vmatmul.mubr.f32.gmra.mrb[0].mxu0 %v44
  %v117 = vpop.f32.mrb[0].mxu0
  %v118 = vadd.f32 %v37, %v117
  %v119 = vpop.f32.mrb[0].mxu0
  %120 = vdwg.mxu0
  %v121 = vmax.f32 %v113, 0.0
  %v122 = vmax.f32 %v118, 0.0
  %v123 = vld [vmem:[%s3] sm:$0xff]
  %v124 = vld [vmem:[%s3 + $0x8] sm:$0xff]
  %v125 = vld [vmem:[%s3 + $0x10] sm:$0xff]
  %v126 = vld [vmem:[%s3 + $0x18] sm:$0xff]
  %v127 = vld [vmem:[%s3 + $0x20] sm:$0xff]
  %v128 = vld [vmem:[%s3 + $0x28] sm:$0xff]
  %v129 = vld [vmem:[%s3 + $0x30] sm:$0xff]
  %v130 = vld [vmem:[%s3 + $0x38] sm:$0xff]
  %v131 = vld [vmem:[%s4] sm:$0x1]
  %v133 = vlaneseq
  %v134 = vshrl.u32 %v133, 7
  %v135 = vsub.s32 0, %v134
  %v136 = vrot.slane %v131, %v135
  %vm138 = vcmask 523264
  %v140 = vsel %vm138, %v121, 0
  %v143 = vsel %vm138, %v122, 0
  %145 = vmatprep.subr.mxu0 0.0
  %146 = vmatpush1.msra.mxu0 %v123
  %147 = vmatprep.subr.mxu0 0.0
  %148 = vmatpush1.msra.mxu0 %v124
  %149 = vmatprep.subr.mxu0 0.0
  %150 = vmatpush1.msra.mxu0 %v125
  %151 = vmatprep.subr.mxu0 0.0
  %152 = vmatpush1.msra.mxu0 %v126
  %153 = vmatprep.subr.mxu0 0.0
  %154 = vmatpush1.msra.mxu0 %v127
  %155 = vmatprep.subr.mxu0 0.0
  %156 = vmatpush1.msra.mxu0 %v128
  %157 = vmatprep.subr.mxu0 0.0
  %158 = vmatpush1.msra.mxu0 %v129
  %159 = vmatprep.subr.mxu0 0.0
  %160 = vmatpush1.msra.mxu0 %v130
  %161 = vmatprep.subr.mxu0 0.0
  %162 = vmatpush1.msra.mxu0 0.0
  %163 = vmatprep.subr.mxu0 0.0
  %164 = vmatpush1.msra.mxu0 0.0
  %165 = vmatprep.subr.mxu0 0.0
  %166 = vmatpush1.msra.mxu0 0.0
  %167 = vmatprep.subr.mxu0 0.0
  %168 = vmatpush1.msra.mxu0 0.0
  %169 = vmatprep.subr.mxu0 0.0
  %170 = vmatpush1.msra.mxu0 0.0
  %171 = vmatprep.subr.mxu0 0.0
  %172 = vmatpush1.msra.mxu0 0.0
  %173 = vmatprep.subr.mxu0 0.0
  %174 = vmatpush1.msra.mxu0 0.0
  %175 = vmatprep.subr.mxu0 0.0
  %176 = vmatpush1.msra.mxu0 0.0
  %177 = vmatprep.subr.mxu0 0.0
  %178 = vmatpush1.msra.mxu0 0.0
  %179 = vmatprep.subr.mxu0 0.0
  %180 = vmatpush1.msra.mxu0 0.0
  %181 = vmatprep.subr.mxu0 0.0
  %182 = vmatpush1.msra.mxu0 0.0
  %183 = vmatprep.subr.mxu0 0.0
  %184 = vmatpush1.msra.mxu0 0.0
  %185 = vmatprep.subr.mxu0 0.0
  %186 = vmatpush1.msra.mxu0 0.0
  %187 = vmatprep.subr.mxu0 0.0
  %188 = vmatpush1.msra.mxu0 0.0
  %189 = vmatprep.subr.mxu0 0.0
  %190 = vmatpush1.msra.mxu0 0.0
  %191 = vmatprep.subr.mxu0 0.0
  %192 = vmatpush1.msra.mxu0 0.0
  %193 = vmatprep.subr.mxu0 0.0
  %194 = vmatpush1.msra.mxu0 0.0
  %195 = vmatprep.subr.mxu0 0.0
  %196 = vmatpush1.msra.mxu0 0.0
  %197 = vmatprep.subr.mxu0 0.0
  %198 = vmatpush1.msra.mxu0 0.0
  %199 = vmatprep.subr.mxu0 0.0
  %200 = vmatpush1.msra.mxu0 0.0
  %201 = vmatprep.subr.mxu0 0.0
  %202 = vmatpush1.msra.mxu0 0.0
  %203 = vmatprep.subr.mxu0 0.0
  %204 = vmatpush1.msra.mxu0 0.0
  %205 = vmatprep.subr.mxu0 0.0
  %206 = vmatpush1.msra.mxu0 0.0
  %207 = vmatprep.subr.mxu0 0.0
  %208 = vmatpush1.msra.mxu0 0.0
  %209 = vmatprep.mubr.f32.mxu0 0.0
  %210 = vmatmul.mubr.f32.gmra.mrb[0].mxu0 %v140
  %v211 = vpop.f32.mrb[0].mxu0
  %v212 = vadd.f32 %v136, %v211
  %v213 = vpop.f32.mrb[0].mxu0
  %214 = vmatprep.mubr.f32.mxu0 0.0
  %215 = vmatmul.mubr.f32.gmra.mrb[0].mxu0 %v143
  %v216 = vpop.f32.mrb[0].mxu0
  %v217 = vadd.f32 %v136, %v216
  %v218 = vpop.f32.mrb[0].mxu0
  %219 = vdwg.mxu0
  %v220 = vadd.f32 %v26, %v212
  %v221 = vadd.f32 %v27, %v217
  %v222 = vld [vmem:[%s5] sm:$0x1]
  %v223 = vld [vmem:[%s6] sm:$0x1]
  %v224 = vsel %vm39, %v220, 0.0
  %225 = vadd.xlane.f32.xlu0 %v224
  %v226 = vpop.xlane.xlu0 %225
  %v227 = vsel %vm39, %v221, 0.0
  %228 = vadd.xlane.f32.xlu0 %v227
  %v229 = vpop.xlane.xlu0 %228
  %v230 = vrcp.pop 32.0
  %v231 = vmul.f32 %v226, %v230
  %v232 = vmul.f32 %v229, %v230
  %v233 = vsub.f32 %v220, %v231
  %v234 = vsub.f32 %v221, %v232
  %v235 = vmul.f32 %v233, %v233
  %v236 = vmul.f32 %v234, %v234
  %v237 = vsel %vm39, %v235, 0.0
  %238 = vadd.xlane.f32.xlu0 %v237
  %v239 = vpop.xlane.xlu0 %238
  %v240 = vsel %vm39, %v236, 0.0
  %241 = vadd.xlane.f32.xlu0 %v240
  %v242 = vpop.xlane.xlu0 %241
  %v243 = vmul.f32 %v239, %v230
  %v244 = vmul.f32 %v242, %v230
  %v245 = vadd.f32 %v243, 1e-05
  %v246 = vadd.f32 %v244, 1e-05
  %v247 = vrsqrt.pop %v245
  %v248 = vrsqrt.pop %v246
  %v249 = vmul.f32 %v233, %v247
  %v250 = vmul.f32 %v234, %v248
  %v252 = vlaneseq
  %v253 = vshrl.u32 %v252, 7
  %v254 = vsub.s32 0, %v253
  %v255 = vrot.slane %v222, %v254
  %v257 = vmul.f32 %v249, %v255
  %v258 = vmul.f32 %v250, %v255
  %v260 = vlaneseq
  %v261 = vshrl.u32 %v260, 7
  %v262 = vsub.s32 0, %v261
  %v263 = vrot.slane %v223, %v262
  %v265 = vadd.f32 %v257, %v263
  %v266 = vadd.f32 %v258, %v263
  %267 = vst.msk [vmem:[%s7] sm:$0xff] %vm39, %v265
  %268 = vst.msk [vmem:[%s7 + $0x8] sm:$0xff] %vm39, %v266
  // Predicated region
  $region30: #{decoder_forward.8} parent=0 // pred_check
    _
  $region31: #{decoder_forward.8} parent=0 // pred_check_branch
    %270 = sbr.rel (0) target = $region33
  $region32: #{decoder_forward.8} parent=0 // pred_region
    _
  $region33: #{decoder_forward.8} parent=0 // pred_fallthru
    _
  // Predicated region
  $region34: #{decoder_forward.8} parent=0 // pred_check
    _
  $region35: #{decoder_forward.8} parent=0 // pred_check_branch
    %272 = sbr.rel (0) target = $region37
  $region36: #{decoder_forward.8} parent=0 // pred_region
    _
  $region37: #{decoder_forward.8} parent=0 // pred_fallthru
    _

// kernel: decoder_forward.6
$region0: #{decoder_forward.6}
  #allocation0 [shape = 'u32[]', space=smem, size = 0x4, offset = 0x4, fixed_abs, tag = 'smem constant byte address 0x4 - core index']
  #allocation1 [shape = 'u32[144,128]{1,0:T(1,128)}', space=vmem, size = 0x12000, scoped, tag = 'internal scratch']
  %s0 = inlined_call_operand.vmem [shape: f32[2,8,32], index: 0, kind: input, shape index: {}]
  %s1 = inlined_call_operand.vmem [shape: f32[2,1,8], index: 1, kind: input, shape index: {}]
  %s2 = inlined_call_operand.vmem [shape: f32[32,96], index: 2, kind: input, shape index: {}]
  %s3 = inlined_call_operand.vmem [shape: f32[1,96], index: 3, kind: input, shape index: {}]
  %s4 = inlined_call_operand.vmem [shape: f32[32,32], index: 4, kind: input, shape index: {}]
  %s5 = inlined_call_operand.vmem [shape: f32[1,32], index: 5, kind: input, shape index: {}]
  %s6 = inlined_call_operand.vmem [shape: f32[1,32], index: 6, kind: input, shape index: {}]
  %s7 = inlined_call_operand.vmem [shape: f32[1,32], index: 7, kind: input, shape index: {}]
  %s8 = inlined_call_operand.vmem [shape: f32[2,8,32], index: 8, kind: output, shape index: {}]
  %s9 = sld [smem:[#allocation0]]
  $region65: #{decoder_forward.6} parent=0
    _
  %s11 = ssub.s32 1, %s9
  %s12 = scalar_select 0, %s11, %s9
  loop: start=0, step=1, limit=4
  $region2: #{decoder_forward.6} parent=0 // loop_pre_header
    _
  $region3: #{decoder_forward.6} parent=0 // loop_header
    %s14 = sphi 0, %s18
    %p15 = scmp.ge.s32.totalorder %s14, 4
    %s24 = sphi 0, %s26
    %s27 = sphi 0, %s24
    %s28 = sphi 0, %s27
    %s44 = sphi 0, %s28
    %s50 = sphi 0, %s52
    %s53 = sphi 0, %s50
    %s54 = sphi 0, %s53
    %s70 = sphi 0, %s54
    %s74 = sphi 0, %s74
    %s76 = sphi 0, %s74
    %s77 = sphi 0, %s76
    %s91 = sphi 0, %s77
    %s95 = sphi 0, %s95
    %s97 = sphi 0, %s95
    %s98 = sphi 0, %s97
    %s112 = sphi 0, %s98
    %s116 = sphi 0, %s116
    %s118 = sphi 0, %s116
    %s119 = sphi 0, %s118
    %s133 = sphi 0, %s119
    %s137 = sphi 0, %s137
    %s139 = sphi 0, %s137
    %s140 = sphi 0, %s139
    %s154 = sphi 0, %s140
    %s158 = sphi 0, %s158
    %s160 = sphi 0, %s158
    %s161 = sphi 0, %s160
    %s175 = sphi 0, %s161
    %s179 = sphi 0, %s179
    %s181 = sphi 0, %s179
    %s182 = sphi 0, %s181
    %s196 = sphi 0, %s182
    %s202 = sphi 0, %s204
    %s205 = sphi 0, %s202
    %s206 = sphi 0, %s205
    %s222 = sphi 0, %s206
  $region4: #{decoder_forward.6} parent=0 // loop_header_branch
    %17 = sbr.rel (%p15) target = $region8
  $region5: #{decoder_forward.6} parent=0 // loop_body
    %s19 = ssub.s32 %s14, 1
    %s20 = ssub.s32 %s14, 2
    %s21 = sadd.s32 %s14, 1
    %s22 = ssub.s32 %s14, %s21
    %p23 = scmp.eq.s32.totalorder %s22, 0
    %s25 = sadd.s32 %s24, 1
    %s26 = scalar_select %p23, %s24, %s25
    %p29 = pneg %p23
    %p30 = scmp.eq.s32.totalorder %s14, 1
    %p31 = por %p29, %p30
    %p32 = scmp.ne.s32.totalorder %s24, %s27
    %p33 = scmp.eq.s32.totalorder %s14, 0
    %p34 = por %p32, %p33
    %p35 = scmp.ne.s32.totalorder %s24, %s27
    %p36 = scmp.eq.s32.totalorder %s19, 1
    %p37 = por %p35, %p36
    %p38 = scmp.ne.s32.totalorder %s27, %s28
    %p39 = scmp.eq.s32.totalorder %s19, 0
    %p40 = por %p38, %p39
    %p41 = scmp.ne.s32.totalorder %s27, %s28
    %p42 = scmp.eq.s32.totalorder %s20, 1
    %p43 = por %p41, %p42
    %p45 = scmp.ne.s32.totalorder %s28, %s44
    %p46 = scmp.eq.s32.totalorder %s20, 0
    %p47 = por %p45, %p46
    %s48 = ssub.s32 %s14, %s21
    %p49 = scmp.eq.s32.totalorder %s48, 0
    %s51 = sadd.s32 %s50, 1
    %s52 = scalar_select %p49, %s50, %s51
    %p55 = pneg %p49
    %p56 = scmp.eq.s32.totalorder %s14, 1
    %p57 = por %p55, %p56
    %p58 = scmp.ne.s32.totalorder %s50, %s53
    %p59 = scmp.eq.s32.totalorder %s14, 0
    %p60 = por %p58, %p59
    %p61 = scmp.ne.s32.totalorder %s50, %s53
    %p62 = scmp.eq.s32.totalorder %s19, 1
    %p63 = por %p61, %p62
    %p64 = scmp.ne.s32.totalorder %s53, %s54
    %p65 = scmp.eq.s32.totalorder %s19, 0
    %p66 = por %p64, %p65
    %p67 = scmp.ne.s32.totalorder %s53, %s54
    %p68 = scmp.eq.s32.totalorder %s20, 1
    %p69 = por %p67, %p68
    %p71 = scmp.ne.s32.totalorder %s54, %s70
    %p72 = scmp.eq.s32.totalorder %s20, 0
    %p73 = por %p71, %p72
    %s75 = sadd.s32 %s74, 1
    %p78 = scmp.eq.s32.totalorder %s14, 1
    %p79 = scmp.ne.s32.totalorder %s74, %s76
    %p80 = scmp.eq.s32.totalorder %s14, 0
    %p81 = por %p79, %p80
    %p82 = scmp.ne.s32.totalorder %s74, %s76
    %p83 = scmp.eq.s32.totalorder %s19, 1
    %p84 = por %p82, %p83
    %p85 = scmp.ne.s32.totalorder %s76, %s77
    %p86 = scmp.eq.s32.totalorder %s19, 0
    %p87 = por %p85, %p86
    %p88 = scmp.ne.s32.totalorder %s76, %s77
    %p89 = scmp.eq.s32.totalorder %s20, 1
    %p90 = por %p88, %p89
    %p92 = scmp.ne.s32.totalorder %s77, %s91
    %p93 = scmp.eq.s32.totalorder %s20, 0
    %p94 = por %p92, %p93
    %s96 = sadd.s32 %s95, 1
    %p99 = scmp.eq.s32.totalorder %s14, 1
    %p100 = scmp.ne.s32.totalorder %s95, %s97
    %p101 = scmp.eq.s32.totalorder %s14, 0
    %p102 = por %p100, %p101
    %p103 = scmp.ne.s32.totalorder %s95, %s97
    %p104 = scmp.eq.s32.totalorder %s19, 1
    %p105 = por %p103, %p104
    %p106 = scmp.ne.s32.totalorder %s97, %s98
    %p107 = scmp.eq.s32.totalorder %s19, 0
    %p108 = por %p106, %p107
    %p109 = scmp.ne.s32.totalorder %s97, %s98
    %p110 = scmp.eq.s32.totalorder %s20, 1
    %p111 = por %p109, %p110
    %p113 = scmp.ne.s32.totalorder %s98, %s112
    %p114 = scmp.eq.s32.totalorder %s20, 0
    %p115 = por %p113, %p114
    %s117 = sadd.s32 %s116, 1
    %p120 = scmp.eq.s32.totalorder %s14, 1
    %p121 = scmp.ne.s32.totalorder %s116, %s118
    %p122 = scmp.eq.s32.totalorder %s14, 0
    %p123 = por %p121, %p122
    %p124 = scmp.ne.s32.totalorder %s116, %s118
    %p125 = scmp.eq.s32.totalorder %s19, 1
    %p126 = por %p124, %p125
    %p127 = scmp.ne.s32.totalorder %s118, %s119
    %p128 = scmp.eq.s32.totalorder %s19, 0
    %p129 = por %p127, %p128
    %p130 = scmp.ne.s32.totalorder %s118, %s119
    %p131 = scmp.eq.s32.totalorder %s20, 1
    %p132 = por %p130, %p131
    %p134 = scmp.ne.s32.totalorder %s119, %s133
    %p135 = scmp.eq.s32.totalorder %s20, 0
    %p136 = por %p134, %p135
    %s138 = sadd.s32 %s137, 1
    %p141 = scmp.eq.s32.totalorder %s14, 1
    %p142 = scmp.ne.s32.totalorder %s137, %s139
    %p143 = scmp.eq.s32.totalorder %s14, 0
    %p144 = por %p142, %p143
    %p145 = scmp.ne.s32.totalorder %s137, %s139
    %p146 = scmp.eq.s32.totalorder %s19, 1
    %p147 = por %p145, %p146
    %p148 = scmp.ne.s32.totalorder %s139, %s140
    %p149 = scmp.eq.s32.totalorder %s19, 0
    %p150 = por %p148, %p149
    %p151 = scmp.ne.s32.totalorder %s139, %s140
    %p152 = scmp.eq.s32.totalorder %s20, 1
    %p153 = por %p151, %p152
    %p155 = scmp.ne.s32.totalorder %s140, %s154
    %p156 = scmp.eq.s32.totalorder %s20, 0
    %p157 = por %p155, %p156
    %s159 = sadd.s32 %s158, 1
    %p162 = scmp.eq.s32.totalorder %s14, 1
    %p163 = scmp.ne.s32.totalorder %s158, %s160
    %p164 = scmp.eq.s32.totalorder %s14, 0
    %p165 = por %p163, %p164
    %p166 = scmp.ne.s32.totalorder %s158, %s160
    %p167 = scmp.eq.s32.totalorder %s19, 1
    %p168 = por %p166, %p167
    %p169 = scmp.ne.s32.totalorder %s160, %s161
    %p170 = scmp.eq.s32.totalorder %s19, 0
    %p171 = por %p169, %p170
    %p172 = scmp.ne.s32.totalorder %s160, %s161
    %p173 = scmp.eq.s32.totalorder %s20, 1
    %p174 = por %p172, %p173
    %p176 = scmp.ne.s32.totalorder %s161, %s175
    %p177 = scmp.eq.s32.totalorder %s20, 0
    %p178 = por %p176, %p177
    %s180 = sadd.s32 %s179, 1
    %p183 = scmp.eq.s32.totalorder %s14, 1
    %p184 = scmp.ne.s32.totalorder %s179, %s181
    %p185 = scmp.eq.s32.totalorder %s14, 0
    %p186 = por %p184, %p185
    %p187 = scmp.ne.s32.totalorder %s179, %s181
    %p188 = scmp.eq.s32.totalorder %s19, 1
    %p189 = por %p187, %p188
    %p190 = scmp.ne.s32.totalorder %s181, %s182
    %p191 = scmp.eq.s32.totalorder %s19, 0
    %p192 = por %p190, %p191
    %p193 = scmp.ne.s32.totalorder %s181, %s182
    %p194 = scmp.eq.s32.totalorder %s20, 1
    %p195 = por %p193, %p194
    %p197 = scmp.ne.s32.totalorder %s182, %s196
    %p198 = scmp.eq.s32.totalorder %s20, 0
    %p199 = por %p197, %p198
    %s200 = ssub.s32 %s14, %s21
    %p201 = scmp.eq.s32.totalorder %s200, 0
    %s203 = sadd.s32 %s202, 1
    %s204 = scalar_select %p201, %s202, %s203
    %p207 = pneg %p201
    %p208 = scmp.eq.s32.totalorder %s14, 1
    %p209 = por %p207, %p208
    %p210 = scmp.ne.s32.totalorder %s202, %s205
    %p211 = scmp.eq.s32.totalorder %s14, 0
    %p212 = por %p210, %p211
    %p213 = scmp.ne.s32.totalorder %s202, %s205
    %p214 = scmp.eq.s32.totalorder %s19, 1
    %p215 = por %p213, %p214
    %p216 = scmp.ne.s32.totalorder %s205, %s206
    %p217 = scmp.eq.s32.totalorder %s19, 0
    %p218 = por %p216, %p217
    %p219 = scmp.ne.s32.totalorder %s205, %s206
    %p220 = scmp.eq.s32.totalorder %s20, 1
    %p221 = por %p219, %p220
    %p223 = scmp.ne.s32.totalorder %s206, %s222
    %p224 = scmp.eq.s32.totalorder %s20, 0
    %p225 = por %p223, %p224
    %p226 = scmp.le.s32.totalorder 1, %s14
    %p227 = scmp.lt.s32.totalorder %s14, 3
    %p228 = pnand %p226, %p227
    %p229 = pneg %p228
    // Predicated region
    $region9: #{decoder_forward.6} parent=5 // pred_check
      _
    $region10: #{decoder_forward.6} parent=5 // pred_check_branch
      %231 = sbr.rel (%p228) target = $region12
    $region11: #{decoder_forward.6} parent=5 // pred_region
      %s232 = ssub.s32 %s14, 1
      // Predicated region
      $region13: #{decoder_forward.6} parent=11 // pred_check
        %p233 = pneg %p87
      $region14: #{decoder_forward.6} parent=11 // pred_check_branch
        %235 = sbr.rel (%p233) target = $region16
      $region15: #{decoder_forward.6} parent=11 // pred_region
        _
      $region16: #{decoder_forward.6} parent=11 // pred_fallthru
        _
      // Predicated region
      $region17: #{decoder_forward.6} parent=11 // pred_check
        %p236 = pneg %p108
      $region18: #{decoder_forward.6} parent=11 // pred_check_branch
        %238 = sbr.rel (%p236) target = $region20
      $region19: #{decoder_forward.6} parent=11 // pred_region
        _
      $region20: #{decoder_forward.6} parent=11 // pred_fallthru
        _
      // Predicated region
      $region21: #{decoder_forward.6} parent=11 // pred_check
        %p239 = pneg %p129
      $region22: #{decoder_forward.6} parent=11 // pred_check_branch
        %241 = sbr.rel (%p239) target = $region24
      $region23: #{decoder_forward.6} parent=11 // pred_region
        _
      $region24: #{decoder_forward.6} parent=11 // pred_fallthru
        _
      // Predicated region
      $region25: #{decoder_forward.6} parent=11 // pred_check
        %p242 = pneg %p150
      $region26: #{decoder_forward.6} parent=11 // pred_check_branch
        %244 = sbr.rel (%p242) target = $region28
      $region27: #{decoder_forward.6} parent=11 // pred_region
        _
      $region28: #{decoder_forward.6} parent=11 // pred_fallthru
        _
      // Predicated region
      $region29: #{decoder_forward.6} parent=11 // pred_check
        %p245 = pneg %p171
      $region30: #{decoder_forward.6} parent=11 // pred_check_branch
        %247 = sbr.rel (%p245) target = $region32
      $region31: #{decoder_forward.6} parent=11 // pred_region
        _
      $region32: #{decoder_forward.6} parent=11 // pred_fallthru
        _
      // Predicated region
      $region33: #{decoder_forward.6} parent=11 // pred_check
        %p248 = pneg %p192
      $region34: #{decoder_forward.6} parent=11 // pred_check_branch
        %250 = sbr.rel (%p248) target = $region36
      $region35: #{decoder_forward.6} parent=11 // pred_region
        _
      $region36: #{decoder_forward.6} parent=11 // pred_fallthru
        _
    $region12: #{decoder_forward.6} parent=5 // pred_fallthru
      _
    %p251 = scmp.lt.s32.totalorder %s14, 2
    // Predicated region
    $region37: #{decoder_forward.6} parent=5 // pred_check
      %p252 = pneg %p251
    $region38: #{decoder_forward.6} parent=5 // pred_check_branch
      %254 = sbr.rel (%p252) target = $region40
    $region39: #{decoder_forward.6} parent=5 // pred_region
      // Predicated region
      $region41: #{decoder_forward.6} parent=39 // pred_check
        %p255 = pneg %p34
      $region42: #{decoder_forward.6} parent=39 // pred_check_branch
        %257 = sbr.rel (%p255) target = $region44
      $region43: #{decoder_forward.6} parent=39 // pred_region
        %p258 = scmp.lt.s32.totalorder %s14, 1
        %s259 = scalar_select %p258, %s14, 1
        %s260 = smul.addr %s259, 8
        %s261 = scalar_lea.vmem %s0, %s260
      $region44: #{decoder_forward.6} parent=39 // pred_fallthru
        _
      // Predicated region
      $region45: #{decoder_forward.6} parent=39 // pred_check
        %p262 = pneg %p60
      $region46: #{decoder_forward.6} parent=39 // pred_check_branch
        %264 = sbr.rel (%p262) target = $region48
      $region47: #{decoder_forward.6} parent=39 // pred_region
        %p265 = scmp.lt.s32.totalorder %s14, 1
        %s266 = scalar_select %p265, %s14, 1
        %s267 = scalar_lea.vmem %s1, %s266
      $region48: #{decoder_forward.6} parent=39 // pred_fallthru
        _
    $region40: #{decoder_forward.6} parent=5 // pred_fallthru
      _
    %p268 = scmp.le.s32.totalorder 1, %s14
    %p269 = scmp.lt.s32.totalorder %s14, 3
    %p270 = pnand %p268, %p269
    %p271 = pneg %p270
    // Predicated region
    $region49: #{decoder_forward.6} parent=5 // pred_check
      _
    $region50: #{decoder_forward.6} parent=5 // pred_check_branch
      %273 = sbr.rel (%p270) target = $region52
    $region51: #{decoder_forward.6} parent=5 // pred_region
      %s274 = ssub.s32 %s14, 1
      %p275 = scmp.lt.s32.totalorder %s19, 1
      %s276 = scalar_select %p275, %s19, 1
      %s277 = smul.addr %s276, 8
      %s278 = scalar_lea.vmem %s0, %s277
      %p279 = pneg %p40
      %p280 = pneg %p37
      %p281 = scmp.lt.s32.totalorder %s19, 1
      %s282 = scalar_select %p281, %s19, 1
      %s283 = scalar_lea.vmem %s1, %s282
      %p284 = pneg %p66
      %p285 = pneg %p63
      %p286 = pneg %p87
      %p287 = pneg %p84
      %p288 = pneg %p108
      %p289 = pneg %p105
      %p290 = pneg %p129
      %p291 = pneg %p126
      %p292 = pneg %p150
      %p293 = pneg %p147
      %p294 = pneg %p171
      %p295 = pneg %p168
      %p296 = pneg %p192
      %p297 = pneg %p189
      %p298 = pneg %p218
      %p299 = pneg %p215
      %p300 = scmp.lt.s32.totalorder %s19, 1
      %s301 = scalar_select %p300, %s19, 1
      %s302 = smul.addr %s301, 8
      %s303 = scalar_lea.vmem %s8, %s302
      %p304 = scmp.lt.s32.totalorder %s19, 1
      %s305 = scalar_select %p304, %s19, 1
      %s306 = smul.addr %s305, 8
      %s307 = scalar_lea.vmem %s0, %s306
      %p308 = scmp.lt.s32.totalorder %s19, 1
      %s309 = scalar_select %p308, %s19, 1
      %s310 = scalar_lea.vmem %s1, %s309
      %p311 = scmp.lt.s32.totalorder %s19, 1
      %s312 = scalar_select %p311, %s19, 1
      %s313 = smul.addr %s312, 8
      %s314 = scalar_lea.vmem %s8, %s313
      %v315 = vld [vmem:[%s307] sm:$0xff]
      %v316 = vld [vmem:[%s2] sm:$0xff]
      %v317 = vld [vmem:[%s2 + $0x8] sm:$0xff]
      %v318 = vld [vmem:[%s2 + $0x10] sm:$0xff]
      %v319 = vld [vmem:[%s2 + $0x18] sm:$0xff]
      %v320 = vld [vmem:[%s3] sm:$0x1]
      %v322 = vlaneseq
      %v323 = vshrl.u32 %v322, 7
      %v324 = vsub.s32 0, %v323
      %v325 = vrot.slane %v320, %v324
      %vm327 = vcmask 261120
      %v329 = vsel %vm327, %v315, 0
      %331 = vmatprep.subr.mxu0 0.0
      %332 = vmatpush1.msra.mxu0 %v316
      %333 = vmatprep.subr.mxu0 0.0
      %334 = vmatpush1.msra.mxu0 %v317
      %335 = vmatprep.subr.mxu0 0.0
      %336 = vmatpush1.msra.mxu0 %v318
      %337 = vmatprep.subr.mxu0 0.0
      %338 = vmatpush1.msra.mxu0 %v319
      %339 = vmatprep.subr.mxu0 0.0
      %340 = vmatpush1.msra.mxu0 0.0
      %341 = vmatprep.subr.mxu0 0.0
      %342 = vmatpush1.msra.mxu0 0.0
      %343 = vmatprep.subr.mxu0 0.0
      %344 = vmatpush1.msra.mxu0 0.0
      %345 = vmatprep.subr.mxu0 0.0
      %346 = vmatpush1.msra.mxu0 0.0
      %347 = vmatprep.subr.mxu0 0.0
      %348 = vmatpush1.msra.mxu0 0.0
      %349 = vmatprep.subr.mxu0 0.0
      %350 = vmatpush1.msra.mxu0 0.0
      %351 = vmatprep.subr.mxu0 0.0
      %352 = vmatpush1.msra.mxu0 0.0
      %353 = vmatprep.subr.mxu0 0.0
      %354 = vmatpush1.msra.mxu0 0.0
      %355 = vmatprep.subr.mxu0 0.0
      %356 = vmatpush1.msra.mxu0 0.0
      %357 = vmatprep.subr.mxu0 0.0
      %358 = vmatpush1.msra.mxu0 0.0
      %359 = vmatprep.subr.mxu0 0.0
      %360 = vmatpush1.msra.mxu0 0.0
      %361 = vmatprep.subr.mxu0 0.0
      %362 = vmatpush1.msra.mxu0 0.0
      %363 = vmatprep.subr.mxu0 0.0
      %364 = vmatpush1.msra.mxu0 0.0
      %365 = vmatprep.subr.mxu0 0.0
      %366 = vmatpush1.msra.mxu0 0.0
      %367 = vmatprep.subr.mxu0 0.0
      %368 = vmatpush1.msra.mxu0 0.0
      %369 = vmatprep.subr.mxu0 0.0
      %370 = vmatpush1.msra.mxu0 0.0
      %371 = vmatprep.subr.mxu0 0.0
      %372 = vmatpush1.msra.mxu0 0.0
      %373 = vmatprep.subr.mxu0 0.0
      %374 = vmatpush1.msra.mxu0 0.0
      %375 = vmatprep.subr.mxu0 0.0
      %376 = vmatpush1.msra.mxu0 0.0
      %377 = vmatprep.subr.mxu0 0.0
      %378 = vmatpush1.msra.mxu0 0.0
      %379 = vmatprep.subr.mxu0 0.0
      %380 = vmatpush1.msra.mxu0 0.0
      %381 = vmatprep.subr.mxu0 0.0
      %382 = vmatpush1.msra.mxu0 0.0
      %383 = vmatprep.subr.mxu0 0.0
      %384 = vmatpush1.msra.mxu0 0.0
      %385 = vmatprep.subr.mxu0 0.0
      %386 = vmatpush1.msra.mxu0 0.0
      %387 = vmatprep.subr.mxu0 0.0
      %388 = vmatpush1.msra.mxu0 0.0
      %389 = vmatprep.subr.mxu0 0.0
      %390 = vmatpush1.msra.mxu0 0.0
      %391 = vmatprep.subr.mxu0 0.0
      %392 = vmatpush1.msra.mxu0 0.0
      %393 = vmatprep.subr.mxu0 0.0
      %394 = vmatpush1.msra.mxu0 0.0
      %395 = vmatprep.mubr.f32.mxu0 0.0
      %396 = vmatmul.mubr.f32.gmra.mrb[0].mxu0 %v329
      %v397 = vpop.f32.mrb[0].mxu0
      %v398 = vadd.f32 %v325, %v397
      %v399 = vpop.f32.mrb[0].mxu0
      %400 = vdwg.mxu0
      %v401 = vlaneseq
      %v402 = vshrl.u32 %v401, 7
      %v403 = vlaneseq
      %v404 = vand.u32 %v403, 127
      %vm405 = vcmp.gt.s32.totalorder %v404, %v402
      %v406 = vld [vmem:[%s310] sm:$0x1]
      %vm407 = vcmp.gt.f32.partialorder %v406, 0.0
      %v408 = vsel %vm407, 1, 0
      %v409 = vlaneseq
      %v410 = vshrl.u32 %v409, 7
      %v411 = vsub.s32 0, %v410
      %v412 = vrot.slane %v408, %v411
      %vm413 = vcmp.eq.s32.totalorder %v412, 1
      %vm414 = vmor %vm405, %vm413
      %v415 = vsel %vm414, -1e+09, 0.0
      %v416 = vld [vmem:[%s4] sm:$0xff]
      %v417 = vld [vmem:[%s4 + $0x8] sm:$0xff]
      %v418 = vld [vmem:[%s4 + $0x10] sm:$0xff]
      %v419 = vld [vmem:[%s4 + $0x18] sm:$0xff]
      %v420 = vld [vmem:[%s5] sm:$0x1]
      %v421 = vld [vmem:[%s6] sm:$0x1]
      %v422 = vld [vmem:[%s7] sm:$0x1]
      %424 = vrot.lane.b32.xlu0 %v398, 120
      %v425 = vpop.permute.xlu0 %424
      %426 = vrot.lane.b32.xlu0 %v398, 112
      %v427 = vpop.permute.xlu0 %426
      %428 = vrot.lane.b32.xlu0 %v398, 104
      %v429 = vpop.permute.xlu0 %428
      %430 = vrot.lane.b32.xlu0 %v398, 96
      %v431 = vpop.permute.xlu0 %430
      %432 = vrot.lane.b32.xlu0 %v425, 96
      %v433 = vpop.permute.xlu0 %432
      %434 = vrot.lane.b32.xlu0 %v427, 96
      %v435 = vpop.permute.xlu0 %434
      %436 = vrot.lane.b32.xlu0 %v429, 96
      %v437 = vpop.permute.xlu0 %436
      %442 = vxpose.xlu0.b32.start [1/16] %v431, 128
      %443 = vxpose.xlu0.b32.cont [2/16] 0.0, 128
      %444 = vxpose.xlu0.b32.cont [3/16] 0.0, 128
      %445 = vxpose.xlu0.b32.cont [4/16] 0.0, 128
      %446 = vxpose.xlu0.b32.cont [5/16] 0.0, 128
      %447 = vxpose.xlu0.b32.cont [6/16] 0.0, 128
      %448 = vxpose.xlu0.b32.cont [7/16] 0.0, 128
      %449 = vxpose.xlu0.b32.cont [8/16] 0.0, 128
      %450 = vxpose.xlu0.b32.cont [9/16] 0.0, 128
      %451 = vxpose.xlu0.b32.cont [10/16] 0.0, 128
      %452 = vxpose.xlu0.b32.cont [11/16] 0.0, 128
      %453 = vxpose.xlu0.b32.cont [12/16] 0.0, 128
      %454 = vxpose.xlu0.b32.cont [13/16] 0.0, 128
      %455 = vxpose.xlu0.b32.cont [14/16] 0.0, 128
      %456 = vxpose.xlu0.b32.cont [15/16] 0.0, 128
      %457 = vxpose.xlu0.b32.end [16/16] 0.0, 128
      %v458 = vpop.trf.xlu0
      %v459 = vpop.trf.xlu0
      %v460 = vpop.trf.xlu0
      %v461 = vpop.trf.xlu0
      %v462 = vpop.trf.xlu0
      %v463 = vpop.trf.xlu0
      %v464 = vpop.trf.xlu0
      %v465 = vpop.trf.xlu0
      %v466 = vpop.trf.xlu0
      %v467 = vpop.trf.xlu0
      %v468 = vpop.trf.xlu0
      %v469 = vpop.trf.xlu0
      %v470 = vpop.trf.xlu0
      %v471 = vpop.trf.xlu0
      %v472 = vpop.trf.xlu0
      %v473 = vpop.trf.xlu0
      %474 = vxpose.xlu0.b32.start [1/16] %v433, 128
      %475 = vxpose.xlu0.b32.cont [2/16] 0.0, 128
      %476 = vxpose.xlu0.b32.cont [3/16] 0.0, 128
      %477 = vxpose.xlu0.b32.cont [4/16] 0.0, 128
      %478 = vxpose.xlu0.b32.cont [5/16] 0.0, 128
      %479 = vxpose.xlu0.b32.cont [6/16] 0.0, 128
      %480 = vxpose.xlu0.b32.cont [7/16] 0.0, 128
      %481 = vxpose.xlu0.b32.cont [8/16] 0.0, 128
      %482 = vxpose.xlu0.b32.cont [9/16] 0.0, 128
      %483 = vxpose.xlu0.b32.cont [10/16] 0.0, 128
      %484 = vxpose.xlu0.b32.cont [11/16] 0.0, 128
      %485 = vxpose.xlu0.b32.cont [12/16] 0.0, 128
      %486 = vxpose.xlu0.b32.cont [13/16] 0.0, 128
      %487 = vxpose.xlu0.b32.cont [14/16] 0.0, 128
      %488 = vxpose.xlu0.b32.cont [15/16] 0.0, 128
      %489 = vxpose.xlu0.b32.end [16/16] 0.0, 128
      %v490 = vpop.trf.xlu0
      %v491 = vpop.trf.xlu0
      %v492 = vpop.trf.xlu0
      %v493 = vpop.trf.xlu0
      %v494 = vpop.trf.xlu0
      %v495 = vpop.trf.xlu0
      %v496 = vpop.trf.xlu0
      %v497 = vpop.trf.xlu0
      %v498 = vpop.trf.xlu0
      %v499 = vpop.trf.xlu0
      %v500 = vpop.trf.xlu0
      %v501 = vpop.trf.xlu0
      %v502 = vpop.trf.xlu0
      %v503 = vpop.trf.xlu0
      %v504 = vpop.trf.xlu0
      %v505 = vpop.trf.xlu0
      %506 = vxpose.xlu0.b32.start [1/16] %v435, 128
      %507 = vxpose.xlu0.b32.cont [2/16] 0.0, 128
      %508 = vxpose.xlu0.b32.cont [3/16] 0.0, 128
      %509 = vxpose.xlu0.b32.cont [4/16] 0.0, 128
      %510 = vxpose.xlu0.b32.cont [5/16] 0.0, 128
      %511 = vxpose.xlu0.b32.cont [6/16] 0.0, 128
      %512 = vxpose.xlu0.b32.cont [7/16] 0.0, 128
      %513 = vxpose.xlu0.b32.cont [8/16] 0.0, 128
      %514 = vxpose.xlu0.b32.cont [9/16] 0.0, 128
      %515 = vxpose.xlu0.b32.cont [10/16] 0.0, 128
      %516 = vxpose.xlu0.b32.cont [11/16] 0.0, 128
      %517 = vxpose.xlu0.b32.cont [12/16] 0.0, 128
      %518 = vxpose.xlu0.b32.cont [13/16] 0.0, 128
      %519 = vxpose.xlu0.b32.cont [14/16] 0.0, 128
      %520 = vxpose.xlu0.b32.cont [15/16] 0.0, 128
      %521 = vxpose.xlu0.b32.end [16/16] 0.0, 128
      %v522 = vpop.trf.xlu0
      %v523 = vpop.trf.xlu0
      %v524 = vpop.trf.xlu0
      %v525 = vpop.trf.xlu0
      %v526 = vpop.trf.xlu0
      %v527 = vpop.trf.xlu0
      %v528 = vpop.trf.xlu0
      %v529 = vpop.trf.xlu0
      %v530 = vpop.trf.xlu0
      %v531 = vpop.trf.xlu0
      %v532 = vpop.trf.xlu0
      %v533 = vpop.trf.xlu0
      %v534 = vpop.trf.xlu0
      %v535 = vpop.trf.xlu0
      %v536 = vpop.trf.xlu0
      %v537 = vpop.trf.xlu0
      %538 = vxpose.xlu0.b32.start [1/16] %v437, 128
      %539 = vxpose.xlu0.b32.cont [2/16] 0.0, 128
      %540 = vxpose.xlu0.b32.cont [3/16] 0.0, 128
      %541 = vxpose.xlu0.b32.cont [4/16] 0.0, 128
      %542 = vxpose.xlu0.b32.cont [5/16] 0.0, 128
      %543 = vxpose.xlu0.b32.cont [6/16] 0.0, 128
      %544 = vxpose.xlu0.b32.cont [7/16] 0.0, 128
      %545 = vxpose.xlu0.b32.cont [8/16] 0.0, 128
      %546 = vxpose.xlu0.b32.cont [9/16] 0.0, 128
      %547 = vxpose.xlu0.b32.cont [10/16] 0.0, 128
      %548 = vxpose.xlu0.b32.cont [11/16] 0.0, 128
      %549 = vxpose.xlu0.b32.cont [12/16] 0.0, 128
      %550 = vxpose.xlu0.b32.cont [13/16] 0.0, 128
      %551 = vxpose.xlu0.b32.cont [14/16] 0.0, 128
      %552 = vxpose.xlu0.b32.cont [15/16] 0.0, 128
      %553 = vxpose.xlu0.b32.end [16/16] 0.0, 128
      %v554 = vpop.trf.xlu0
      %v555 = vpop.trf.xlu0
      %v556 = vpop.trf.xlu0
      %v557 = vpop.trf.xlu0
      %v558 = vpop.trf.xlu0
      %v559 = vpop.trf.xlu0
      %v560 = vpop.trf.xlu0
      %v561 = vpop.trf.xlu0
      %v562 = vpop.trf.xlu0
      %v563 = vpop.trf.xlu0
      %v564 = vpop.trf.xlu0
      %v565 = vpop.trf.xlu0
      %v566 = vpop.trf.xlu0
      %v567 = vpop.trf.xlu0
      %v568 = vpop.trf.xlu0
      %v569 = vpop.trf.xlu0
      %vm570 = vcmask 64512
      %v571 = vsel %vm570, %v398, 0
      %573 = vmatprep.subr.mxu0 0.0
      %574 = vmatpush1.msra.mxu0 %v458
      %575 = vmatprep.subr.mxu0 0.0
      %576 = vmatpush1.msra.mxu0 0.0
      %577 = vmatprep.subr.mxu0 0.0
      %578 = vmatpush1.msra.mxu0 0.0
      %579 = vmatprep.subr.mxu0 0.0
      %580 = vmatpush1.msra.mxu0 0.0
      %581 = vmatprep.subr.mxu0 0.0
      %582 = vmatpush1.msra.mxu0 0.0
      %583 = vmatprep.subr.mxu0 0.0
      %584 = vmatpush1.msra.mxu0 0.0
      %585 = vmatprep.subr.mxu0 0.0
      %586 = vmatpush1.msra.mxu0 0.0
      %587 = vmatprep.subr.mxu0 0.0
      %588 = vmatpush1.msra.mxu0 0.0
      %589 = vmatprep.subr.mxu0 0.0
      %590 = vmatpush1.msra.mxu0 0.0
      %591 = vmatprep.subr.mxu0 0.0
      %592 = vmatpush1.msra.mxu0 0.0
      %593 = vmatprep.subr.mxu0 0.0
      %594 = vmatpush1.msra.mxu0 0.0
      %595 = vmatprep.subr.mxu0 0.0
      %596 = vmatpush1.msra.mxu0 0.0
      %597 = vmatprep.subr.mxu0 0.0
      %598 = vmatpush1.msra.mxu0 0.0
      %599 = vmatprep.subr.mxu0 0.0
      %600 = vmatpush1.msra.mxu0 0.0
      %601 = vmatprep.subr.mxu0 0.0
      %602 = vmatpush1.msra.mxu0 0.0
      %603 = vmatprep.subr.mxu0 0.0
      %604 = vmatpush1.msra.mxu0 0.0
      %605 = vmatprep.subr.mxu0 0.0
      %606 = vmatpush1.msra.mxu0 0.0
      %607 = vmatprep.subr.mxu0 0.0
      %608 = vmatpush1.msra.mxu0 0.0
      %609 = vmatprep.subr.mxu0 0.0
      %610 = vmatpush1.msra.mxu0 0.0
      %611 = vmatprep.subr.mxu0 0.0
      %612 = vmatpush1.msra.mxu0 0.0
      %613 = vmatprep.subr.mxu0 0.0
      %614 = vmatpush1.msra.mxu0 0.0
      %615 = vmatprep.subr.mxu0 0.0
      %616 = vmatpush1.msra.mxu0 0.0
      %617 = vmatprep.subr.mxu0 0.0
      %618 = vmatpush1.msra.mxu0 0.0
      %619 = vmatprep.subr.mxu0 0.0
      %620 = vmatpush1.msra.mxu0 0.0
      %621 = vmatprep.subr.mxu0 0.0
      %622 = vmatpush1.msra.mxu0 0.0
      %623 = vmatprep.subr.mxu0 0.0
      %624 = vmatpush1.msra.mxu0 0.0
      %625 = vmatprep.subr.mxu0 0.0
      %626 = vmatpush1.msra.mxu0 0.0
      %627 = vmatprep.subr.mxu0 0.0
      %628 = vmatpush1.msra.mxu0 0.0
      %629 = vmatprep.subr.mxu0 0.0
      %630 = vmatpush1.msra.mxu0 0.0
      %631 = vmatprep.subr.mxu0 0.0
      %632 = vmatpush1.msra.mxu0 0.0
      %633 = vmatprep.subr.mxu0 0.0
      %634 = vmatpush1.msra.mxu0 0.0
      %635 = vmatprep.subr.mxu0 0.0
      %636 = vmatpush1.msra.mxu0 0.0
      %637 = vmatprep.mubr.f32.mxu0 0.0
      %638 = vmatmul.mubr.f32.gmra.mrb[0].mxu0 %v571
      %v639 = vpop.f32.mrb[0].mxu0
      %v640 = vadd.f32 0.0, %v639
      %v641 = vpop.f32.mrb[0].mxu0
      %642 = vdwg.mxu0
      %v643 = vsel %vm570, %v425, 0
      %645 = vmatprep.subr.mxu0 0.0
      %646 = vmatpush1.msra.mxu0 %v490
      %647 = vmatprep.subr.mxu0 0.0
      %648 = vmatpush1.msra.mxu0 0.0
      %649 = vmatprep.subr.mxu0 0.0
      %650 = vmatpush1.msra.mxu0 0.0
      %651 = vmatprep.subr.mxu0 0.0
      %652 = vmatpush1.msra.mxu0 0.0
      %653 = vmatprep.subr.mxu0 0.0
      %654 = vmatpush1.msra.mxu0 0.0
      %655 = vmatprep.subr.mxu0 0.0
      %656 = vmatpush1.msra.mxu0 0.0
      %657 = vmatprep.subr.mxu0 0.0
      %658 = vmatpush1.msra.mxu0 0.0
      %659 = vmatprep.subr.mxu0 0.0
      %660 = vmatpush1.msra.mxu0 0.0
      %661 = vmatprep.subr.mxu0 0.0
      %662 = vmatpush1.msra.mxu0 0.0
      %663 = vmatprep.subr.mxu0 0.0
      %664 = vmatpush1.msra.mxu0 0.0
      %665 = vmatprep.subr.mxu0 0.0
      %666 = vmatpush1.msra.mxu0 0.0
      %667 = vmatprep.subr.mxu0 0.0
      %668 = vmatpush1.msra.mxu0 0.0
      %669 = vmatprep.subr.mxu0 0.0
      %670 = vmatpush1.msra.mxu0 0.0
      %671 = vmatprep.subr.mxu0 0.0
      %672 = vmatpush1.msra.mxu0 0.0
      %673 = vmatprep.subr.mxu0 0.0
      %674 = vmatpush1.msra.mxu0 0.0
      %675 = vmatprep.subr.mxu0 0.0
      %676 = vmatpush1.msra.mxu0 0.0
      %677 = vmatprep.subr.mxu0 0.0
      %678 = vmatpush1.msra.mxu0 0.0
      %679 = vmatprep.subr.mxu0 0.0
      %680 = vmatpush1.msra.mxu0 0.0
      %681 = vmatprep.subr.mxu0 0.0
      %682 = vmatpush1.msra.mxu0 0.0
      %683 = vmatprep.subr.mxu0 0.0
      %684 = vmatpush1.msra.mxu0 0.0
      %685 = vmatprep.subr.mxu0 0.0
      %686 = vmatpush1.msra.mxu0 0.0
      %687 = vmatprep.subr.mxu0 0.0
      %688 = vmatpush1.msra.mxu0 0.0
      %689 = vmatprep.subr.mxu0 0.0
      %690 = vmatpush1.msra.mxu0 0.0
      %691 = vmatprep.subr.mxu0 0.0
      %692 = vmatpush1.msra.mxu0 0.0
      %693 = vmatprep.subr.mxu0 0.0
      %694 = vmatpush1.msra.mxu0 0.0
      %695 = vmatprep.subr.mxu0 0.0
      %696 = vmatpush1.msra.mxu0 0.0
      %697 = vmatprep.subr.mxu0 0.0
      %698 = vmatpush1.msra.mxu0 0.0
      %699 = vmatprep.subr.mxu0 0.0
      %700 = vmatpush1.msra.mxu0 0.0
      %701 = vmatprep.subr.mxu0 0.0
      %702 = vmatpush1.msra.mxu0 0.0
      %703 = vmatprep.subr.mxu0 0.0
      %704 = vmatpush1.msra.mxu0 0.0
      %705 = vmatprep.subr.mxu0 0.0
      %706 = vmatpush1.msra.mxu0 0.0
      %707 = vmatprep.subr.mxu0 0.0
      %708 = vmatpush1.msra.mxu0 0.0
      %709 = vmatprep.mubr.f32.mxu0 0.0
      %710 = vmatmul.mubr.f32.gmra.mrb[0].mxu0 %v643
      %v711 = vpop.f32.mrb[0].mxu0
      %v712 = vadd.f32 0.0, %v711
      %v713 = vpop.f32.mrb[0].mxu0
      %714 = vdwg.mxu0
      %v715 = vsel %vm570, %v427, 0
      %717 = vmatprep.subr.mxu0 0.0
      %718 = vmatpush1.msra.mxu0 %v522
      %719 = vmatprep.subr.mxu0 0.0
      %720 = vmatpush1.msra.mxu0 0.0
      %721 = vmatprep.subr.mxu0 0.0
      %722 = vmatpush1.msra.mxu0 0.0
      %723 = vmatprep.subr.mxu0 0.0
      %724 = vmatpush1.msra.mxu0 0.0
      %725 = vmatprep.subr.mxu0 0.0
      %726 = vmatpush1.msra.mxu0 0.0
      %727 = vmatprep.subr.mxu0 0.0
      %728 = vmatpush1.msra.mxu0 0.0
      %729 = vmatprep.subr.mxu0 0.0
      %730 = vmatpush1.msra.mxu0 0.0
      %731 = vmatprep.subr.mxu0 0.0
      %732 = vmatpush1.msra.mxu0 0.0
      %733 = vmatprep.subr.mxu0 0.0
      %734 = vmatpush1.msra.mxu0 0.0
      %735 = vmatprep.subr.mxu0 0.0
      %736 = vmatpush1.msra.mxu0 0.0
      %737 = vmatprep.subr.mxu0 0.0
      %738 = vmatpush1.msra.mxu0 0.0
      %739 = vmatprep.subr.mxu0 0.0
      %740 = vmatpush1.msra.mxu0 0.0
      %741 = vmatprep.subr.mxu0 0.0
      %742 = vmatpush1.msra.mxu0 0.0
      %743 = vmatprep.subr.mxu0 0.0
      %744 = vmatpush1.msra.mxu0 0.0
      %745 = vmatprep.subr.mxu0 0.0
      %746 = vmatpush1.msra.mxu0 0.0
      %747 = vmatprep.subr.mxu0 0.0
      %748 = vmatpush1.msra.mxu0 0.0
      %749 = vmatprep.subr.mxu0 0.0
      %750 = vmatpush1.msra.mxu0 0.0
      %751 = vmatprep.subr.mxu0 0.0
      %752 = vmatpush1.msra.mxu0 0.0
      %753 = vmatprep.subr.mxu0 0.0
      %754 = vmatpush1.msra.mxu0 0.0
      %755 = vmatprep.subr.mxu0 0.0
      %756 = vmatpush1.msra.mxu0 0.0
      %757 = vmatprep.subr.mxu0 0.0
      %758 = vmatpush1.msra.mxu0 0.0
      %759 = vmatprep.subr.mxu0 0.0
      %760 = vmatpush1.msra.mxu0 0.0
      %761 = vmatprep.subr.mxu0 0.0
      %762 = vmatpush1.msra.mxu0 0.0
      %763 = vmatprep.subr.mxu0 0.0
      %764 = vmatpush1.msra.mxu0 0.0
      %765 = vmatprep.subr.mxu0 0.0
      %766 = vmatpush1.msra.mxu0 0.0
      %767 = vmatprep.subr.mxu0 0.0
      %768 = vmatpush1.msra.mxu0 0.0
      %769 = vmatprep.subr.mxu0 0.0
      %770 = vmatpush1.msra.mxu0 0.0
      %771 = vmatprep.subr.mxu0 0.0
      %772 = vmatpush1.msra.mxu0 0.0
      %773 = vmatprep.subr.mxu0 0.0
      %774 = vmatpush1.msra.mxu0 0.0
      %775 = vmatprep.subr.mxu0 0.0
      %776 = vmatpush1.msra.mxu0 0.0
      %777 = vmatprep.subr.mxu0 0.0
      %778 = vmatpush1.msra.mxu0 0.0
      %779 = vmatprep.subr.mxu0 0.0
      %780 = vmatpush1.msra.mxu0 0.0
      %781 = vmatprep.mubr.f32.mxu0 0.0
      %782 = vmatmul.mubr.f32.gmra.mrb[0].mxu0 %v715
      %v783 = vpop.f32.mrb[0].mxu0
      %v784 = vadd.f32 0.0, %v783
      %v785 = vpop.f32.mrb[0].mxu0
      %786 = vdwg.mxu0
      %v787 = vsel %vm570, %v429, 0
      %789 = vmatprep.subr.mxu0 0.0
      %790 = vmatpush1.msra.mxu0 %v554
      %791 = vmatprep.subr.mxu0 0.0
      %792 = vmatpush1.msra.mxu0 0.0
      %793 = vmatprep.subr.mxu0 0.0
      %794 = vmatpush1.msra.mxu0 0.0
      %795 = vmatprep.subr.mxu0 0.0
      %796 = vmatpush1.msra.mxu0 0.0
      %797 = vmatprep.subr.mxu0 0.0
      %798 = vmatpush1.msra.mxu0 0.0
      %799 = vmatprep.subr.mxu0 0.0
      %800 = vmatpush1.msra.mxu0 0.0
      %801 = vmatprep.subr.mxu0 0.0
      %802 = vmatpush1.msra.mxu0 0.0
      %803 = vmatprep.subr.mxu0 0.0
      %804 = vmatpush1.msra.mxu0 0.0
      %805 = vmatprep.subr.mxu0 0.0
      %806 = vmatpush1.msra.mxu0 0.0
      %807 = vmatprep.subr.mxu0 0.0
      %808 = vmatpush1.msra.mxu0 0.0
      %809 = vmatprep.subr.mxu0 0.0
      %810 = vmatpush1.msra.mxu0 0.0
      %811 = vmatprep.subr.mxu0 0.0
      %812 = vmatpush1.msra.mxu0 0.0
      %813 = vmatprep.subr.mxu0 0.0
      %814 = vmatpush1.msra.mxu0 0.0
      %815 = vmatprep.subr.mxu0 0.0
      %816 = vmatpush1.msra.mxu0 0.0
      %817 = vmatprep.subr.mxu0 0.0
      %818 = vmatpush1.msra.mxu0 0.0
      %819 = vmatprep.subr.mxu0 0.0
      %820 = vmatpush1.msra.mxu0 0.0
      %821 = vmatprep.subr.mxu0 0.0
      %822 = vmatpush1.msra.mxu0 0.0
      %823 = vmatprep.subr.mxu0 0.0
      %824 = vmatpush1.msra.mxu0 0.0
      %825 = vmatprep.subr.mxu0 0.0
      %826 = vmatpush1.msra.mxu0 0.0
      %827 = vmatprep.subr.mxu0 0.0
      %828 = vmatpush1.msra.mxu0 0.0
      %829 = vmatprep.subr.mxu0 0.0
      %830 = vmatpush1.msra.mxu0 0.0
      %831 = vmatprep.subr.mxu0 0.0
      %832 = vmatpush1.msra.mxu0 0.0
      %833 = vmatprep.subr.mxu0 0.0
      %834 = vmatpush1.msra.mxu0 0.0
      %835 = vmatprep.subr.mxu0 0.0
      %836 = vmatpush1.msra.mxu0 0.0
      %837 = vmatprep.subr.mxu0 0.0
      %838 = vmatpush1.msra.mxu0 0.0
      %839 = vmatprep.subr.mxu0 0.0
      %840 = vmatpush1.msra.mxu0 0.0
      %841 = vmatprep.subr.mxu0 0.0
      %842 = vmatpush1.msra.mxu0 0.0
      %843 = vmatprep.subr.mxu0 0.0
      %844 = vmatpush1.msra.mxu0 0.0
      %845 = vmatprep.subr.mxu0 0.0
      %846 = vmatpush1.msra.mxu0 0.0
      %847 = vmatprep.subr.mxu0 0.0
      %848 = vmatpush1.msra.mxu0 0.0
      %849 = vmatprep.subr.mxu0 0.0
      %850 = vmatpush1.msra.mxu0 0.0
      %851 = vmatprep.subr.mxu0 0.0
      %852 = vmatpush1.msra.mxu0 0.0
      %853 = vmatprep.mubr.f32.mxu0 0.0
      %854 = vmatmul.mubr.f32.gmra.mrb[0].mxu0 %v787
      %v855 = vpop.f32.mrb[0].mxu0
      %v856 = vadd.f32 0.0, %v855
      %v857 = vpop.f32.mrb[0].mxu0
      %858 = vdwg.mxu0
      %v859 = vmul.f32 %v640, 0.35355338
      %v860 = vmul.f32 %v712, 0.35355338
      %v861 = vmul.f32 %v784, 0.35355338
      %v862 = vmul.f32 %v856, 0.35355338
      %v863 = vadd.f32 %v859, %v415
      %v864 = vadd.f32 %v860, %v415
      %v865 = vadd.f32 %v861, %v415
      %v866 = vadd.f32 %v862, %v415
      %v867 = vsel %vm570, %v863, -inf
      %868 = vmax.xlane.f32.xlu0 %v867
      %v869 = vpop.xlane.xlu0 %868
      %v870 = vsel %vm570, %v864, -inf
      %871 = vmax.xlane.f32.xlu0 %v870
      %v872 = vpop.xlane.xlu0 %871
      %v873 = vsel %vm570, %v865, -inf
      %874 = vmax.xlane.f32.xlu0 %v873
      %v875 = vpop.xlane.xlu0 %874
      %v876 = vsel %vm570, %v866, -inf
      %877 = vmax.xlane.f32.xlu0 %v876
      %v878 = vpop.xlane.xlu0 %877
      %v879 = vsub.f32 %v863, %v869
      %v880 = vsub.f32 %v864, %v872
      %v881 = vsub.f32 %v865, %v875
      %v882 = vsub.f32 %v866, %v878
      %v883 = vmul.f32 %v879, 1.442695
      %v884 = vpow.pop %v883
      %v885 = vmul.f32 %v880, 1.442695
      %v886 = vpow.pop %v885
      %v887 = vmul.f32 %v881, 1.442695
      %v888 = vpow.pop %v887
      %v889 = vmul.f32 %v882, 1.442695
      %v890 = vpow.pop %v889
      %v891 = vsel %vm570, %v884, 0.0
      %892 = vadd.xlane.f32.xlu0 %v891
      %v893 = vpop.xlane.xlu0 %892
      %v894 = vsel %vm570, %v886, 0.0
      %895 = vadd.xlane.f32.xlu0 %v894
      %v896 = vpop.xlane.xlu0 %895
      %v897 = vsel %vm570, %v888, 0.0
      %898 = vadd.xlane.f32.xlu0 %v897
      %v899 = vpop.xlane.xlu0 %898
      %v900 = vsel %vm570, %v890, 0.0
      %901 = vadd.xlane.f32.xlu0 %v900
      %v902 = vpop.xlane.xlu0 %901
      %v903 = vrcp.pop %v893
      %v904 = vrcp.pop %v896
      %v905 = vrcp.pop %v899
      %v906 = vrcp.pop %v902
      %v907 = vmul.f32 %v884, %v903
      %v908 = vmul.f32 %v886, %v904
      %v909 = vmul.f32 %v888, %v905
      %v910 = vmul.f32 %v890, %v906
      %911 = vrot.lane.b32.xlu0 %v398, 64
      %v912 = vpop.permute.xlu0 %911
      %913 = vrot.lane.b32.xlu0 %v425, 64
      %v914 = vpop.permute.xlu0 %913
      %915 = vrot.lane.b32.xlu0 %v427, 64
      %v916 = vpop.permute.xlu0 %915
      %917 = vrot.lane.b32.xlu0 %v429, 64
      %v918 = vpop.permute.xlu0 %917
      %923 = vxpose.xlu0.b32.start [1/16] %v912, 128
      %924 = vxpose.xlu0.b32.cont [2/16] 0.0, 128
      %925 = vxpose.xlu0.b32.cont [3/16] 0.0, 128
      %926 = vxpose.xlu0.b32.cont [4/16] 0.0, 128
      %927 = vxpose.xlu0.b32.cont [5/16] 0.0, 128
      %928 = vxpose.xlu0.b32.cont [6/16] 0.0, 128
      %929 = vxpose.xlu0.b32.cont [7/16] 0.0, 128
      %930 = vxpose.xlu0.b32.cont [8/16] 0.0, 128
      %931 = vxpose.xlu0.b32.cont [9/16] 0.0, 128
      %932 = vxpose.xlu0.b32.cont [10/16] 0.0, 128
      %933 = vxpose.xlu0.b32.cont [11/16] 0.0, 128
      %934 = vxpose.xlu0.b32.cont [12/16] 0.0, 128
      %935 = vxpose.xlu0.b32.cont [13/16] 0.0, 128
      %936 = vxpose.xlu0.b32.cont [14/16] 0.0, 128
      %937 = vxpose.xlu0.b32.cont [15/16] 0.0, 128
      %938 = vxpose.xlu0.b32.end [16/16] 0.0, 128
      %v939 = vpop.trf.xlu0
      %v940 = vpop.trf.xlu0
      %v941 = vpop.trf.xlu0
      %v942 = vpop.trf.xlu0
      %v943 = vpop.trf.xlu0
      %v944 = vpop.trf.xlu0
      %v945 = vpop.trf.xlu0
      %v946 = vpop.trf.xlu0
      %v947 = vpop.trf.xlu0
      %v948 = vpop.trf.xlu0
      %v949 = vpop.trf.xlu0
      %v950 = vpop.trf.xlu0
      %v951 = vpop.trf.xlu0
      %v952 = vpop.trf.xlu0
      %v953 = vpop.trf.xlu0
      %v954 = vpop.trf.xlu0
      %955 = vxpose.xlu0.b32.start [1/16] %v914, 128
      %956 = vxpose.xlu0.b32.cont [2/16] 0.0, 128
      %957 = vxpose.xlu0.b32.cont [3/16] 0.0, 128
      %958 = vxpose.xlu0.b32.cont [4/16] 0.0, 128
      %959 = vxpose.xlu0.b32.cont [5/16] 0.0, 128
      %960 = vxpose.xlu0.b32.cont [6/16] 0.0, 128
      %961 = vxpose.xlu0.b32.cont [7/16] 0.0, 128
      %962 = vxpose.xlu0.b32.cont [8/16] 0.0, 128
      %963 = vxpose.xlu0.b32.cont [9/16] 0.0, 128
      %964 = vxpose.xlu0.b32.cont [10/16] 0.0, 128
      %965 = vxpose.xlu0.b32.cont [11/16] 0.0, 128
      %966 = vxpose.xlu0.b32.cont [12/16] 0.0, 128
      %967 = vxpose.xlu0.b32.cont [13/16] 0.0, 128
      %968 = vxpose.xlu0.b32.cont [14/16] 0.0, 128
      %969 = vxpose.xlu0.b32.cont [15/16] 0.0, 128
      %970 = vxpose.xlu0.b32.end [16/16] 0.0, 128
      %v971 = vpop.trf.xlu0
      %v972 = vpop.trf.xlu0
      %v973 = vpop.trf.xlu0
      %v974 = vpop.trf.xlu0
      %v975 = vpop.trf.xlu0
      %v976 = vpop.trf.xlu0
      %v977 = vpop.trf.xlu0
      %v978 = vpop.trf.xlu0
      %v979 = vpop.trf.xlu0
      %v980 = vpop.trf.xlu0
      %v981 = vpop.trf.xlu0
      %v982 = vpop.trf.xlu0
      %v983 = vpop.trf.xlu0
      %v984 = vpop.trf.xlu0
      %v985 = vpop.trf.xlu0
      %v986 = vpop.trf.xlu0
      %987 = vxpose.xlu0.b32.start [1/16] %v916, 128
      %988 = vxpose.xlu0.b32.cont [2/16] 0.0, 128
      %989 = vxpose.xlu0.b32.cont [3/16] 0.0, 128
      %990 = vxpose.xlu0.b32.cont [4/16] 0.0, 128
      %991 = vxpose.xlu0.b32.cont [5/16] 0.0, 128
      %992 = vxpose.xlu0.b32.cont [6/16] 0.0, 128
      %993 = vxpose.xlu0.b32.cont [7/16] 0.0, 128
      %994 = vxpose.xlu0.b32.cont [8/16] 0.0, 128
      %995 = vxpose.xlu0.b32.cont [9/16] 0.0, 128
      %996 = vxpose.xlu0.b32.cont [10/16] 0.0, 128
      %997 = vxpose.xlu0.b32.cont [11/16] 0.0, 128
      %998 = vxpose.xlu0.b32.cont [12/16] 0.0, 128
      %999 = vxpose.xlu0.b32.cont [13/16] 0.0, 128
      %1000 = vxpose.xlu0.b32.cont [14/16] 0.0, 128
      %1001 = vxpose.xlu0.b32.cont [15/16] 0.0, 128
      %1002 = vxpose.xlu0.b32.end [16/16] 0.0, 128
      %v1003 = vpop.trf.xlu0
      %v1004 = vpop.trf.xlu0
      %v1005 = vpop.trf.xlu0
      %v1006 = vpop.trf.xlu0
      %v1007 = vpop.trf.xlu0
      %v1008 = vpop.trf.xlu0
      %v1009 = vpop.trf.xlu0
      %v1010 = vpop.trf.xlu0
      %v1011 = vpop.trf.xlu0
      %v1012 = vpop.trf.xlu0
      %v1013 = vpop.trf.xlu0
      %v1014 = vpop.trf.xlu0
      %v1015 = vpop.trf.xlu0
      %v1016 = vpop.trf.xlu0
      %v1017 = vpop.trf.xlu0
      %v1018 = vpop.trf.xlu0
      %1019 = vxpose.xlu0.b32.start [1/16] %v918, 128
      %1020 = vxpose.xlu0.b32.cont [2/16] 0.0, 128
      %1021 = vxpose.xlu0.b32.cont [3/16] 0.0, 128
      %1022 = vxpose.xlu0.b32.cont [4/16] 0.0, 128
      %1023 = vxpose.xlu0.b32.cont [5/16] 0.0, 128
      %1024 = vxpose.xlu0.b32.cont [6/16] 0.0, 128
      %1025 = vxpose.xlu0.b32.cont [7/16] 0.0, 128
      %1026 = vxpose.xlu0.b32.cont [8/16] 0.0, 128
      %1027 = vxpose.xlu0.b32.cont [9/16] 0.0, 128
      %1028 = vxpose.xlu0.b32.cont [10/16] 0.0, 128
      %1029 = vxpose.xlu0.b32.cont [11/16] 0.0, 128
      %1030 = vxpose.xlu0.b32.cont [12/16] 0.0, 128
      %1031 = vxpose.xlu0.b32.cont [13/16] 0.0, 128
      %1032 = vxpose.xlu0.b32.cont [14/16] 0.0, 128
      %1033 = vxpose.xlu0.b32.cont [15/16] 0.0, 128
      %1034 = vxpose.xlu0.b32.end [16/16] 0.0, 128
      %v1035 = vpop.trf.xlu0
      %v1036 = vpop.trf.xlu0
      %v1037 = vpop.trf.xlu0
      %v1038 = vpop.trf.xlu0
      %v1039 = vpop.trf.xlu0
      %v1040 = vpop.trf.xlu0
      %v1041 = vpop.trf.xlu0
      %v1042 = vpop.trf.xlu0
      %v1043 = vpop.trf.xlu0
      %v1044 = vpop.trf.xlu0
      %v1045 = vpop.trf.xlu0
      %v1046 = vpop.trf.xlu0
      %v1047 = vpop.trf.xlu0
      %v1048 = vpop.trf.xlu0
      %v1049 = vpop.trf.xlu0
      %v1050 = vpop.trf.xlu0
      %v1052 = vsel %vm570, %v939, 0
      %v1055 = vsel %vm570, %v907, 0
      %1057 = vmatprep.subr.mxu0 0.0
      %1058 = vmatpush1.xpose.msra.mxu0 %v1055
      %1059 = vmatprep.subr.mxu0 0.0
      %1060 = vmatpush1.xpose.msra.mxu0 0.0
      %1061 = vmatprep.subr.mxu0 0.0
      %1062 = vmatpush1.xpose.msra.mxu0 0.0
      %1063 = vmatprep.subr.mxu0 0.0
      %1064 = vmatpush1.xpose.msra.mxu0 0.0
      %1065 = vmatprep.subr.mxu0 0.0
      %1066 = vmatpush1.xpose.msra.mxu0 0.0
      %1067 = vmatprep.subr.mxu0 0.0
      %1068 = vmatpush1.xpose.msra.mxu0 0.0
      %1069 = vmatprep.subr.mxu0 0.0
      %1070 = vmatpush1.xpose.msra.mxu0 0.0
      %1071 = vmatprep.subr.mxu0 0.0
      %1072 = vmatpush1.xpose.msra.mxu0 0.0
      %1073 = vmatprep.subr.mxu0 0.0
      %1074 = vmatpush1.xpose.msra.mxu0 0.0
      %1075 = vmatprep.subr.mxu0 0.0
      %1076 = vmatpush1.xpose.msra.mxu0 0.0
      %1077 = vmatprep.subr.mxu0 0.0
      %1078 = vmatpush1.xpose.msra.mxu0 0.0
      %1079 = vmatprep.subr.mxu0 0.0
      %1080 = vmatpush1.xpose.msra.mxu0 0.0
      %1081 = vmatprep.subr.mxu0 0.0
      %1082 = vmatpush1.xpose.msra.mxu0 0.0
      %1083 = vmatprep.subr.mxu0 0.0
      %1084 = vmatpush1.xpose.msra.mxu0 0.0
      %1085 = vmatprep.subr.mxu0 0.0
      %1086 = vmatpush1.xpose.msra.mxu0 0.0
      %1087 = vmatprep.subr.mxu0 0.0
      %1088 = vmatpush1.xpose.msra.mxu0 0.0
      %1089 = vmatprep.subr.mxu0 0.0
      %1090 = vmatpush1.xpose.msra.mxu0 0.0
      %1091 = vmatprep.subr.mxu0 0.0
      %1092 = vmatpush1.xpose.msra.mxu0 0.0
      %1093 = vmatprep.subr.mxu0 0.0
      %1094 = vmatpush1.xpose.msra.mxu0 0.0
      %1095 = vmatprep.subr.mxu0 0.0
      %1096 = vmatpush1.xpose.msra.mxu0 0.0
      %1097 = vmatprep.subr.mxu0 0.0
      %1098 = vmatpush1.xpose.msra.mxu0 0.0
      %1099 = vmatprep.subr.mxu0 0.0
      %1100 = vmatpush1.xpose.msra.mxu0 0.0
      %1101 = vmatprep.subr.mxu0 0.0
      %1102 = vmatpush1.xpose.msra.mxu0 0.0
      %1103 = vmatprep.subr.mxu0 0.0
      %1104 = vmatpush1.xpose.msra.mxu0 0.0
      %1105 = vmatprep.subr.mxu0 0.0
      %1106 = vmatpush1.xpose.msra.mxu0 0.0
      %1107 = vmatprep.subr.mxu0 0.0
      %1108 = vmatpush1.xpose.msra.mxu0 0.0
      %1109 = vmatprep.subr.mxu0 0.0
      %1110 = vmatpush1.xpose.msra.mxu0 0.0
      %1111 = vmatprep.subr.mxu0 0.0
      %1112 = vmatpush1.xpose.msra.mxu0 0.0
      %1113 = vmatprep.subr.mxu0 0.0
      %1114 = vmatpush1.xpose.msra.mxu0 0.0
      %1115 = vmatprep.subr.mxu0 0.0
      %1116 = vmatpush1.xpose.msra.mxu0 0.0
      %1117 = vmatprep.subr.mxu0 0.0
      %1118 = vmatpush1.xpose.msra.mxu0 0.0
      %1119 = vmatprep.subr.mxu0 0.0
      %1120 = vmatpush1.xpose.msra.mxu0 0.0
      %1121 = vmatprep.mubr.f32.mxu0 0.0
      %1122 = vmatmul.mubr.f32.gmra.mrb[0].mxu0 %v1052
      %v1123 = vpop.f32.mrb[0].mxu0
      %v1124 = vadd.f32 0.0, %v1123
      %v1125 = vpop.f32.mrb[0].mxu0
      %1126 = vdwg.mxu0
      %v1128 = vsel %vm570, %v971, 0
      %v1131 = vsel %vm570, %v908, 0
      %1133 = vmatprep.subr.mxu0 0.0
      %1134 = vmatpush1.xpose.msra.mxu0 %v1131
      %1135 = vmatprep.subr.mxu0 0.0
      %1136 = vmatpush1.xpose.msra.mxu0 0.0
      %1137 = vmatprep.subr.mxu0 0.0
      %1138 = vmatpush1.xpose.msra.mxu0 0.0
      %1139 = vmatprep.subr.mxu0 0.0
      %1140 = vmatpush1.xpose.msra.mxu0 0.0
      %1141 = vmatprep.subr.mxu0 0.0
      %1142 = vmatpush1.xpose.msra.mxu0 0.0
      %1143 = vmatprep.subr.mxu0 0.0
      %1144 = vmatpush1.xpose.msra.mxu0 0.0
      %1145 = vmatprep.subr.mxu0 0.0
      %1146 = vmatpush1.xpose.msra.mxu0 0.0
      %1147 = vmatprep.subr.mxu0 0.0
      %1148 = vmatpush1.xpose.msra.mxu0 0.0
      %1149 = vmatprep.subr.mxu0 0.0
      %1150 = vmatpush1.xpose.msra.mxu0 0.0
      %1151 = vmatprep.subr.mxu0 0.0
      %1152 = vmatpush1.xpose.msra.mxu0 0.0
      %1153 = vmatprep.subr.mxu0 0.0
      %1154 = vmatpush1.xpose.msra.mxu0 0.0
      %1155 = vmatprep.subr.mxu0 0.0
      %1156 = vmatpush1.xpose.msra.mxu0 0.0
      %1157 = vmatprep.subr.mxu0 0.0
      %1158 = vmatpush1.xpose.msra.mxu0 0.0
      %1159 = vmatprep.subr.mxu0 0.0
      %1160 = vmatpush1.xpose.msra.mxu0 0.0
      %1161 = vmatprep.subr.mxu0 0.0
      %1162 = vmatpush1.xpose.msra.mxu0 0.0
      %1163 = vmatprep.subr.mxu0 0.0
      %1164 = vmatpush1.xpose.msra.mxu0 0.0
      %1165 = vmatprep.subr.mxu0 0.0
      %1166 = vmatpush1.xpose.msra.mxu0 0.0
      %1167 = vmatprep.subr.mxu0 0.0
      %1168 = vmatpush1.xpose.msra.mxu0 0.0
      %1169 = vmatprep.subr.mxu0 0.0
      %1170 = vmatpush1.xpose.msra.mxu0 0.0
      %1171 = vmatprep.subr.mxu0 0.0
      %1172 = vmatpush1.xpose.msra.mxu0 0.0
      %1173 = vmatprep.subr.mxu0 0.0
      %1174 = vmatpush1.xpose.msra.mxu0 0.0
      %1175 = vmatprep.subr.mxu0 0.0
      %1176 = vmatpush1.xpose.msra.mxu0 0.0
      %1177 = vmatprep.subr.mxu0 0.0
      %1178 = vmatpush1.xpose.msra.mxu0 0.0
      %1179 = vmatprep.subr.mxu0 0.0
      %1180 = vmatpush1.xpose.msra.mxu0 0.0
      %1181 = vmatprep.subr.mxu0 0.0
      %1182 = vmatpush1.xpose.msra.mxu0 0.0
      %1183 = vmatprep.subr.mxu0 0.0
      %1184 = vmatpush1.xpose.msra.mxu0 0.0
      %1185 = vmatprep.subr.mxu0 0.0
      %1186 = vmatpush1.xpose.msra.mxu0 0.0
      %1187 = vmatprep.subr.mxu0 0.0
      %1188 = vmatpush1.xpose.msra.mxu0 0.0
      %1189 = vmatprep.subr.mxu0 0.0
      %1190 = vmatpush1.xpose.msra.mxu0 0.0
      %1191 = vmatprep.subr.mxu0 0.0
      %1192 = vmatpush1.xpose.msra.mxu0 0.0
      %1193 = vmatprep.subr.mxu0 0.0
      %1194 = vmatpush1.xpose.msra.mxu0 0.0
      %1195 = vmatprep.subr.mxu0 0.0
      %1196 = vmatpush1.xpose.msra.mxu0 0.0
      %1197 = vmatprep.mubr.f32.mxu0 0.0
      %1198 = vmatmul.mubr.f32.gmra.mrb[0].mxu0 %v1128
      %v1199 = vpop.f32.mrb[0].mxu0
      %v1200 = vadd.f32 0.0, %v1199
      %v1201 = vpop.f32.mrb[0].mxu0
      %1202 = vdwg.mxu0
      %v1204 = vsel %vm570, %v1003, 0
      %v1207 = vsel %vm570, %v909, 0
      %1209 = vmatprep.subr.mxu0 0.0
      %1210 = vmatpush1.xpose.msra.mxu0 %v1207
      %1211 = vmatprep.subr.mxu0 0.0
      %1212 = vmatpush1.xpose.msra.mxu0 0.0
      %1213 = vmatprep.subr.mxu0 0.0
      %1214 = vmatpush1.xpose.msra.mxu0 0.0
      %1215 = vmatprep.subr.mxu0 0.0
      %1216 = vmatpush1.xpose.msra.mxu0 0.0
      %1217 = vmatprep.subr.mxu0 0.0
      %1218 = vmatpush1.xpose.msra.mxu0 0.0
      %1219 = vmatprep.subr.mxu0 0.0
      %1220 = vmatpush1.xpose.msra.mxu0 0.0
      %1221 = vmatprep.subr.mxu0 0.0
      %1222 = vmatpush1.xpose.msra.mxu0 0.0
      %1223 = vmatprep.subr.mxu0 0.0
      %1224 = vmatpush1.xpose.msra.mxu0 0.0
      %1225 = vmatprep.subr.mxu0 0.0
      %1226 = vmatpush1.xpose.msra.mxu0 0.0
      %1227 = vmatprep.subr.mxu0 0.0
      %1228 = vmatpush1.xpose.msra.mxu0 0.0
      %1229 = vmatprep.subr.mxu0 0.0
      %1230 = vmatpush1.xpose.msra.mxu0 0.0
      %1231 = vmatprep.subr.mxu0 0.0
      %1232 = vmatpush1.xpose.msra.mxu0 0.0
      %1233 = vmatprep.subr.mxu0 0.0
      %1234 = vmatpush1.xpose.msra.mxu0 0.0
      %1235 = vmatprep.subr.mxu0 0.0
      %1236 = vmatpush1.xpose.msra.mxu0 0.0
      %1237 = vmatprep.subr.mxu0 0.0
      %1238 = vmatpush1.xpose.msra.mxu0 0.0
      %1239 = vmatprep.subr.mxu0 0.0
      %1240 = vmatpush1.xpose.msra.mxu0 0.0
      %1241 = vmatprep.subr.mxu0 0.0
      %1242 = vmatpush1.xpose.msra.mxu0 0.0
      %1243 = vmatprep.subr.mxu0 0.0
      %1244 = vmatpush1.xpose.msra.mxu0 0.0
      %1245 = vmatprep.subr.mxu0 0.0
      %1246 = vmatpush1.xpose.msra.mxu0 0.0
      %1247 = vmatprep.subr.mxu0 0.0
      %1248 = vmatpush1.xpose.msra.mxu0 0.0
      %1249 = vmatprep.subr.mxu0 0.0
      %1250 = vmatpush1.xpose.msra.mxu0 0.0
      %1251 = vmatprep.subr.mxu0 0.0
      %1252 = vmatpush1.xpose.msra.mxu0 0.0
      %1253 = vmatprep.subr.mxu0 0.0
      %1254 = vmatpush1.xpose.msra.mxu0 0.0
      %1255 = vmatprep.subr.mxu0 0.0
      %1256 = vmatpush1.xpose.msra.mxu0 0.0
      %1257 = vmatprep.subr.mxu0 0.0
      %1258 = vmatpush1.xpose.msra.mxu0 0.0
      %1259 = vmatprep.subr.mxu0 0.0
      %1260 = vmatpush1.xpose.msra.mxu0 0.0
      %1261 = vmatprep.subr.mxu0 0.0
      %1262 = vmatpush1.xpose.msra.mxu0 0.0
      %1263 = vmatprep.subr.mxu0 0.0
      %1264 = vmatpush1.xpose.msra.mxu0 0.0
      %1265 = vmatprep.subr.mxu0 0.0
      %1266 = vmatpush1.xpose.msra.mxu0 0.0
      %1267 = vmatprep.subr.mxu0 0.0
      %1268 = vmatpush1.xpose.msra.mxu0 0.0
      %1269 = vmatprep.subr.mxu0 0.0
      %1270 = vmatpush1.xpose.msra.mxu0 0.0
      %1271 = vmatprep.subr.mxu0 0.0
      %1272 = vmatpush1.xpose.msra.mxu0 0.0
      %1273 = vmatprep.mubr.f32.mxu0 0.0
      %1274 = vmatmul.mubr.f32.gmra.mrb[0].mxu0 %v1204
      %v1275 = vpop.f32.mrb[0].mxu0
      %v1276 = vadd.f32 0.0, %v1275
      %v1277 = vpop.f32.mrb[0].mxu0
      %1278 = vdwg.mxu0
      %v1280 = vsel %vm570, %v1035, 0
      %v1283 = vsel %vm570, %v910, 0
      %1285 = vmatprep.subr.mxu0 0.0
      %1286 = vmatpush1.xpose.msra.mxu0 %v1283
      %1287 = vmatprep.subr.mxu0 0.0
      %1288 = vmatpush1.xpose.msra.mxu0 0.0
      %1289 = vmatprep.subr.mxu0 0.0
      %1290 = vmatpush1.xpose.msra.mxu0 0.0
      %1291 = vmatprep.subr.mxu0 0.0
      %1292 = vmatpush1.xpose.msra.mxu0 0.0
      %1293 = vmatprep.subr.mxu0 0.0
      %1294 = vmatpush1.xpose.msra.mxu0 0.0
      %1295 = vmatprep.subr.mxu0 0.0
      %1296 = vmatpush1.xpose.msra.mxu0 0.0
      %1297 = vmatprep.subr.mxu0 0.0
      %1298 = vmatpush1.xpose.msra.mxu0 0.0
      %1299 = vmatprep.subr.mxu0 0.0
      %1300 = vmatpush1.xpose.msra.mxu0 0.0
      %1301 = vmatprep.subr.mxu0 0.0
      %1302 = vmatpush1.xpose.msra.mxu0 0.0
      %1303 = vmatprep.subr.mxu0 0.0
      %1304 = vmatpush1.xpose.msra.mxu0 0.0
      %1305 = vmatprep.subr.mxu0 0.0
      %1306 = vmatpush1.xpose.msra.mxu0 0.0
      %1307 = vmatprep.subr.mxu0 0.0
      %1308 = vmatpush1.xpose.msra.mxu0 0.0
      %1309 = vmatprep.subr.mxu0 0.0
      %1310 = vmatpush1.xpose.msra.mxu0 0.0
      %1311 = vmatprep.subr.mxu0 0.0
      %1312 = vmatpush1.xpose.msra.mxu0 0.0
      %1313 = vmatprep.subr.mxu0 0.0
      %1314 = vmatpush1.xpose.msra.mxu0 0.0
      %1315 = vmatprep.subr.mxu0 0.0
      %1316 = vmatpush1.xpose.msra.mxu0 0.0
      %1317 = vmatprep.subr.mxu0 0.0
      %1318 = vmatpush1.xpose.msra.mxu0 0.0
      %1319 = vmatprep.subr.mxu0 0.0
      %1320 = vmatpush1.xpose.msra.mxu0 0.0
      %1321 = vmatprep.subr.mxu0 0.0
      %1322 = vmatpush1.xpose.msra.mxu0 0.0
      %1323 = vmatprep.subr.mxu0 0.0
      %1324 = vmatpush1.xpose.msra.mxu0 0.0
      %1325 = vmatprep.subr.mxu0 0.0
      %1326 = vmatpush1.xpose.msra.mxu0 0.0
      %1327 = vmatprep.subr.mxu0 0.0
      %1328 = vmatpush1.xpose.msra.mxu0 0.0
      %1329 = vmatprep.subr.mxu0 0.0
      %1330 = vmatpush1.xpose.msra.mxu0 0.0
      %1331 = vmatprep.subr.mxu0 0.0
      %1332 = vmatpush1.xpose.msra.mxu0 0.0
      %1333 = vmatprep.subr.mxu0 0.0
      %1334 = vmatpush1.xpose.msra.mxu0 0.0
      %1335 = vmatprep.subr.mxu0 0.0
      %1336 = vmatpush1.xpose.msra.mxu0 0.0
      %1337 = vmatprep.subr.mxu0 0.0
      %1338 = vmatpush1.xpose.msra.mxu0 0.0
      %1339 = vmatprep.subr.mxu0 0.0
      %1340 = vmatpush1.xpose.msra.mxu0 0.0
      %1341 = vmatprep.subr.mxu0 0.0
      %1342 = vmatpush1.xpose.msra.mxu0 0.0
      %1343 = vmatprep.subr.mxu0 0.0
      %1344 = vmatpush1.xpose.msra.mxu0 0.0
      %1345 = vmatprep.subr.mxu0 0.0
      %1346 = vmatpush1.xpose.msra.mxu0 0.0
      %1347 = vmatprep.subr.mxu0 0.0
      %1348 = vmatpush1.xpose.msra.mxu0 0.0
      %1349 = vmatprep.mubr.f32.mxu0 0.0
      %1350 = vmatmul.mubr.f32.gmra.mrb[0].mxu0 %v1280
      %v1351 = vpop.f32.mrb[0].mxu0
      %v1352 = vadd.f32 0.0, %v1351
      %v1353 = vpop.f32.mrb[0].mxu0
      %1354 = vdwg.mxu0
      %1355 = vxpose.xlu0.b32.start [1/16] %v1124, 128
      %1356 = vxpose.xlu0.b32.cont [2/16] 0.0, 128
      %1357 = vxpose.xlu0.b32.cont [3/16] 0.0, 128
      %1358 = vxpose.xlu0.b32.cont [4/16] 0.0, 128
      %1359 = vxpose.xlu0.b32.cont [5/16] 0.0, 128
      %1360 = vxpose.xlu0.b32.cont [6/16] 0.0, 128
      %1361 = vxpose.xlu0.b32.cont [7/16] 0.0, 128
      %1362 = vxpose.xlu0.b32.cont [8/16] 0.0, 128
      %1363 = vxpose.xlu0.b32.cont [9/16] 0.0, 128
      %1364 = vxpose.xlu0.b32.cont [10/16] 0.0, 128
      %1365 = vxpose.xlu0.b32.cont [11/16] 0.0, 128
      %1366 = vxpose.xlu0.b32.cont [12/16] 0.0, 128
      %1367 = vxpose.xlu0.b32.cont [13/16] 0.0, 128
      %1368 = vxpose.xlu0.b32.cont [14/16] 0.0, 128
      %1369 = vxpose.xlu0.b32.cont [15/16] 0.0, 128
      %1370 = vxpose.xlu0.b32.end [16/16] 0.0, 128
      %v1371 = vpop.trf.xlu0
      %v1372 = vpop.trf.xlu0
      %v1373 = vpop.trf.xlu0
      %v1374 = vpop.trf.xlu0
      %v1375 = vpop.trf.xlu0
      %v1376 = vpop.trf.xlu0
      %v1377 = vpop.trf.xlu0
      %v1378 = vpop.trf.xlu0
      %v1379 = vpop.trf.xlu0
      %v1380 = vpop.trf.xlu0
      %v1381 = vpop.trf.xlu0
      %v1382 = vpop.trf.xlu0
      %v1383 = vpop.trf.xlu0
      %v1384 = vpop.trf.xlu0
      %v1385 = vpop.trf.xlu0
      %v1386 = vpop.trf.xlu0
      %1387 = vxpose.xlu0.b32.start [1/16] %v1200, 128
      %1388 = vxpose.xlu0.b32.cont [2/16] 0.0, 128
      %1389 = vxpose.xlu0.b32.cont [3/16] 0.0, 128
      %1390 = vxpose.xlu0.b32.cont [4/16] 0.0, 128
      %1391 = vxpose.xlu0.b32.cont [5/16] 0.0, 128
      %1392 = vxpose.xlu0.b32.cont [6/16] 0.0, 128
      %1393 = vxpose.xlu0.b32.cont [7/16] 0.0, 128
      %1394 = vxpose.xlu0.b32.cont [8/16] 0.0, 128
      %1395 = vxpose.xlu0.b32.cont [9/16] 0.0, 128
      %1396 = vxpose.xlu0.b32.cont [10/16] 0.0, 128
      %1397 = vxpose.xlu0.b32.cont [11/16] 0.0, 128
      %1398 = vxpose.xlu0.b32.cont [12/16] 0.0, 128
      %1399 = vxpose.xlu0.b32.cont [13/16] 0.0, 128
      %1400 = vxpose.xlu0.b32.cont [14/16] 0.0, 128
      %1401 = vxpose.xlu0.b32.cont [15/16] 0.0, 128
      %1402 = vxpose.xlu0.b32.end [16/16] 0.0, 128
      %v1403 = vpop.trf.xlu0
      %v1404 = vpop.trf.xlu0
      %v1405 = vpop.trf.xlu0
      %v1406 = vpop.trf.xlu0
      %v1407 = vpop.trf.xlu0
      %v1408 = vpop.trf.xlu0
      %v1409 = vpop.trf.xlu0
      %v1410 = vpop.trf.xlu0
      %v1411 = vpop.trf.xlu0
      %v1412 = vpop.trf.xlu0
      %v1413 = vpop.trf.xlu0
      %v1414 = vpop.trf.xlu0
      %v1415 = vpop.trf.xlu0
      %v1416 = vpop.trf.xlu0
      %v1417 = vpop.trf.xlu0
      %v1418 = vpop.trf.xlu0
      %1419 = vxpose.xlu0.b32.start [1/16] %v1276, 128
      %1420 = vxpose.xlu0.b32.cont [2/16] 0.0, 128
      %1421 = vxpose.xlu0.b32.cont [3/16] 0.0, 128
      %1422 = vxpose.xlu0.b32.cont [4/16] 0.0, 128
      %1423 = vxpose.xlu0.b32.cont [5/16] 0.0, 128
      %1424 = vxpose.xlu0.b32.cont [6/16] 0.0, 128
      %1425 = vxpose.xlu0.b32.cont [7/16] 0.0, 128
      %1426 = vxpose.xlu0.b32.cont [8/16] 0.0, 128
      %1427 = vxpose.xlu0.b32.cont [9/16] 0.0, 128
      %1428 = vxpose.xlu0.b32.cont [10/16] 0.0, 128
      %1429 = vxpose.xlu0.b32.cont [11/16] 0.0, 128
      %1430 = vxpose.xlu0.b32.cont [12/16] 0.0, 128
      %1431 = vxpose.xlu0.b32.cont [13/16] 0.0, 128
      %1432 = vxpose.xlu0.b32.cont [14/16] 0.0, 128
      %1433 = vxpose.xlu0.b32.cont [15/16] 0.0, 128
      %1434 = vxpose.xlu0.b32.end [16/16] 0.0, 128
      %v1435 = vpop.trf.xlu0
      %v1436 = vpop.trf.xlu0
      %v1437 = vpop.trf.xlu0
      %v1438 = vpop.trf.xlu0
      %v1439 = vpop.trf.xlu0
      %v1440 = vpop.trf.xlu0
      %v1441 = vpop.trf.xlu0
      %v1442 = vpop.trf.xlu0
      %v1443 = vpop.trf.xlu0
      %v1444 = vpop.trf.xlu0
      %v1445 = vpop.trf.xlu0
      %v1446 = vpop.trf.xlu0
      %v1447 = vpop.trf.xlu0
      %v1448 = vpop.trf.xlu0
      %v1449 = vpop.trf.xlu0
      %v1450 = vpop.trf.xlu0
      %1451 = vxpose.xlu0.b32.start [1/16] %v1352, 128
      %1452 = vxpose.xlu0.b32.cont [2/16] 0.0, 128
      %1453 = vxpose.xlu0.b32.cont [3/16] 0.0, 128
      %1454 = vxpose.xlu0.b32.cont [4/16] 0.0, 128
      %1455 = vxpose.xlu0.b32.cont [5/16] 0.0, 128
      %1456 = vxpose.xlu0.b32.cont [6/16] 0.0, 128
      %1457 = vxpose.xlu0.b32.cont [7/16] 0.0, 128
      %1458 = vxpose.xlu0.b32.cont [8/16] 0.0, 128
      %1459 = vxpose.xlu0.b32.cont [9/16] 0.0, 128
      %1460 = vxpose.xlu0.b32.cont [10/16] 0.0, 128
      %1461 = vxpose.xlu0.b32.cont [11/16] 0.0, 128
      %1462 = vxpose.xlu0.b32.cont [12/16] 0.0, 128
      %1463 = vxpose.xlu0.b32.cont [13/16] 0.0, 128
      %1464 = vxpose.xlu0.b32.cont [14/16] 0.0, 128
      %1465 = vxpose.xlu0.b32.cont [15/16] 0.0, 128
      %1466 = vxpose.xlu0.b32.end [16/16] 0.0, 128
      %v1467 = vpop.trf.xlu0
      %v1468 = vpop.trf.xlu0
      %v1469 = vpop.trf.xlu0
      %v1470 = vpop.trf.xlu0
      %v1471 = vpop.trf.xlu0
      %v1472 = vpop.trf.xlu0
      %v1473 = vpop.trf.xlu0
      %v1474 = vpop.trf.xlu0
      %v1475 = vpop.trf.xlu0
      %v1476 = vpop.trf.xlu0
      %v1477 = vpop.trf.xlu0
      %v1478 = vpop.trf.xlu0
      %v1479 = vpop.trf.xlu0
      %v1480 = vpop.trf.xlu0
      %v1481 = vpop.trf.xlu0
      %v1482 = vpop.trf.xlu0
      %v1483 = vcombine.low %v1371, %v1435
      %v1484 = vcombine.high %v1371, %v1435
      %v1486 = vunpack.c.l.s4 1983009808
      %v1487 = vunpack.c.0.s8 %v1486
      %v1488 = vlaneseq
      %v1489 = vshrl.u32 %v1488, 7
      %v1490 = vsub.s32 %v1487, %v1489
      %v1491 = vrot.slane %v1483, %v1490
      %v1493 = vunpack.c.l.s4 1983009808
      %v1494 = vunpack.c.0.s8 %v1493
      %v1495 = vlaneseq
      %v1496 = vshrl.u32 %v1495, 7
      %v1497 = vsub.s32 %v1494, %v1496
      %v1498 = vrot.slane %v1484, %v1497
      %v1499 = vcombine.low %v1403, %v1467
      %v1500 = vcombine.high %v1403, %v1467
      %v1502 = vunpack.c.l.s4 1983009808
      %v1503 = vunpack.c.0.s8 %v1502
      %v1504 = vlaneseq
      %v1505 = vshrl.u32 %v1504, 7
      %v1506 = vsub.s32 %v1503, %v1505
      %v1507 = vrot.slane %v1499, %v1506
      %v1509 = vunpack.c.l.s4 1983009808
      %v1510 = vunpack.c.0.s8 %v1509
      %v1511 = vlaneseq
      %v1512 = vshrl.u32 %v1511, 7
      %v1513 = vsub.s32 %v1510, %v1512
      %v1514 = vrot.slane %v1500, %v1513
      %v1515 = vcombine.low %v1491, %v1507
      %v1516 = vcombine.high %v1491, %v1507
      %v1518 = vunpack.c.l.s4 1934713408
      %v1519 = vunpack.c.0.s8 %v1518
      %v1520 = vlaneseq
      %v1521 = vshrl.u32 %v1520, 7
      %v1522 = vsub.s32 %v1519, %v1521
      %v1523 = vrot.slane %v1515, %v1522
      %v1525 = vunpack.c.l.s4 1934713408
      %v1526 = vunpack.c.0.s8 %v1525
      %v1527 = vlaneseq
      %v1528 = vshrl.u32 %v1527, 7
      %v1529 = vsub.s32 %v1526, %v1528
      %v1530 = vrot.slane %v1516, %v1529
      %v1531 = vcombine.low %v1498, %v1514
      %v1532 = vcombine.high %v1498, %v1514
      %v1534 = vunpack.c.l.s4 1934713408
      %v1535 = vunpack.c.0.s8 %v1534
      %v1536 = vlaneseq
      %v1537 = vshrl.u32 %v1536, 7
      %v1538 = vsub.s32 %v1535, %v1537
      %v1539 = vrot.slane %v1531, %v1538
      %v1541 = vunpack.c.l.s4 1934713408
      %v1542 = vunpack.c.0.s8 %v1541
      %v1543 = vlaneseq
      %v1544 = vshrl.u32 %v1543, 7
      %v1545 = vsub.s32 %v1542, %v1544
      %v1546 = vrot.slane %v1532, %v1545
      %v1547 = vcombine.high %v1523, 0.0
      %v1548 = vcombine.high %v1530, 0.0
      %v1549 = vcombine.high %v1539, 0.0
      %v1550 = vcombine.high %v1546, 0.0
      %v1551 = vcombine.low %v1523, %v1530
      %v1553 = vunpack.c.l.s4 1983009808
      %v1554 = vunpack.c.0.s8 %v1553
      %v1555 = vlaneseq
      %v1556 = vshrl.u32 %v1555, 7
      %v1557 = vsub.s32 %v1554, %v1556
      %v1558 = vrot.slane %v1551, %v1557
      %v1559 = vcombine.low %v1547, %v1548
      %v1561 = vunpack.c.l.s4 1983009808
      %v1562 = vunpack.c.0.s8 %v1561
      %v1563 = vlaneseq
      %v1564 = vshrl.u32 %v1563, 7
      %v1565 = vsub.s32 %v1562, %v1564
      %v1566 = vrot.slane %v1559, %v1565
      %v1567 = vcombine.low %v1539, %v1546
      %v1569 = vunpack.c.l.s4 1983009808
      %v1570 = vunpack.c.0.s8 %v1569
      %v1571 = vlaneseq
      %v1572 = vshrl.u32 %v1571, 7
      %v1573 = vsub.s32 %v1570, %v1572
      %v1574 = vrot.slane %v1567, %v1573
      %v1575 = vcombine.low %v1549, %v1550
      %v1577 = vunpack.c.l.s4 1983009808
      %v1578 = vunpack.c.0.s8 %v1577
      %v1579 = vlaneseq
      %v1580 = vshrl.u32 %v1579, 7
      %v1581 = vsub.s32 %v1578, %v1580
      %v1582 = vrot.slane %v1575, %v1581
      %v1583 = vcombine.low %v1558, %v1566
      %v1584 = vcombine.high %v1558, %v1566
      %v1586 = vunpack.c.l.s4 1934713408
      %v1587 = vunpack.c.0.s8 %v1586
      %v1588 = vlaneseq
      %v1589 = vshrl.u32 %v1588, 7
      %v1590 = vsub.s32 %v1587, %v1589
      %v1591 = vrot.slane %v1583, %v1590
      %v1593 = vunpack.c.l.s4 1934713408
      %v1594 = vunpack.c.0.s8 %v1593
      %v1595 = vlaneseq
      %v1596 = vshrl.u32 %v1595, 7
      %v1597 = vsub.s32 %v1594, %v1596
      %v1598 = vrot.slane %v1584, %v1597
      %v1599 = vcombine.low %v1574, %v1582
      %v1600 = vcombine.high %v1574, %v1582
      %v1602 = vunpack.c.l.s4 1934713408
      %v1603 = vunpack.c.0.s8 %v1602
      %v1604 = vlaneseq
      %v1605 = vshrl.u32 %v1604, 7
      %v1606 = vsub.s32 %v1603, %v1605
      %v1607 = vrot.slane %v1599, %v1606
      %v1609 = vunpack.c.l.s4 1934713408
      %v1610 = vunpack.c.0.s8 %v1609
      %v1611 = vlaneseq
      %v1612 = vshrl.u32 %v1611, 7
      %v1613 = vsub.s32 %v1610, %v1612
      %v1614 = vrot.slane %v1600, %v1613
      %v1615 = vcombine.low %v1591, %v1607
      %v1616 = vcombine.high %v1591, %v1607
      %v1617 = vcombine.low %v1598, %v1614
      %v1618 = vcombine.high %v1598, %v1614
      %1620 = vrot.lane.b32.xlu0 %v1616, 8
      %v1621 = vpop.permute.xlu0 %1620
      %1624 = vrot.lane.b32.xlu0 %v1617, 16
      %v1625 = vpop.permute.xlu0 %1624
      %1628 = vrot.lane.b32.xlu0 %v1618, 24
      %v1629 = vpop.permute.xlu0 %1628
      %v1631 = vsel %vm570, %v1615, %v1621
      %vm1632 = vcmask 130048
      %v1633 = vsel %vm1632, %v1631, %v1625
      %vm1634 = vcmask 195584
      %v1635 = vsel %vm1634, %v1633, %v1629
      %v1637 = vlaneseq
      %v1638 = vshrl.u32 %v1637, 7
      %v1639 = vsub.s32 0, %v1638
      %v1640 = vrot.slane %v420, %v1639
      %v1643 = vsel %vm327, %v1635, 0
      %1645 = vmatprep.subr.mxu0 0.0
      %1646 = vmatpush1.msra.mxu0 %v416
      %1647 = vmatprep.subr.mxu0 0.0
      %1648 = vmatpush1.msra.mxu0 %v417
      %1649 = vmatprep.subr.mxu0 0.0
      %1650 = vmatpush1.msra.mxu0 %v418
      %1651 = vmatprep.subr.mxu0 0.0
      %1652 = vmatpush1.msra.mxu0 %v419
      %1653 = vmatprep.subr.mxu0 0.0
      %1654 = vmatpush1.msra.mxu0 0.0
      %1655 = vmatprep.subr.mxu0 0.0
      %1656 = vmatpush1.msra.mxu0 0.0
      %1657 = vmatprep.subr.mxu0 0.0
      %1658 = vmatpush1.msra.mxu0 0.0
      %1659 = vmatprep.subr.mxu0 0.0
      %1660 = vmatpush1.msra.mxu0 0.0
      %1661 = vmatprep.subr.mxu0 0.0
      %1662 = vmatpush1.msra.mxu0 0.0
      %1663 = vmatprep.subr.mxu0 0.0
      %1664 = vmatpush1.msra.mxu0 0.0
      %1665 = vmatprep.subr.mxu0 0.0
      %1666 = vmatpush1.msra.mxu0 0.0
      %1667 = vmatprep.subr.mxu0 0.0
      %1668 = vmatpush1.msra.mxu0 0.0
      %1669 = vmatprep.subr.mxu0 0.0
      %1670 = vmatpush1.msra.mxu0 0.0
      %1671 = vmatprep.subr.mxu0 0.0
      %1672 = vmatpush1.msra.mxu0 0.0
      %1673 = vmatprep.subr.mxu0 0.0
      %1674 = vmatpush1.msra.mxu0 0.0
      %1675 = vmatprep.subr.mxu0 0.0
      %1676 = vmatpush1.msra.mxu0 0.0
      %1677 = vmatprep.subr.mxu0 0.0
      %1678 = vmatpush1.msra.mxu0 0.0
      %1679 = vmatprep.subr.mxu0 0.0
      %1680 = vmatpush1.msra.mxu0 0.0
      %1681 = vmatprep.subr.mxu0 0.0
      %1682 = vmatpush1.msra.mxu0 0.0
      %1683 = vmatprep.subr.mxu0 0.0
      %1684 = vmatpush1.msra.mxu0 0.0
      %1685 = vmatprep.subr.mxu0 0.0
      %1686 = vmatpush1.msra.mxu0 0.0
      %1687 = vmatprep.subr.mxu0 0.0
      %1688 = vmatpush1.msra.mxu0 0.0
      %1689 = vmatprep.subr.mxu0 0.0
      %1690 = vmatpush1.msra.mxu0 0.0
      %1691 = vmatprep.subr.mxu0 0.0
      %1692 = vmatpush1.msra.mxu0 0.0
      %1693 = vmatprep.subr.mxu0 0.0
      %1694 = vmatpush1.msra.mxu0 0.0
      %1695 = vmatprep.subr.mxu0 0.0
      %1696 = vmatpush1.msra.mxu0 0.0
      %1697 = vmatprep.subr.mxu0 0.0
      %1698 = vmatpush1.msra.mxu0 0.0
      %1699 = vmatprep.subr.mxu0 0.0
      %1700 = vmatpush1.msra.mxu0 0.0
      %1701 = vmatprep.subr.mxu0 0.0
      %1702 = vmatpush1.msra.mxu0 0.0
      %1703 = vmatprep.subr.mxu0 0.0
      %1704 = vmatpush1.msra.mxu0 0.0
      %1705 = vmatprep.subr.mxu0 0.0
      %1706 = vmatpush1.msra.mxu0 0.0
      %1707 = vmatprep.subr.mxu0 0.0
      %1708 = vmatpush1.msra.mxu0 0.0
      %1709 = vmatprep.mubr.f32.mxu0 0.0
      %1710 = vmatmul.mubr.f32.gmra.mrb[0].mxu0 %v1643
      %v1711 = vpop.f32.mrb[0].mxu0
      %v1712 = vadd.f32 %v1640, %v1711
      %v1713 = vpop.f32.mrb[0].mxu0
      %1714 = vdwg.mxu0
      %v1715 = vadd.f32 %v315, %v1712
      %v1716 = vsel %vm327, %v1715, 0.0
      %1717 = vadd.xlane.f32.xlu0 %v1716
      %v1718 = vpop.xlane.xlu0 %1717
      %v1719 = vrcp.pop 32.0
      %v1720 = vmul.f32 %v1718, %v1719
      %v1721 = vsub.f32 %v1715, %v1720
      %v1722 = vmul.f32 %v1721, %v1721
      %v1723 = vsel %vm327, %v1722, 0.0
      %1724 = vadd.xlane.f32.xlu0 %v1723
      %v1725 = vpop.xlane.xlu0 %1724
      %v1726 = vmul.f32 %v1725, %v1719
      %v1727 = vadd.f32 %v1726, 1e-05
      %v1728 = vrsqrt.pop %v1727
      %v1729 = vmul.f32 %v1721, %v1728
      %v1731 = vlaneseq
      %v1732 = vshrl.u32 %v1731, 7
      %v1733 = vsub.s32 0, %v1732
      %v1734 = vrot.slane %v421, %v1733
      %v1736 = vmul.f32 %v1729, %v1734
      %v1738 = vlaneseq
      %v1739 = vshrl.u32 %v1738, 7
      %v1740 = vsub.s32 0, %v1739
      %v1741 = vrot.slane %v422, %v1740
      %v1743 = vadd.f32 %v1736, %v1741
      %1744 = vst.msk [vmem:[%s314] sm:$0xff] %vm327, %v1743
      %p1745 = scmp.lt.s32.totalorder %s19, 1
      %s1746 = scalar_select %p1745, %s19, 1
      %s1747 = smul.addr %s1746, 8
      %s1748 = scalar_lea.vmem %s8, %s1747
      // Predicated region
      $region53: #{decoder_forward.6} parent=51 // pred_check
        %p1749 = pneg %p215
      $region54: #{decoder_forward.6} parent=51 // pred_check_branch
        %1751 = sbr.rel (%p1749) target = $region56
      $region55: #{decoder_forward.6} parent=51 // pred_region
        _
      $region56: #{decoder_forward.6} parent=51 // pred_fallthru
        _
    $region52: #{decoder_forward.6} parent=5 // pred_fallthru
      _
    %p1752 = scmp.le.s32.totalorder 2, %s14
    // Predicated region
    $region57: #{decoder_forward.6} parent=5 // pred_check
      %p1753 = pneg %p1752
    $region58: #{decoder_forward.6} parent=5 // pred_check_branch
      %1755 = sbr.rel (%p1753) target = $region60
    $region59: #{decoder_forward.6} parent=5 // pred_region
      %s1756 = ssub.s32 %s14, 2
      // Predicated region
      $region61: #{decoder_forward.6} parent=59 // pred_check
        %p1757 = pneg %p221
      $region62: #{decoder_forward.6} parent=59 // pred_check_branch
        %1759 = sbr.rel (%p1757) target = $region64
      $region63: #{decoder_forward.6} parent=59 // pred_region
        %p1760 = scmp.lt.s32.totalorder %s20, 1
        %s1761 = scalar_select %p1760, %s20, 1
        %s1762 = smul.addr %s1761, 8
        %s1763 = scalar_lea.vmem %s8, %s1762
      $region64: #{decoder_forward.6} parent=59 // pred_fallthru
        _
    $region60: #{decoder_forward.6} parent=5 // pred_fallthru
      _
  $region6: #{decoder_forward.6} parent=0 // loop_footer
    %s18 = sadd.s32 1, %s14
  $region7: #{decoder_forward.6} parent=0 // loop_footer_branch
    %13 = sbr.rel target = $region3
  $region8: #{decoder_forward.6} parent=0 // loop_exit
    _

// kernel: decoder_forward.7
$region0: #{decoder_forward.7}
  #allocation0 [shape = 'u32[]', space=smem, size = 0x4, offset = 0x4, fixed_abs, tag = 'smem constant byte address 0x4 - core index']
  #allocation1 [shape = 'u32[144,128]{1,0:T(1,128)}', space=vmem, size = 0x12000, scoped, tag = 'internal scratch']
  %s0 = inlined_call_operand.vmem [shape: f32[2,8,32], index: 0, kind: input, shape index: {}]
  %s1 = inlined_call_operand.vmem [shape: f32[2,8,32], index: 1, kind: input, shape index: {}]
  %s2 = inlined_call_operand.vmem [shape: f32[32,96], index: 2, kind: input, shape index: {}]
  %s3 = inlined_call_operand.vmem [shape: f32[1,96], index: 3, kind: input, shape index: {}]
  %s4 = inlined_call_operand.vmem [shape: f32[32,32], index: 4, kind: input, shape index: {}]
  %s5 = inlined_call_operand.vmem [shape: f32[1,32], index: 5, kind: input, shape index: {}]
  %s6 = inlined_call_operand.vmem [shape: f32[1,32], index: 6, kind: input, shape index: {}]
  %s7 = inlined_call_operand.vmem [shape: f32[1,32], index: 7, kind: input, shape index: {}]
  %s8 = inlined_call_operand.vmem [shape: f32[2,8,32], index: 8, kind: output, shape index: {}]
  %s9 = sld [smem:[#allocation0]]
  $region65: #{decoder_forward.7} parent=0
    _
  %s11 = ssub.s32 1, %s9
  %s12 = scalar_select 0, %s11, %s9
  loop: start=0, step=1, limit=4
  $region2: #{decoder_forward.7} parent=0 // loop_pre_header
    _
  $region3: #{decoder_forward.7} parent=0 // loop_header
    %s14 = sphi 0, %s18
    %p15 = scmp.ge.s32.totalorder %s14, 4
    %s24 = sphi 0, %s26
    %s27 = sphi 0, %s24
    %s28 = sphi 0, %s27
    %s44 = sphi 0, %s28
    %s50 = sphi 0, %s52
    %s53 = sphi 0, %s50
    %s54 = sphi 0, %s53
    %s70 = sphi 0, %s54
    %s74 = sphi 0, %s74
    %s76 = sphi 0, %s74
    %s77 = sphi 0, %s76
    %s91 = sphi 0, %s77
    %s95 = sphi 0, %s95
    %s97 = sphi 0, %s95
    %s98 = sphi 0, %s97
    %s112 = sphi 0, %s98
    %s116 = sphi 0, %s116
    %s118 = sphi 0, %s116
    %s119 = sphi 0, %s118
    %s133 = sphi 0, %s119
    %s137 = sphi 0, %s137
    %s139 = sphi 0, %s137
    %s140 = sphi 0, %s139
    %s154 = sphi 0, %s140
    %s158 = sphi 0, %s158
    %s160 = sphi 0, %s158
    %s161 = sphi 0, %s160
    %s175 = sphi 0, %s161
    %s179 = sphi 0, %s179
    %s181 = sphi 0, %s179
    %s182 = sphi 0, %s181
    %s196 = sphi 0, %s182
    %s202 = sphi 0, %s204
    %s205 = sphi 0, %s202
    %s206 = sphi 0, %s205
    %s222 = sphi 0, %s206
  $region4: #{decoder_forward.7} parent=0 // loop_header_branch
    %17 = sbr.rel (%p15) target = $region8
  $region5: #{decoder_forward.7} parent=0 // loop_body
    %s19 = ssub.s32 %s14, 1
    %s20 = ssub.s32 %s14, 2
    %s21 = sadd.s32 %s14, 1
    %s22 = ssub.s32 %s14, %s21
    %p23 = scmp.eq.s32.totalorder %s22, 0
    %s25 = sadd.s32 %s24, 1
    %s26 = scalar_select %p23, %s24, %s25
    %p29 = pneg %p23
    %p30 = scmp.eq.s32.totalorder %s14, 1
    %p31 = por %p29, %p30
    %p32 = scmp.ne.s32.totalorder %s24, %s27
    %p33 = scmp.eq.s32.totalorder %s14, 0
    %p34 = por %p32, %p33
    %p35 = scmp.ne.s32.totalorder %s24, %s27
    %p36 = scmp.eq.s32.totalorder %s19, 1
    %p37 = por %p35, %p36
    %p38 = scmp.ne.s32.totalorder %s27, %s28
    %p39 = scmp.eq.s32.totalorder %s19, 0
    %p40 = por %p38, %p39
    %p41 = scmp.ne.s32.totalorder %s27, %s28
    %p42 = scmp.eq.s32.totalorder %s20, 1
    %p43 = por %p41, %p42
    %p45 = scmp.ne.s32.totalorder %s28, %s44
    %p46 = scmp.eq.s32.totalorder %s20, 0
    %p47 = por %p45, %p46
    %s48 = ssub.s32 %s14, %s21
    %p49 = scmp.eq.s32.totalorder %s48, 0
    %s51 = sadd.s32 %s50, 1
    %s52 = scalar_select %p49, %s50, %s51
    %p55 = pneg %p49
    %p56 = scmp.eq.s32.totalorder %s14, 1
    %p57 = por %p55, %p56
    %p58 = scmp.ne.s32.totalorder %s50, %s53
    %p59 = scmp.eq.s32.totalorder %s14, 0
    %p60 = por %p58, %p59
    %p61 = scmp.ne.s32.totalorder %s50, %s53
    %p62 = scmp.eq.s32.totalorder %s19, 1
    %p63 = por %p61, %p62
    %p64 = scmp.ne.s32.totalorder %s53, %s54
    %p65 = scmp.eq.s32.totalorder %s19, 0
    %p66 = por %p64, %p65
    %p67 = scmp.ne.s32.totalorder %s53, %s54
    %p68 = scmp.eq.s32.totalorder %s20, 1
    %p69 = por %p67, %p68
    %p71 = scmp.ne.s32.totalorder %s54, %s70
    %p72 = scmp.eq.s32.totalorder %s20, 0
    %p73 = por %p71, %p72
    %s75 = sadd.s32 %s74, 1
    %p78 = scmp.eq.s32.totalorder %s14, 1
    %p79 = scmp.ne.s32.totalorder %s74, %s76
    %p80 = scmp.eq.s32.totalorder %s14, 0
    %p81 = por %p79, %p80
    %p82 = scmp.ne.s32.totalorder %s74, %s76
    %p83 = scmp.eq.s32.totalorder %s19, 1
    %p84 = por %p82, %p83
    %p85 = scmp.ne.s32.totalorder %s76, %s77
    %p86 = scmp.eq.s32.totalorder %s19, 0
    %p87 = por %p85, %p86
    %p88 = scmp.ne.s32.totalorder %s76, %s77
    %p89 = scmp.eq.s32.totalorder %s20, 1
    %p90 = por %p88, %p89
    %p92 = scmp.ne.s32.totalorder %s77, %s91
    %p93 = scmp.eq.s32.totalorder %s20, 0
    %p94 = por %p92, %p93
    %s96 = sadd.s32 %s95, 1
    %p99 = scmp.eq.s32.totalorder %s14, 1
    %p100 = scmp.ne.s32.totalorder %s95, %s97
    %p101 = scmp.eq.s32.totalorder %s14, 0
    %p102 = por %p100, %p101
    %p103 = scmp.ne.s32.totalorder %s95, %s97
    %p104 = scmp.eq.s32.totalorder %s19, 1
    %p105 = por %p103, %p104
    %p106 = scmp.ne.s32.totalorder %s97, %s98
    %p107 = scmp.eq.s32.totalorder %s19, 0
    %p108 = por %p106, %p107
    %p109 = scmp.ne.s32.totalorder %s97, %s98
    %p110 = scmp.eq.s32.totalorder %s20, 1
    %p111 = por %p109, %p110
    %p113 = scmp.ne.s32.totalorder %s98, %s112
    %p114 = scmp.eq.s32.totalorder %s20, 0
    %p115 = por %p113, %p114
    %s117 = sadd.s32 %s116, 1
    %p120 = scmp.eq.s32.totalorder %s14, 1
    %p121 = scmp.ne.s32.totalorder %s116, %s118
    %p122 = scmp.eq.s32.totalorder %s14, 0
    %p123 = por %p121, %p122
    %p124 = scmp.ne.s32.totalorder %s116, %s118
    %p125 = scmp.eq.s32.totalorder %s19, 1
    %p126 = por %p124, %p125
    %p127 = scmp.ne.s32.totalorder %s118, %s119
    %p128 = scmp.eq.s32.totalorder %s19, 0
    %p129 = por %p127, %p128
    %p130 = scmp.ne.s32.totalorder %s118, %s119
    %p131 = scmp.eq.s32.totalorder %s20, 1
    %p132 = por %p130, %p131
    %p134 = scmp.ne.s32.totalorder %s119, %s133
    %p135 = scmp.eq.s32.totalorder %s20, 0
    %p136 = por %p134, %p135
    %s138 = sadd.s32 %s137, 1
    %p141 = scmp.eq.s32.totalorder %s14, 1
    %p142 = scmp.ne.s32.totalorder %s137, %s139
    %p143 = scmp.eq.s32.totalorder %s14, 0
    %p144 = por %p142, %p143
    %p145 = scmp.ne.s32.totalorder %s137, %s139
    %p146 = scmp.eq.s32.totalorder %s19, 1
    %p147 = por %p145, %p146
    %p148 = scmp.ne.s32.totalorder %s139, %s140
    %p149 = scmp.eq.s32.totalorder %s19, 0
    %p150 = por %p148, %p149
    %p151 = scmp.ne.s32.totalorder %s139, %s140
    %p152 = scmp.eq.s32.totalorder %s20, 1
    %p153 = por %p151, %p152
    %p155 = scmp.ne.s32.totalorder %s140, %s154
    %p156 = scmp.eq.s32.totalorder %s20, 0
    %p157 = por %p155, %p156
    %s159 = sadd.s32 %s158, 1
    %p162 = scmp.eq.s32.totalorder %s14, 1
    %p163 = scmp.ne.s32.totalorder %s158, %s160
    %p164 = scmp.eq.s32.totalorder %s14, 0
    %p165 = por %p163, %p164
    %p166 = scmp.ne.s32.totalorder %s158, %s160
    %p167 = scmp.eq.s32.totalorder %s19, 1
    %p168 = por %p166, %p167
    %p169 = scmp.ne.s32.totalorder %s160, %s161
    %p170 = scmp.eq.s32.totalorder %s19, 0
    %p171 = por %p169, %p170
    %p172 = scmp.ne.s32.totalorder %s160, %s161
    %p173 = scmp.eq.s32.totalorder %s20, 1
    %p174 = por %p172, %p173
    %p176 = scmp.ne.s32.totalorder %s161, %s175
    %p177 = scmp.eq.s32.totalorder %s20, 0
    %p178 = por %p176, %p177
    %s180 = sadd.s32 %s179, 1
    %p183 = scmp.eq.s32.totalorder %s14, 1
    %p184 = scmp.ne.s32.totalorder %s179, %s181
    %p185 = scmp.eq.s32.totalorder %s14, 0
    %p186 = por %p184, %p185
    %p187 = scmp.ne.s32.totalorder %s179, %s181
    %p188 = scmp.eq.s32.totalorder %s19, 1
    %p189 = por %p187, %p188
    %p190 = scmp.ne.s32.totalorder %s181, %s182
    %p191 = scmp.eq.s32.totalorder %s19, 0
    %p192 = por %p190, %p191
    %p193 = scmp.ne.s32.totalorder %s181, %s182
    %p194 = scmp.eq.s32.totalorder %s20, 1
    %p195 = por %p193, %p194
    %p197 = scmp.ne.s32.totalorder %s182, %s196
    %p198 = scmp.eq.s32.totalorder %s20, 0
    %p199 = por %p197, %p198
    %s200 = ssub.s32 %s14, %s21
    %p201 = scmp.eq.s32.totalorder %s200, 0
    %s203 = sadd.s32 %s202, 1
    %s204 = scalar_select %p201, %s202, %s203
    %p207 = pneg %p201
    %p208 = scmp.eq.s32.totalorder %s14, 1
    %p209 = por %p207, %p208
    %p210 = scmp.ne.s32.totalorder %s202, %s205
    %p211 = scmp.eq.s32.totalorder %s14, 0
    %p212 = por %p210, %p211
    %p213 = scmp.ne.s32.totalorder %s202, %s205
    %p214 = scmp.eq.s32.totalorder %s19, 1
    %p215 = por %p213, %p214
    %p216 = scmp.ne.s32.totalorder %s205, %s206
    %p217 = scmp.eq.s32.totalorder %s19, 0
    %p218 = por %p216, %p217
    %p219 = scmp.ne.s32.totalorder %s205, %s206
    %p220 = scmp.eq.s32.totalorder %s20, 1
    %p221 = por %p219, %p220
    %p223 = scmp.ne.s32.totalorder %s206, %s222
    %p224 = scmp.eq.s32.totalorder %s20, 0
    %p225 = por %p223, %p224
    %p226 = scmp.le.s32.totalorder 1, %s14
    %p227 = scmp.lt.s32.totalorder %s14, 3
    %p228 = pnand %p226, %p227
    %p229 = pneg %p228
    // Predicated region
    $region9: #{decoder_forward.7} parent=5 // pred_check
      _
    $region10: #{decoder_forward.7} parent=5 // pred_check_branch
      %231 = sbr.rel (%p228) target = $region12
    $region11: #{decoder_forward.7} parent=5 // pred_region
      %s232 = ssub.s32 %s14, 1
      // Predicated region
      $region13: #{decoder_forward.7} parent=11 // pred_check
        %p233 = pneg %p87
      $region14: #{decoder_forward.7} parent=11 // pred_check_branch
        %235 = sbr.rel (%p233) target = $region16
      $region15: #{decoder_forward.7} parent=11 // pred_region
        _
      $region16: #{decoder_forward.7} parent=11 // pred_fallthru
        _
      // Predicated region
      $region17: #{decoder_forward.7} parent=11 // pred_check
        %p236 = pneg %p108
      $region18: #{decoder_forward.7} parent=11 // pred_check_branch
        %238 = sbr.rel (%p236) target = $region20
      $region19: #{decoder_forward.7} parent=11 // pred_region
        _
      $region20: #{decoder_forward.7} parent=11 // pred_fallthru
        _
      // Predicated region
      $region21: #{decoder_forward.7} parent=11 // pred_check
        %p239 = pneg %p129
      $region22: #{decoder_forward.7} parent=11 // pred_check_branch
        %241 = sbr.rel (%p239) target = $region24
      $region23: #{decoder_forward.7} parent=11 // pred_region
        _
      $region24: #{decoder_forward.7} parent=11 // pred_fallthru
        _
      // Predicated region
      $region25: #{decoder_forward.7} parent=11 // pred_check
        %p242 = pneg %p150
      $region26: #{decoder_forward.7} parent=11 // pred_check_branch
        %244 = sbr.rel (%p242) target = $region28
      $region27: #{decoder_forward.7} parent=11 // pred_region
        _
      $region28: #{decoder_forward.7} parent=11 // pred_fallthru
        _
      // Predicated region
      $region29: #{decoder_forward.7} parent=11 // pred_check
        %p245 = pneg %p171
      $region30: #{decoder_forward.7} parent=11 // pred_check_branch
        %247 = sbr.rel (%p245) target = $region32
      $region31: #{decoder_forward.7} parent=11 // pred_region
        _
      $region32: #{decoder_forward.7} parent=11 // pred_fallthru
        _
      // Predicated region
      $region33: #{decoder_forward.7} parent=11 // pred_check
        %p248 = pneg %p192
      $region34: #{decoder_forward.7} parent=11 // pred_check_branch
        %250 = sbr.rel (%p248) target = $region36
      $region35: #{decoder_forward.7} parent=11 // pred_region
        _
      $region36: #{decoder_forward.7} parent=11 // pred_fallthru
        _
    $region12: #{decoder_forward.7} parent=5 // pred_fallthru
      _
    %p251 = scmp.lt.s32.totalorder %s14, 2
    // Predicated region
    $region37: #{decoder_forward.7} parent=5 // pred_check
      %p252 = pneg %p251
    $region38: #{decoder_forward.7} parent=5 // pred_check_branch
      %254 = sbr.rel (%p252) target = $region40
    $region39: #{decoder_forward.7} parent=5 // pred_region
      // Predicated region
      $region41: #{decoder_forward.7} parent=39 // pred_check
        %p255 = pneg %p34
      $region42: #{decoder_forward.7} parent=39 // pred_check_branch
        %257 = sbr.rel (%p255) target = $region44
      $region43: #{decoder_forward.7} parent=39 // pred_region
        %p258 = scmp.lt.s32.totalorder %s14, 1
        %s259 = scalar_select %p258, %s14, 1
        %s260 = smul.addr %s259, 8
        %s261 = scalar_lea.vmem %s0, %s260
      $region44: #{decoder_forward.7} parent=39 // pred_fallthru
        _
      // Predicated region
      $region45: #{decoder_forward.7} parent=39 // pred_check
        %p262 = pneg %p60
      $region46: #{decoder_forward.7} parent=39 // pred_check_branch
        %264 = sbr.rel (%p262) target = $region48
      $region47: #{decoder_forward.7} parent=39 // pred_region
        %p265 = scmp.lt.s32.totalorder %s14, 1
        %s266 = scalar_select %p265, %s14, 1
        %s267 = smul.addr %s266, 8
        %s268 = scalar_lea.vmem %s1, %s267
      $region48: #{decoder_forward.7} parent=39 // pred_fallthru
        _
    $region40: #{decoder_forward.7} parent=5 // pred_fallthru
      _
    %p269 = scmp.le.s32.totalorder 1, %s14
    %p270 = scmp.lt.s32.totalorder %s14, 3
    %p271 = pnand %p269, %p270
    %p272 = pneg %p271
    // Predicated region
    $region49: #{decoder_forward.7} parent=5 // pred_check
      _
    $region50: #{decoder_forward.7} parent=5 // pred_check_branch
      %274 = sbr.rel (%p271) target = $region52
    $region51: #{decoder_forward.7} parent=5 // pred_region
      %s275 = ssub.s32 %s14, 1
      %p276 = scmp.lt.s32.totalorder %s19, 1
      %s277 = scalar_select %p276, %s19, 1
      %s278 = smul.addr %s277, 8
      %s279 = scalar_lea.vmem %s0, %s278
      %p280 = pneg %p40
      %p281 = pneg %p37
      %p282 = scmp.lt.s32.totalorder %s19, 1
      %s283 = scalar_select %p282, %s19, 1
      %s284 = smul.addr %s283, 8
      %s285 = scalar_lea.vmem %s1, %s284
      %p286 = pneg %p66
      %p287 = pneg %p63
      %p288 = pneg %p87
      %p289 = pneg %p84
      %p290 = pneg %p108
      %p291 = pneg %p105
      %p292 = pneg %p129
      %p293 = pneg %p126
      %p294 = pneg %p150
      %p295 = pneg %p147
      %p296 = pneg %p171
      %p297 = pneg %p168
      %p298 = pneg %p192
      %p299 = pneg %p189
      %p300 = pneg %p218
      %p301 = pneg %p215
      %p302 = scmp.lt.s32.totalorder %s19, 1
      %s303 = scalar_select %p302, %s19, 1
      %s304 = smul.addr %s303, 8
      %s305 = scalar_lea.vmem %s8, %s304
      %p306 = scmp.lt.s32.totalorder %s19, 1
      %s307 = scalar_select %p306, %s19, 1
      %s308 = smul.addr %s307, 8
      %s309 = scalar_lea.vmem %s0, %s308
      %p310 = scmp.lt.s32.totalorder %s19, 1
      %s311 = scalar_select %p310, %s19, 1
      %s312 = smul.addr %s311, 8
      %s313 = scalar_lea.vmem %s1, %s312
      %p314 = scmp.lt.s32.totalorder %s19, 1
      %s315 = scalar_select %p314, %s19, 1
      %s316 = smul.addr %s315, 8
      %s317 = scalar_lea.vmem %s8, %s316
      %v318 = vld [vmem:[%s309] sm:$0xff]
      %v319 = vld [vmem:[%s313] sm:$0xff]
      %v320 = vld [vmem:[%s2] sm:$0xff]
      %v321 = vld [vmem:[%s2 + $0x8] sm:$0xff]
      %v322 = vld [vmem:[%s2 + $0x10] sm:$0xff]
      %v323 = vld [vmem:[%s2 + $0x18] sm:$0xff]
      %v324 = vld [vmem:[%s3] sm:$0x1]
      %v326 = vlaneseq
      %v327 = vshrl.u32 %v326, 7
      %v328 = vsub.s32 0, %v327
      %v329 = vrot.slane %v324, %v328
      %vm331 = vcmask 261120
      %v333 = vsel %vm331, %v318, 0
      %335 = vmatprep.subr.mxu0 0.0
      %336 = vmatpush1.msra.mxu0 %v320
      %337 = vmatprep.subr.mxu0 0.0
      %338 = vmatpush1.msra.mxu0 %v321
      %339 = vmatprep.subr.mxu0 0.0
      %340 = vmatpush1.msra.mxu0 %v322
      %341 = vmatprep.subr.mxu0 0.0
      %342 = vmatpush1.msra.mxu0 %v323
      %343 = vmatprep.subr.mxu0 0.0
      %344 = vmatpush1.msra.mxu0 0.0
      %345 = vmatprep.subr.mxu0 0.0
      %346 = vmatpush1.msra.mxu0 0.0
      %347 = vmatprep.subr.mxu0 0.0
      %348 = vmatpush1.msra.mxu0 0.0
      %349 = vmatprep.subr.mxu0 0.0
      %350 = vmatpush1.msra.mxu0 0.0
      %351 = vmatprep.subr.mxu0 0.0
      %352 = vmatpush1.msra.mxu0 0.0
      %353 = vmatprep.subr.mxu0 0.0
      %354 = vmatpush1.msra.mxu0 0.0
      %355 = vmatprep.subr.mxu0 0.0
      %356 = vmatpush1.msra.mxu0 0.0
      %357 = vmatprep.subr.mxu0 0.0
      %358 = vmatpush1.msra.mxu0 0.0
      %359 = vmatprep.subr.mxu0 0.0
      %360 = vmatpush1.msra.mxu0 0.0
      %361 = vmatprep.subr.mxu0 0.0
      %362 = vmatpush1.msra.mxu0 0.0
      %363 = vmatprep.subr.mxu0 0.0
      %364 = vmatpush1.msra.mxu0 0.0
      %365 = vmatprep.subr.mxu0 0.0
      %366 = vmatpush1.msra.mxu0 0.0
      %367 = vmatprep.subr.mxu0 0.0
      %368 = vmatpush1.msra.mxu0 0.0
      %369 = vmatprep.subr.mxu0 0.0
      %370 = vmatpush1.msra.mxu0 0.0
      %371 = vmatprep.subr.mxu0 0.0
      %372 = vmatpush1.msra.mxu0 0.0
      %373 = vmatprep.subr.mxu0 0.0
      %374 = vmatpush1.msra.mxu0 0.0
      %375 = vmatprep.subr.mxu0 0.0
      %376 = vmatpush1.msra.mxu0 0.0
      %377 = vmatprep.subr.mxu0 0.0
      %378 = vmatpush1.msra.mxu0 0.0
      %379 = vmatprep.subr.mxu0 0.0
      %380 = vmatpush1.msra.mxu0 0.0
      %381 = vmatprep.subr.mxu0 0.0
      %382 = vmatpush1.msra.mxu0 0.0
      %383 = vmatprep.subr.mxu0 0.0
      %384 = vmatpush1.msra.mxu0 0.0
      %385 = vmatprep.subr.mxu0 0.0
      %386 = vmatpush1.msra.mxu0 0.0
      %387 = vmatprep.subr.mxu0 0.0
      %388 = vmatpush1.msra.mxu0 0.0
      %389 = vmatprep.subr.mxu0 0.0
      %390 = vmatpush1.msra.mxu0 0.0
      %391 = vmatprep.subr.mxu0 0.0
      %392 = vmatpush1.msra.mxu0 0.0
      %393 = vmatprep.subr.mxu0 0.0
      %394 = vmatpush1.msra.mxu0 0.0
      %395 = vmatprep.subr.mxu0 0.0
      %396 = vmatpush1.msra.mxu0 0.0
      %397 = vmatprep.subr.mxu0 0.0
      %398 = vmatpush1.msra.mxu0 0.0
      %399 = vmatprep.mubr.f32.mxu0 0.0
      %400 = vmatmul.mubr.f32.gmra.mrb[0].mxu0 %v333
      %v401 = vpop.f32.mrb[0].mxu0
      %v402 = vadd.f32 %v329, %v401
      %v403 = vpop.f32.mrb[0].mxu0
      %404 = vdwg.mxu0
      %409 = vrot.lane.b32.xlu0 %v320, 96
      %v410 = vpop.permute.xlu0 %409
      %411 = vrot.lane.b32.xlu0 %v321, 96
      %v412 = vpop.permute.xlu0 %411
      %413 = vrot.lane.b32.xlu0 %v322, 96
      %v414 = vpop.permute.xlu0 %413
      %415 = vrot.lane.b32.xlu0 %v323, 96
      %v416 = vpop.permute.xlu0 %415
      %421 = vrot.lane.b32.xlu0 %v329, 96
      %v422 = vpop.permute.xlu0 %421
      %v425 = vsel %vm331, %v319, 0
      %427 = vmatprep.subr.mxu0 0.0
      %428 = vmatpush1.msra.mxu0 %v410
      %429 = vmatprep.subr.mxu0 0.0
      %430 = vmatpush1.msra.mxu0 %v412
      %431 = vmatprep.subr.mxu0 0.0
      %432 = vmatpush1.msra.mxu0 %v414
      %433 = vmatprep.subr.mxu0 0.0
      %434 = vmatpush1.msra.mxu0 %v416
      %435 = vmatprep.subr.mxu0 0.0
      %436 = vmatpush1.msra.mxu0 0.0
      %437 = vmatprep.subr.mxu0 0.0
      %438 = vmatpush1.msra.mxu0 0.0
      %439 = vmatprep.subr.mxu0 0.0
      %440 = vmatpush1.msra.mxu0 0.0
      %441 = vmatprep.subr.mxu0 0.0
      %442 = vmatpush1.msra.mxu0 0.0
      %443 = vmatprep.subr.mxu0 0.0
      %444 = vmatpush1.msra.mxu0 0.0
      %445 = vmatprep.subr.mxu0 0.0
      %446 = vmatpush1.msra.mxu0 0.0
      %447 = vmatprep.subr.mxu0 0.0
      %448 = vmatpush1.msra.mxu0 0.0
      %449 = vmatprep.subr.mxu0 0.0
      %450 = vmatpush1.msra.mxu0 0.0
      %451 = vmatprep.subr.mxu0 0.0
      %452 = vmatpush1.msra.mxu0 0.0
      %453 = vmatprep.subr.mxu0 0.0
      %454 = vmatpush1.msra.mxu0 0.0
      %455 = vmatprep.subr.mxu0 0.0
      %456 = vmatpush1.msra.mxu0 0.0
      %457 = vmatprep.subr.mxu0 0.0
      %458 = vmatpush1.msra.mxu0 0.0
      %459 = vmatprep.subr.mxu0 0.0
      %460 = vmatpush1.msra.mxu0 0.0
      %461 = vmatprep.subr.mxu0 0.0
      %462 = vmatpush1.msra.mxu0 0.0
      %463 = vmatprep.subr.mxu0 0.0
      %464 = vmatpush1.msra.mxu0 0.0
      %465 = vmatprep.subr.mxu0 0.0
      %466 = vmatpush1.msra.mxu0 0.0
      %467 = vmatprep.subr.mxu0 0.0
      %468 = vmatpush1.msra.mxu0 0.0
      %469 = vmatprep.subr.mxu0 0.0
      %470 = vmatpush1.msra.mxu0 0.0
      %471 = vmatprep.subr.mxu0 0.0
      %472 = vmatpush1.msra.mxu0 0.0
      %473 = vmatprep.subr.mxu0 0.0
      %474 = vmatpush1.msra.mxu0 0.0
      %475 = vmatprep.subr.mxu0 0.0
      %476 = vmatpush1.msra.mxu0 0.0
      %477 = vmatprep.subr.mxu0 0.0
      %478 = vmatpush1.msra.mxu0 0.0
      %479 = vmatprep.subr.mxu0 0.0
      %480 = vmatpush1.msra.mxu0 0.0
      %481 = vmatprep.subr.mxu0 0.0
      %482 = vmatpush1.msra.mxu0 0.0
      %483 = vmatprep.subr.mxu0 0.0
      %484 = vmatpush1.msra.mxu0 0.0
      %485 = vmatprep.subr.mxu0 0.0
      %486 = vmatpush1.msra.mxu0 0.0
      %487 = vmatprep.subr.mxu0 0.0
      %488 = vmatpush1.msra.mxu0 0.0
      %489 = vmatprep.subr.mxu0 0.0
      %490 = vmatpush1.msra.mxu0 0.0
      %491 = vmatprep.mubr.f32.mxu0 0.0
      %492 = vmatmul.mubr.f32.gmra.mrb[0].mxu0 %v425
      %v493 = vpop.f32.mrb[0].mxu0
      %v494 = vadd.f32 %v422, %v493
      %v495 = vpop.f32.mrb[0].mxu0
      %496 = vdwg.mxu0
      %v497 = vld [vmem:[%s4] sm:$0xff]
      %v498 = vld [vmem:[%s4 + $0x8] sm:$0xff]
      %v499 = vld [vmem:[%s4 + $0x10] sm:$0xff]
      %v500 = vld [vmem:[%s4 + $0x18] sm:$0xff]
      %v501 = vld [vmem:[%s5] sm:$0x1]
      %v502 = vld [vmem:[%s6] sm:$0x1]
      %v503 = vld [vmem:[%s7] sm:$0x1]
      %505 = vrot.lane.b32.xlu0 %v402, 120
      %v506 = vpop.permute.xlu0 %505
      %507 = vrot.lane.b32.xlu0 %v402, 112
      %v508 = vpop.permute.xlu0 %507
      %509 = vrot.lane.b32.xlu0 %v402, 104
      %v510 = vpop.permute.xlu0 %509
      %512 = vrot.lane.b32.xlu0 %v494, 120
      %v513 = vpop.permute.xlu0 %512
      %515 = vrot.lane.b32.xlu0 %v494, 112
      %v516 = vpop.permute.xlu0 %515
      %518 = vrot.lane.b32.xlu0 %v494, 104
      %v519 = vpop.permute.xlu0 %518
      %521 = vxpose.xlu0.b32.start [1/16] %v494, 128
      %522 = vxpose.xlu0.b32.cont [2/16] 0.0, 128
      %523 = vxpose.xlu0.b32.cont [3/16] 0.0, 128
      %524 = vxpose.xlu0.b32.cont [4/16] 0.0, 128
      %525 = vxpose.xlu0.b32.cont [5/16] 0.0, 128
      %526 = vxpose.xlu0.b32.cont [6/16] 0.0, 128
      %527 = vxpose.xlu0.b32.cont [7/16] 0.0, 128
      %528 = vxpose.xlu0.b32.cont [8/16] 0.0, 128
      %529 = vxpose.xlu0.b32.cont [9/16] 0.0, 128
      %530 = vxpose.xlu0.b32.cont [10/16] 0.0, 128
      %531 = vxpose.xlu0.b32.cont [11/16] 0.0, 128
      %532 = vxpose.xlu0.b32.cont [12/16] 0.0, 128
      %533 = vxpose.xlu0.b32.cont [13/16] 0.0, 128
      %534 = vxpose.xlu0.b32.cont [14/16] 0.0, 128
      %535 = vxpose.xlu0.b32.cont [15/16] 0.0, 128
      %536 = vxpose.xlu0.b32.end [16/16] 0.0, 128
      %v537 = vpop.trf.xlu0
      %v538 = vpop.trf.xlu0
      %v539 = vpop.trf.xlu0
      %v540 = vpop.trf.xlu0
      %v541 = vpop.trf.xlu0
      %v542 = vpop.trf.xlu0
      %v543 = vpop.trf.xlu0
      %v544 = vpop.trf.xlu0
      %v545 = vpop.trf.xlu0
      %v546 = vpop.trf.xlu0
      %v547 = vpop.trf.xlu0
      %v548 = vpop.trf.xlu0
      %v549 = vpop.trf.xlu0
      %v550 = vpop.trf.xlu0
      %v551 = vpop.trf.xlu0
      %v552 = vpop.trf.xlu0
      %553 = vxpose.xlu0.b32.start [1/16] %v513, 128
      %554 = vxpose.xlu0.b32.cont [2/16] 0.0, 128
      %555 = vxpose.xlu0.b32.cont [3/16] 0.0, 128
      %556 = vxpose.xlu0.b32.cont [4/16] 0.0, 128
      %557 = vxpose.xlu0.b32.cont [5/16] 0.0, 128
      %558 = vxpose.xlu0.b32.cont [6/16] 0.0, 128
      %559 = vxpose.xlu0.b32.cont [7/16] 0.0, 128
      %560 = vxpose.xlu0.b32.cont [8/16] 0.0, 128
      %561 = vxpose.xlu0.b32.cont [9/16] 0.0, 128
      %562 = vxpose.xlu0.b32.cont [10/16] 0.0, 128
      %563 = vxpose.xlu0.b32.cont [11/16] 0.0, 128
      %564 = vxpose.xlu0.b32.cont [12/16] 0.0, 128
      %565 = vxpose.xlu0.b32.cont [13/16] 0.0, 128
      %566 = vxpose.xlu0.b32.cont [14/16] 0.0, 128
      %567 = vxpose.xlu0.b32.cont [15/16] 0.0, 128
      %568 = vxpose.xlu0.b32.end [16/16] 0.0, 128
      %v569 = vpop.trf.xlu0
      %v570 = vpop.trf.xlu0
      %v571 = vpop.trf.xlu0
      %v572 = vpop.trf.xlu0
      %v573 = vpop.trf.xlu0
      %v574 = vpop.trf.xlu0
      %v575 = vpop.trf.xlu0
      %v576 = vpop.trf.xlu0
      %v577 = vpop.trf.xlu0
      %v578 = vpop.trf.xlu0
      %v579 = vpop.trf.xlu0
      %v580 = vpop.trf.xlu0
      %v581 = vpop.trf.xlu0
      %v582 = vpop.trf.xlu0
      %v583 = vpop.trf.xlu0
      %v584 = vpop.trf.xlu0
      %585 = vxpose.xlu0.b32.start [1/16] %v516, 128
      %586 = vxpose.xlu0.b32.cont [2/16] 0.0, 128
      %587 = vxpose.xlu0.b32.cont [3/16] 0.0, 128
      %588 = vxpose.xlu0.b32.cont [4/16] 0.0, 128
      %589 = vxpose.xlu0.b32.cont [5/16] 0.0, 128
      %590 = vxpose.xlu0.b32.cont [6/16] 0.0, 128
      %591 = vxpose.xlu0.b32.cont [7/16] 0.0, 128
      %592 = vxpose.xlu0.b32.cont [8/16] 0.0, 128
      %593 = vxpose.xlu0.b32.cont [9/16] 0.0, 128
      %594 = vxpose.xlu0.b32.cont [10/16] 0.0, 128
      %595 = vxpose.xlu0.b32.cont [11/16] 0.0, 128
      %596 = vxpose.xlu0.b32.cont [12/16] 0.0, 128
      %597 = vxpose.xlu0.b32.cont [13/16] 0.0, 128
      %598 = vxpose.xlu0.b32.cont [14/16] 0.0, 128
      %599 = vxpose.xlu0.b32.cont [15/16] 0.0, 128
      %600 = vxpose.xlu0.b32.end [16/16] 0.0, 128
      %v601 = vpop.trf.xlu0
      %v602 = vpop.trf.xlu0
      %v603 = vpop.trf.xlu0
      %v604 = vpop.trf.xlu0
      %v605 = vpop.trf.xlu0
      %v606 = vpop.trf.xlu0
      %v607 = vpop.trf.xlu0
      %v608 = vpop.trf.xlu0
      %v609 = vpop.trf.xlu0
      %v610 = vpop.trf.xlu0
      %v611 = vpop.trf.xlu0
      %v612 = vpop.trf.xlu0
      %v613 = vpop.trf.xlu0
      %v614 = vpop.trf.xlu0
      %v615 = vpop.trf.xlu0
      %v616 = vpop.trf.xlu0
      %617 = vxpose.xlu0.b32.start [1/16] %v519, 128
      %618 = vxpose.xlu0.b32.cont [2/16] 0.0, 128
      %619 = vxpose.xlu0.b32.cont [3/16] 0.0, 128
      %620 = vxpose.xlu0.b32.cont [4/16] 0.0, 128
      %621 = vxpose.xlu0.b32.cont [5/16] 0.0, 128
      %622 = vxpose.xlu0.b32.cont [6/16] 0.0, 128
      %623 = vxpose.xlu0.b32.cont [7/16] 0.0, 128
      %624 = vxpose.xlu0.b32.cont [8/16] 0.0, 128
      %625 = vxpose.xlu0.b32.cont [9/16] 0.0, 128
      %626 = vxpose.xlu0.b32.cont [10/16] 0.0, 128
      %627 = vxpose.xlu0.b32.cont [11/16] 0.0, 128
      %628 = vxpose.xlu0.b32.cont [12/16] 0.0, 128
      %629 = vxpose.xlu0.b32.cont [13/16] 0.0, 128
      %630 = vxpose.xlu0.b32.cont [14/16] 0.0, 128
      %631 = vxpose.xlu0.b32.cont [15/16] 0.0, 128
      %632 = vxpose.xlu0.b32.end [16/16] 0.0, 128
      %v633 = vpop.trf.xlu0
      %v634 = vpop.trf.xlu0
      %v635 = vpop.trf.xlu0
      %v636 = vpop.trf.xlu0
      %v637 = vpop.trf.xlu0
      %v638 = vpop.trf.xlu0
      %v639 = vpop.trf.xlu0
      %v640 = vpop.trf.xlu0
      %v641 = vpop.trf.xlu0
      %v642 = vpop.trf.xlu0
      %v643 = vpop.trf.xlu0
      %v644 = vpop.trf.xlu0
      %v645 = vpop.trf.xlu0
      %v646 = vpop.trf.xlu0
      %v647 = vpop.trf.xlu0
      %v648 = vpop.trf.xlu0
      %vm649 = vcmask 64512
      %v650 = vsel %vm649, %v402, 0
      %652 = vmatprep.subr.mxu0 0.0
      %653 = vmatpush1.msra.mxu0 %v537
      %654 = vmatprep.subr.mxu0 0.0
      %655 = vmatpush1.msra.mxu0 0.0
      %656 = vmatprep.subr.mxu0 0.0
      %657 = vmatpush1.msra.mxu0 0.0
      %658 = vmatprep.subr.mxu0 0.0
      %659 = vmatpush1.msra.mxu0 0.0
      %660 = vmatprep.subr.mxu0 0.0
      %661 = vmatpush1.msra.mxu0 0.0
      %662 = vmatprep.subr.mxu0 0.0
      %663 = vmatpush1.msra.mxu0 0.0
      %664 = vmatprep.subr.mxu0 0.0
      %665 = vmatpush1.msra.mxu0 0.0
      %666 = vmatprep.subr.mxu0 0.0
      %667 = vmatpush1.msra.mxu0 0.0
      %668 = vmatprep.subr.mxu0 0.0
      %669 = vmatpush1.msra.mxu0 0.0
      %670 = vmatprep.subr.mxu0 0.0
      %671 = vmatpush1.msra.mxu0 0.0
      %672 = vmatprep.subr.mxu0 0.0
      %673 = vmatpush1.msra.mxu0 0.0
      %674 = vmatprep.subr.mxu0 0.0
      %675 = vmatpush1.msra.mxu0 0.0
      %676 = vmatprep.subr.mxu0 0.0
      %677 = vmatpush1.msra.mxu0 0.0
      %678 = vmatprep.subr.mxu0 0.0
      %679 = vmatpush1.msra.mxu0 0.0
      %680 = vmatprep.subr.mxu0 0.0
      %681 = vmatpush1.msra.mxu0 0.0
      %682 = vmatprep.subr.mxu0 0.0
      %683 = vmatpush1.msra.mxu0 0.0
      %684 = vmatprep.subr.mxu0 0.0
      %685 = vmatpush1.msra.mxu0 0.0
      %686 = vmatprep.subr.mxu0 0.0
      %687 = vmatpush1.msra.mxu0 0.0
      %688 = vmatprep.subr.mxu0 0.0
      %689 = vmatpush1.msra.mxu0 0.0
      %690 = vmatprep.subr.mxu0 0.0
      %691 = vmatpush1.msra.mxu0 0.0
      %692 = vmatprep.subr.mxu0 0.0
      %693 = vmatpush1.msra.mxu0 0.0
      %694 = vmatprep.subr.mxu0 0.0
      %695 = vmatpush1.msra.mxu0 0.0
      %696 = vmatprep.subr.mxu0 0.0
      %697 = vmatpush1.msra.mxu0 0.0
      %698 = vmatprep.subr.mxu0 0.0
      %699 = vmatpush1.msra.mxu0 0.0
      %700 = vmatprep.subr.mxu0 0.0
      %701 = vmatpush1.msra.mxu0 0.0
      %702 = vmatprep.subr.mxu0 0.0
      %703 = vmatpush1.msra.mxu0 0.0
      %704 = vmatprep.subr.mxu0 0.0
      %705 = vmatpush1.msra.mxu0 0.0
      %706 = vmatprep.subr.mxu0 0.0
      %707 = vmatpush1.msra.mxu0 0.0
      %708 = vmatprep.subr.mxu0 0.0
      %709 = vmatpush1.msra.mxu0 0.0
      %710 = vmatprep.subr.mxu0 0.0
      %711 = vmatpush1.msra.mxu0 0.0
      %712 = vmatprep.subr.mxu0 0.0
      %713 = vmatpush1.msra.mxu0 0.0
      %714 = vmatprep.subr.mxu0 0.0
      %715 = vmatpush1.msra.mxu0 0.0
      %716 = vmatprep.mubr.f32.mxu0 0.0
      %717 = vmatmul.mubr.f32.gmra.mrb[0].mxu0 %v650
      %v718 = vpop.f32.mrb[0].mxu0
      %v719 = vadd.f32 0.0, %v718
      %v720 = vpop.f32.mrb[0].mxu0
      %721 = vdwg.mxu0
      %v722 = vsel %vm649, %v506, 0
      %724 = vmatprep.subr.mxu0 0.0
      %725 = vmatpush1.msra.mxu0 %v569
      %726 = vmatprep.subr.mxu0 0.0
      %727 = vmatpush1.msra.mxu0 0.0
      %728 = vmatprep.subr.mxu0 0.0
      %729 = vmatpush1.msra.mxu0 0.0
      %730 = vmatprep.subr.mxu0 0.0
      %731 = vmatpush1.msra.mxu0 0.0
      %732 = vmatprep.subr.mxu0 0.0
      %733 = vmatpush1.msra.mxu0 0.0
      %734 = vmatprep.subr.mxu0 0.0
      %735 = vmatpush1.msra.mxu0 0.0
      %736 = vmatprep.subr.mxu0 0.0
      %737 = vmatpush1.msra.mxu0 0.0
      %738 = vmatprep.subr.mxu0 0.0
      %739 = vmatpush1.msra.mxu0 0.0
      %740 = vmatprep.subr.mxu0 0.0
      %741 = vmatpush1.msra.mxu0 0.0
      %742 = vmatprep.subr.mxu0 0.0
      %743 = vmatpush1.msra.mxu0 0.0
      %744 = vmatprep.subr.mxu0 0.0
      %745 = vmatpush1.msra.mxu0 0.0
      %746 = vmatprep.subr.mxu0 0.0
      %747 = vmatpush1.msra.mxu0 0.0
      %748 = vmatprep.subr.mxu0 0.0
      %749 = vmatpush1.msra.mxu0 0.0
      %750 = vmatprep.subr.mxu0 0.0
      %751 = vmatpush1.msra.mxu0 0.0
      %752 = vmatprep.subr.mxu0 0.0
      %753 = vmatpush1.msra.mxu0 0.0
      %754 = vmatprep.subr.mxu0 0.0
      %755 = vmatpush1.msra.mxu0 0.0
      %756 = vmatprep.subr.mxu0 0.0
      %757 = vmatpush1.msra.mxu0 0.0
      %758 = vmatprep.subr.mxu0 0.0
      %759 = vmatpush1.msra.mxu0 0.0
      %760 = vmatprep.subr.mxu0 0.0
      %761 = vmatpush1.msra.mxu0 0.0
      %762 = vmatprep.subr.mxu0 0.0
      %763 = vmatpush1.msra.mxu0 0.0
      %764 = vmatprep.subr.mxu0 0.0
      %765 = vmatpush1.msra.mxu0 0.0
      %766 = vmatprep.subr.mxu0 0.0
      %767 = vmatpush1.msra.mxu0 0.0
      %768 = vmatprep.subr.mxu0 0.0
      %769 = vmatpush1.msra.mxu0 0.0
      %770 = vmatprep.subr.mxu0 0.0
      %771 = vmatpush1.msra.mxu0 0.0
      %772 = vmatprep.subr.mxu0 0.0
      %773 = vmatpush1.msra.mxu0 0.0
      %774 = vmatprep.subr.mxu0 0.0
      %775 = vmatpush1.msra.mxu0 0.0
      %776 = vmatprep.subr.mxu0 0.0
      %777 = vmatpush1.msra.mxu0 0.0
      %778 = vmatprep.subr.mxu0 0.0
      %779 = vmatpush1.msra.mxu0 0.0
      %780 = vmatprep.subr.mxu0 0.0
      %781 = vmatpush1.msra.mxu0 0.0
      %782 = vmatprep.subr.mxu0 0.0
      %783 = vmatpush1.msra.mxu0 0.0
      %784 = vmatprep.subr.mxu0 0.0
      %785 = vmatpush1.msra.mxu0 0.0
      %786 = vmatprep.subr.mxu0 0.0
      %787 = vmatpush1.msra.mxu0 0.0
      %788 = vmatprep.mubr.f32.mxu0 0.0
      %789 = vmatmul.mubr.f32.gmra.mrb[0].mxu0 %v722
      %v790 = vpop.f32.mrb[0].mxu0
      %v791 = vadd.f32 0.0, %v790
      %v792 = vpop.f32.mrb[0].mxu0
      %793 = vdwg.mxu0
      %v794 = vsel %vm649, %v508, 0
      %796 = vmatprep.subr.mxu0 0.0
      %797 = vmatpush1.msra.mxu0 %v601
      %798 = vmatprep.subr.mxu0 0.0
      %799 = vmatpush1.msra.mxu0 0.0
      %800 = vmatprep.subr.mxu0 0.0
      %801 = vmatpush1.msra.mxu0 0.0
      %802 = vmatprep.subr.mxu0 0.0
      %803 = vmatpush1.msra.mxu0 0.0
      %804 = vmatprep.subr.mxu0 0.0
      %805 = vmatpush1.msra.mxu0 0.0
      %806 = vmatprep.subr.mxu0 0.0
      %807 = vmatpush1.msra.mxu0 0.0
      %808 = vmatprep.subr.mxu0 0.0
      %809 = vmatpush1.msra.mxu0 0.0
      %810 = vmatprep.subr.mxu0 0.0
      %811 = vmatpush1.msra.mxu0 0.0
      %812 = vmatprep.subr.mxu0 0.0
      %813 = vmatpush1.msra.mxu0 0.0
      %814 = vmatprep.subr.mxu0 0.0
      %815 = vmatpush1.msra.mxu0 0.0
      %816 = vmatprep.subr.mxu0 0.0
      %817 = vmatpush1.msra.mxu0 0.0
      %818 = vmatprep.subr.mxu0 0.0
      %819 = vmatpush1.msra.mxu0 0.0
      %820 = vmatprep.subr.mxu0 0.0
      %821 = vmatpush1.msra.mxu0 0.0
      %822 = vmatprep.subr.mxu0 0.0
      %823 = vmatpush1.msra.mxu0 0.0
      %824 = vmatprep.subr.mxu0 0.0
      %825 = vmatpush1.msra.mxu0 0.0
      %826 = vmatprep.subr.mxu0 0.0
      %827 = vmatpush1.msra.mxu0 0.0
      %828 = vmatprep.subr.mxu0 0.0
      %829 = vmatpush1.msra.mxu0 0.0
      %830 = vmatprep.subr.mxu0 0.0
      %831 = vmatpush1.msra.mxu0 0.0
      %832 = vmatprep.subr.mxu0 0.0
      %833 = vmatpush1.msra.mxu0 0.0
      %834 = vmatprep.subr.mxu0 0.0
      %835 = vmatpush1.msra.mxu0 0.0
      %836 = vmatprep.subr.mxu0 0.0
      %837 = vmatpush1.msra.mxu0 0.0
      %838 = vmatprep.subr.mxu0 0.0
      %839 = vmatpush1.msra.mxu0 0.0
      %840 = vmatprep.subr.mxu0 0.0
      %841 = vmatpush1.msra.mxu0 0.0
      %842 = vmatprep.subr.mxu0 0.0
      %843 = vmatpush1.msra.mxu0 0.0
      %844 = vmatprep.subr.mxu0 0.0
      %845 = vmatpush1.msra.mxu0 0.0
      %846 = vmatprep.subr.mxu0 0.0
      %847 = vmatpush1.msra.mxu0 0.0
      %848 = vmatprep.subr.mxu0 0.0
      %849 = vmatpush1.msra.mxu0 0.0
      %850 = vmatprep.subr.mxu0 0.0
      %851 = vmatpush1.msra.mxu0 0.0
      %852 = vmatprep.subr.mxu0 0.0
      %853 = vmatpush1.msra.mxu0 0.0
      %854 = vmatprep.subr.mxu0 0.0
      %855 = vmatpush1.msra.mxu0 0.0
      %856 = vmatprep.subr.mxu0 0.0
      %857 = vmatpush1.msra.mxu0 0.0
      %858 = vmatprep.subr.mxu0 0.0
      %859 = vmatpush1.msra.mxu0 0.0
      %860 = vmatprep.mubr.f32.mxu0 0.0
      %861 = vmatmul.mubr.f32.gmra.mrb[0].mxu0 %v794
      %v862 = vpop.f32.mrb[0].mxu0
      %v863 = vadd.f32 0.0, %v862
      %v864 = vpop.f32.mrb[0].mxu0
      %865 = vdwg.mxu0
      %v866 = vsel %vm649, %v510, 0
      %868 = vmatprep.subr.mxu0 0.0
      %869 = vmatpush1.msra.mxu0 %v633
      %870 = vmatprep.subr.mxu0 0.0
      %871 = vmatpush1.msra.mxu0 0.0
      %872 = vmatprep.subr.mxu0 0.0
      %873 = vmatpush1.msra.mxu0 0.0
      %874 = vmatprep.subr.mxu0 0.0
      %875 = vmatpush1.msra.mxu0 0.0
      %876 = vmatprep.subr.mxu0 0.0
      %877 = vmatpush1.msra.mxu0 0.0
      %878 = vmatprep.subr.mxu0 0.0
      %879 = vmatpush1.msra.mxu0 0.0
      %880 = vmatprep.subr.mxu0 0.0
      %881 = vmatpush1.msra.mxu0 0.0
      %882 = vmatprep.subr.mxu0 0.0
      %883 = vmatpush1.msra.mxu0 0.0
      %884 = vmatprep.subr.mxu0 0.0
      %885 = vmatpush1.msra.mxu0 0.0
      %886 = vmatprep.subr.mxu0 0.0
      %887 = vmatpush1.msra.mxu0 0.0
      %888 = vmatprep.subr.mxu0 0.0
      %889 = vmatpush1.msra.mxu0 0.0
      %890 = vmatprep.subr.mxu0 0.0
      %891 = vmatpush1.msra.mxu0 0.0
      %892 = vmatprep.subr.mxu0 0.0
      %893 = vmatpush1.msra.mxu0 0.0
      %894 = vmatprep.subr.mxu0 0.0
      %895 = vmatpush1.msra.mxu0 0.0
      %896 = vmatprep.subr.mxu0 0.0
      %897 = vmatpush1.msra.mxu0 0.0
      %898 = vmatprep.subr.mxu0 0.0
      %899 = vmatpush1.msra.mxu0 0.0
      %900 = vmatprep.subr.mxu0 0.0
      %901 = vmatpush1.msra.mxu0 0.0
      %902 = vmatprep.subr.mxu0 0.0
      %903 = vmatpush1.msra.mxu0 0.0
      %904 = vmatprep.subr.mxu0 0.0
      %905 = vmatpush1.msra.mxu0 0.0
      %906 = vmatprep.subr.mxu0 0.0
      %907 = vmatpush1.msra.mxu0 0.0
      %908 = vmatprep.subr.mxu0 0.0
      %909 = vmatpush1.msra.mxu0 0.0
      %910 = vmatprep.subr.mxu0 0.0
      %911 = vmatpush1.msra.mxu0 0.0
      %912 = vmatprep.subr.mxu0 0.0
      %913 = vmatpush1.msra.mxu0 0.0
      %914 = vmatprep.subr.mxu0 0.0
      %915 = vmatpush1.msra.mxu0 0.0
      %916 = vmatprep.subr.mxu0 0.0
      %917 = vmatpush1.msra.mxu0 0.0
      %918 = vmatprep.subr.mxu0 0.0
      %919 = vmatpush1.msra.mxu0 0.0
      %920 = vmatprep.subr.mxu0 0.0
      %921 = vmatpush1.msra.mxu0 0.0
      %922 = vmatprep.subr.mxu0 0.0
      %923 = vmatpush1.msra.mxu0 0.0
      %924 = vmatprep.subr.mxu0 0.0
      %925 = vmatpush1.msra.mxu0 0.0
      %926 = vmatprep.subr.mxu0 0.0
      %927 = vmatpush1.msra.mxu0 0.0
      %928 = vmatprep.subr.mxu0 0.0
      %929 = vmatpush1.msra.mxu0 0.0
      %930 = vmatprep.subr.mxu0 0.0
      %931 = vmatpush1.msra.mxu0 0.0
      %932 = vmatprep.mubr.f32.mxu0 0.0
      %933 = vmatmul.mubr.f32.gmra.mrb[0].mxu0 %v866
      %v934 = vpop.f32.mrb[0].mxu0
      %v935 = vadd.f32 0.0, %v934
      %v936 = vpop.f32.mrb[0].mxu0
      %937 = vdwg.mxu0
      %v938 = vmul.f32 %v719, 0.35355338
      %v939 = vmul.f32 %v791, 0.35355338
      %v940 = vmul.f32 %v863, 0.35355338
      %v941 = vmul.f32 %v935, 0.35355338
      %v942 = vsel %vm649, %v938, -inf
      %943 = vmax.xlane.f32.xlu0 %v942
      %v944 = vpop.xlane.xlu0 %943
      %v945 = vsel %vm649, %v939, -inf
      %946 = vmax.xlane.f32.xlu0 %v945
      %v947 = vpop.xlane.xlu0 %946
      %v948 = vsel %vm649, %v940, -inf
      %949 = vmax.xlane.f32.xlu0 %v948
      %v950 = vpop.xlane.xlu0 %949
      %v951 = vsel %vm649, %v941, -inf
      %952 = vmax.xlane.f32.xlu0 %v951
      %v953 = vpop.xlane.xlu0 %952
      %v954 = vsub.f32 %v938, %v944
      %v955 = vsub.f32 %v939, %v947
      %v956 = vsub.f32 %v940, %v950
      %v957 = vsub.f32 %v941, %v953
      %v958 = vmul.f32 %v954, 1.442695
      %v959 = vpow.pop %v958
      %v960 = vmul.f32 %v955, 1.442695
      %v961 = vpow.pop %v960
      %v962 = vmul.f32 %v956, 1.442695
      %v963 = vpow.pop %v962
      %v964 = vmul.f32 %v957, 1.442695
      %v965 = vpow.pop %v964
      %v966 = vsel %vm649, %v959, 0.0
      %967 = vadd.xlane.f32.xlu0 %v966
      %v968 = vpop.xlane.xlu0 %967
      %v969 = vsel %vm649, %v961, 0.0
      %970 = vadd.xlane.f32.xlu0 %v969
      %v971 = vpop.xlane.xlu0 %970
      %v972 = vsel %vm649, %v963, 0.0
      %973 = vadd.xlane.f32.xlu0 %v972
      %v974 = vpop.xlane.xlu0 %973
      %v975 = vsel %vm649, %v965, 0.0
      %976 = vadd.xlane.f32.xlu0 %v975
      %v977 = vpop.xlane.xlu0 %976
      %v978 = vrcp.pop %v968
      %v979 = vrcp.pop %v971
      %v980 = vrcp.pop %v974
      %v981 = vrcp.pop %v977
      %v982 = vmul.f32 %v959, %v978
      %v983 = vmul.f32 %v961, %v979
      %v984 = vmul.f32 %v963, %v980
      %v985 = vmul.f32 %v965, %v981
      %986 = vrot.lane.b32.xlu0 %v494, 96
      %v987 = vpop.permute.xlu0 %986
      %988 = vrot.lane.b32.xlu0 %v513, 96
      %v989 = vpop.permute.xlu0 %988
      %990 = vrot.lane.b32.xlu0 %v516, 96
      %v991 = vpop.permute.xlu0 %990
      %992 = vrot.lane.b32.xlu0 %v519, 96
      %v993 = vpop.permute.xlu0 %992
      %998 = vxpose.xlu0.b32.start [1/16] %v987, 128
      %999 = vxpose.xlu0.b32.cont [2/16] 0.0, 128
      %1000 = vxpose.xlu0.b32.cont [3/16] 0.0, 128
      %1001 = vxpose.xlu0.b32.cont [4/16] 0.0, 128
      %1002 = vxpose.xlu0.b32.cont [5/16] 0.0, 128
      %1003 = vxpose.xlu0.b32.cont [6/16] 0.0, 128
      %1004 = vxpose.xlu0.b32.cont [7/16] 0.0, 128
      %1005 = vxpose.xlu0.b32.cont [8/16] 0.0, 128
      %1006 = vxpose.xlu0.b32.cont [9/16] 0.0, 128
      %1007 = vxpose.xlu0.b32.cont [10/16] 0.0, 128
      %1008 = vxpose.xlu0.b32.cont [11/16] 0.0, 128
      %1009 = vxpose.xlu0.b32.cont [12/16] 0.0, 128
      %1010 = vxpose.xlu0.b32.cont [13/16] 0.0, 128
      %1011 = vxpose.xlu0.b32.cont [14/16] 0.0, 128
      %1012 = vxpose.xlu0.b32.cont [15/16] 0.0, 128
      %1013 = vxpose.xlu0.b32.end [16/16] 0.0, 128
      %v1014 = vpop.trf.xlu0
      %v1015 = vpop.trf.xlu0
      %v1016 = vpop.trf.xlu0
      %v1017 = vpop.trf.xlu0
      %v1018 = vpop.trf.xlu0
      %v1019 = vpop.trf.xlu0
      %v1020 = vpop.trf.xlu0
      %v1021 = vpop.trf.xlu0
      %v1022 = vpop.trf.xlu0
      %v1023 = vpop.trf.xlu0
      %v1024 = vpop.trf.xlu0
      %v1025 = vpop.trf.xlu0
      %v1026 = vpop.trf.xlu0
      %v1027 = vpop.trf.xlu0
      %v1028 = vpop.trf.xlu0
      %v1029 = vpop.trf.xlu0
      %1030 = vxpose.xlu0.b32.start [1/16] %v989, 128
      %1031 = vxpose.xlu0.b32.cont [2/16] 0.0, 128
      %1032 = vxpose.xlu0.b32.cont [3/16] 0.0, 128
      %1033 = vxpose.xlu0.b32.cont [4/16] 0.0, 128
      %1034 = vxpose.xlu0.b32.cont [5/16] 0.0, 128
      %1035 = vxpose.xlu0.b32.cont [6/16] 0.0, 128
      %1036 = vxpose.xlu0.b32.cont [7/16] 0.0, 128
      %1037 = vxpose.xlu0.b32.cont [8/16] 0.0, 128
      %1038 = vxpose.xlu0.b32.cont [9/16] 0.0, 128
      %1039 = vxpose.xlu0.b32.cont [10/16] 0.0, 128
      %1040 = vxpose.xlu0.b32.cont [11/16] 0.0, 128
      %1041 = vxpose.xlu0.b32.cont [12/16] 0.0, 128
      %1042 = vxpose.xlu0.b32.cont [13/16] 0.0, 128
      %1043 = vxpose.xlu0.b32.cont [14/16] 0.0, 128
      %1044 = vxpose.xlu0.b32.cont [15/16] 0.0, 128
      %1045 = vxpose.xlu0.b32.end [16/16] 0.0, 128
      %v1046 = vpop.trf.xlu0
      %v1047 = vpop.trf.xlu0
      %v1048 = vpop.trf.xlu0
      %v1049 = vpop.trf.xlu0
      %v1050 = vpop.trf.xlu0
      %v1051 = vpop.trf.xlu0
      %v1052 = vpop.trf.xlu0
      %v1053 = vpop.trf.xlu0
      %v1054 = vpop.trf.xlu0
      %v1055 = vpop.trf.xlu0
      %v1056 = vpop.trf.xlu0
      %v1057 = vpop.trf.xlu0
      %v1058 = vpop.trf.xlu0
      %v1059 = vpop.trf.xlu0
      %v1060 = vpop.trf.xlu0
      %v1061 = vpop.trf.xlu0
      %1062 = vxpose.xlu0.b32.start [1/16] %v991, 128
      %1063 = vxpose.xlu0.b32.cont [2/16] 0.0, 128
      %1064 = vxpose.xlu0.b32.cont [3/16] 0.0, 128
      %1065 = vxpose.xlu0.b32.cont [4/16] 0.0, 128
      %1066 = vxpose.xlu0.b32.cont [5/16] 0.0, 128
      %1067 = vxpose.xlu0.b32.cont [6/16] 0.0, 128
      %1068 = vxpose.xlu0.b32.cont [7/16] 0.0, 128
      %1069 = vxpose.xlu0.b32.cont [8/16] 0.0, 128
      %1070 = vxpose.xlu0.b32.cont [9/16] 0.0, 128
      %1071 = vxpose.xlu0.b32.cont [10/16] 0.0, 128
      %1072 = vxpose.xlu0.b32.cont [11/16] 0.0, 128
      %1073 = vxpose.xlu0.b32.cont [12/16] 0.0, 128
      %1074 = vxpose.xlu0.b32.cont [13/16] 0.0, 128
      %1075 = vxpose.xlu0.b32.cont [14/16] 0.0, 128
      %1076 = vxpose.xlu0.b32.cont [15/16] 0.0, 128
      %1077 = vxpose.xlu0.b32.end [16/16] 0.0, 128
      %v1078 = vpop.trf.xlu0
      %v1079 = vpop.trf.xlu0
      %v1080 = vpop.trf.xlu0
      %v1081 = vpop.trf.xlu0
      %v1082 = vpop.trf.xlu0
      %v1083 = vpop.trf.xlu0
      %v1084 = vpop.trf.xlu0
      %v1085 = vpop.trf.xlu0
      %v1086 = vpop.trf.xlu0
      %v1087 = vpop.trf.xlu0
      %v1088 = vpop.trf.xlu0
      %v1089 = vpop.trf.xlu0
      %v1090 = vpop.trf.xlu0
      %v1091 = vpop.trf.xlu0
      %v1092 = vpop.trf.xlu0
      %v1093 = vpop.trf.xlu0
      %1094 = vxpose.xlu0.b32.start [1/16] %v993, 128
      %1095 = vxpose.xlu0.b32.cont [2/16] 0.0, 128
      %1096 = vxpose.xlu0.b32.cont [3/16] 0.0, 128
      %1097 = vxpose.xlu0.b32.cont [4/16] 0.0, 128
      %1098 = vxpose.xlu0.b32.cont [5/16] 0.0, 128
      %1099 = vxpose.xlu0.b32.cont [6/16] 0.0, 128
      %1100 = vxpose.xlu0.b32.cont [7/16] 0.0, 128
      %1101 = vxpose.xlu0.b32.cont [8/16] 0.0, 128
      %1102 = vxpose.xlu0.b32.cont [9/16] 0.0, 128
      %1103 = vxpose.xlu0.b32.cont [10/16] 0.0, 128
      %1104 = vxpose.xlu0.b32.cont [11/16] 0.0, 128
      %1105 = vxpose.xlu0.b32.cont [12/16] 0.0, 128
      %1106 = vxpose.xlu0.b32.cont [13/16] 0.0, 128
      %1107 = vxpose.xlu0.b32.cont [14/16] 0.0, 128
      %1108 = vxpose.xlu0.b32.cont [15/16] 0.0, 128
      %1109 = vxpose.xlu0.b32.end [16/16] 0.0, 128
      %v1110 = vpop.trf.xlu0
      %v1111 = vpop.trf.xlu0
      %v1112 = vpop.trf.xlu0
      %v1113 = vpop.trf.xlu0
      %v1114 = vpop.trf.xlu0
      %v1115 = vpop.trf.xlu0
      %v1116 = vpop.trf.xlu0
      %v1117 = vpop.trf.xlu0
      %v1118 = vpop.trf.xlu0
      %v1119 = vpop.trf.xlu0
      %v1120 = vpop.trf.xlu0
      %v1121 = vpop.trf.xlu0
      %v1122 = vpop.trf.xlu0
      %v1123 = vpop.trf.xlu0
      %v1124 = vpop.trf.xlu0
      %v1125 = vpop.trf.xlu0
      %v1127 = vsel %vm649, %v1014, 0
      %v1130 = vsel %vm649, %v982, 0
      %1132 = vmatprep.subr.mxu0 0.0
      %1133 = vmatpush1.xpose.msra.mxu0 %v1130
      %1134 = vmatprep.subr.mxu0 0.0
      %1135 = vmatpush1.xpose.msra.mxu0 0.0
      %1136 = vmatprep.subr.mxu0 0.0
      %1137 = vmatpush1.xpose.msra.mxu0 0.0
      %1138 = vmatprep.subr.mxu0 0.0
      %1139 = vmatpush1.xpose.msra.mxu0 0.0
      %1140 = vmatprep.subr.mxu0 0.0
      %1141 = vmatpush1.xpose.msra.mxu0 0.0
      %1142 = vmatprep.subr.mxu0 0.0
      %1143 = vmatpush1.xpose.msra.mxu0 0.0
      %1144 = vmatprep.subr.mxu0 0.0
      %1145 = vmatpush1.xpose.msra.mxu0 0.0
      %1146 = vmatprep.subr.mxu0 0.0
      %1147 = vmatpush1.xpose.msra.mxu0 0.0
      %1148 = vmatprep.subr.mxu0 0.0
      %1149 = vmatpush1.xpose.msra.mxu0 0.0
      %1150 = vmatprep.subr.mxu0 0.0
      %1151 = vmatpush1.xpose.msra.mxu0 0.0
      %1152 = vmatprep.subr.mxu0 0.0
      %1153 = vmatpush1.xpose.msra.mxu0 0.0
      %1154 = vmatprep.subr.mxu0 0.0
      %1155 = vmatpush1.xpose.msra.mxu0 0.0
      %1156 = vmatprep.subr.mxu0 0.0
      %1157 = vmatpush1.xpose.msra.mxu0 0.0
      %1158 = vmatprep.subr.mxu0 0.0
      %1159 = vmatpush1.xpose.msra.mxu0 0.0
      %1160 = vmatprep.subr.mxu0 0.0
      %1161 = vmatpush1.xpose.msra.mxu0 0.0
      %1162 = vmatprep.subr.mxu0 0.0
      %1163 = vmatpush1.xpose.msra.mxu0 0.0
      %1164 = vmatprep.subr.mxu0 0.0
      %1165 = vmatpush1.xpose.msra.mxu0 0.0
      %1166 = vmatprep.subr.mxu0 0.0
      %1167 = vmatpush1.xpose.msra.mxu0 0.0
      %1168 = vmatprep.subr.mxu0 0.0
      %1169 = vmatpush1.xpose.msra.mxu0 0.0
      %1170 = vmatprep.subr.mxu0 0.0
      %1171 = vmatpush1.xpose.msra.mxu0 0.0
      %1172 = vmatprep.subr.mxu0 0.0
      %1173 = vmatpush1.xpose.msra.mxu0 0.0
      %1174 = vmatprep.subr.mxu0 0.0
      %1175 = vmatpush1.xpose.msra.mxu0 0.0
      %1176 = vmatprep.subr.mxu0 0.0
      %1177 = vmatpush1.xpose.msra.mxu0 0.0
      %1178 = vmatprep.subr.mxu0 0.0
      %1179 = vmatpush1.xpose.msra.mxu0 0.0
      %1180 = vmatprep.subr.mxu0 0.0
      %1181 = vmatpush1.xpose.msra.mxu0 0.0
      %1182 = vmatprep.subr.mxu0 0.0
      %1183 = vmatpush1.xpose.msra.mxu0 0.0
      %1184 = vmatprep.subr.mxu0 0.0
      %1185 = vmatpush1.xpose.msra.mxu0 0.0
      %1186 = vmatprep.subr.mxu0 0.0
      %1187 = vmatpush1.xpose.msra.mxu0 0.0
      %1188 = vmatprep.subr.mxu0 0.0
      %1189 = vmatpush1.xpose.msra.mxu0 0.0
      %1190 = vmatprep.subr.mxu0 0.0
      %1191 = vmatpush1.xpose.msra.mxu0 0.0
      %1192 = vmatprep.subr.mxu0 0.0
      %1193 = vmatpush1.xpose.msra.mxu0 0.0
      %1194 = vmatprep.subr.mxu0 0.0
      %1195 = vmatpush1.xpose.msra.mxu0 0.0
      %1196 = vmatprep.mubr.f32.mxu0 0.0
      %1197 = vmatmul.mubr.f32.gmra.mrb[0].mxu0 %v1127
      %v1198 = vpop.f32.mrb[0].mxu0
      %v1199 = vadd.f32 0.0, %v1198
      %v1200 = vpop.f32.mrb[0].mxu0
      %1201 = vdwg.mxu0
      %v1203 = vsel %vm649, %v1046, 0
      %v1206 = vsel %vm649, %v983, 0
      %1208 = vmatprep.subr.mxu0 0.0
      %1209 = vmatpush1.xpose.msra.mxu0 %v1206
      %1210 = vmatprep.subr.mxu0 0.0
      %1211 = vmatpush1.xpose.msra.mxu0 0.0
      %1212 = vmatprep.subr.mxu0 0.0
      %1213 = vmatpush1.xpose.msra.mxu0 0.0
      %1214 = vmatprep.subr.mxu0 0.0
      %1215 = vmatpush1.xpose.msra.mxu0 0.0
      %1216 = vmatprep.subr.mxu0 0.0
      %1217 = vmatpush1.xpose.msra.mxu0 0.0
      %1218 = vmatprep.subr.mxu0 0.0
      %1219 = vmatpush1.xpose.msra.mxu0 0.0
      %1220 = vmatprep.subr.mxu0 0.0
      %1221 = vmatpush1.xpose.msra.mxu0 0.0
      %1222 = vmatprep.subr.mxu0 0.0
      %1223 = vmatpush1.xpose.msra.mxu0 0.0
      %1224 = vmatprep.subr.mxu0 0.0
      %1225 = vmatpush1.xpose.msra.mxu0 0.0
      %1226 = vmatprep.subr.mxu0 0.0
      %1227 = vmatpush1.xpose.msra.mxu0 0.0
      %1228 = vmatprep.subr.mxu0 0.0
      %1229 = vmatpush1.xpose.msra.mxu0 0.0
      %1230 = vmatprep.subr.mxu0 0.0
      %1231 = vmatpush1.xpose.msra.mxu0 0.0
      %1232 = vmatprep.subr.mxu0 0.0
      %1233 = vmatpush1.xpose.msra.mxu0 0.0
      %1234 = vmatprep.subr.mxu0 0.0
      %1235 = vmatpush1.xpose.msra.mxu0 0.0
      %1236 = vmatprep.subr.mxu0 0.0
      %1237 = vmatpush1.xpose.msra.mxu0 0.0
      %1238 = vmatprep.subr.mxu0 0.0
      %1239 = vmatpush1.xpose.msra.mxu0 0.0
      %1240 = vmatprep.subr.mxu0 0.0
      %1241 = vmatpush1.xpose.msra.mxu0 0.0
      %1242 = vmatprep.subr.mxu0 0.0
      %1243 = vmatpush1.xpose.msra.mxu0 0.0
      %1244 = vmatprep.subr.mxu0 0.0
      %1245 = vmatpush1.xpose.msra.mxu0 0.0
      %1246 = vmatprep.subr.mxu0 0.0
      %1247 = vmatpush1.xpose.msra.mxu0 0.0
      %1248 = vmatprep.subr.mxu0 0.0
      %1249 = vmatpush1.xpose.msra.mxu0 0.0
      %1250 = vmatprep.subr.mxu0 0.0
      %1251 = vmatpush1.xpose.msra.mxu0 0.0
      %1252 = vmatprep.subr.mxu0 0.0
      %1253 = vmatpush1.xpose.msra.mxu0 0.0
      %1254 = vmatprep.subr.mxu0 0.0
      %1255 = vmatpush1.xpose.msra.mxu0 0.0
      %1256 = vmatprep.subr.mxu0 0.0
      %1257 = vmatpush1.xpose.msra.mxu0 0.0
      %1258 = vmatprep.subr.mxu0 0.0
      %1259 = vmatpush1.xpose.msra.mxu0 0.0
      %1260 = vmatprep.subr.mxu0 0.0
      %1261 = vmatpush1.xpose.msra.mxu0 0.0
      %1262 = vmatprep.subr.mxu0 0.0
      %1263 = vmatpush1.xpose.msra.mxu0 0.0
      %1264 = vmatprep.subr.mxu0 0.0
      %1265 = vmatpush1.xpose.msra.mxu0 0.0
      %1266 = vmatprep.subr.mxu0 0.0
      %1267 = vmatpush1.xpose.msra.mxu0 0.0
      %1268 = vmatprep.subr.mxu0 0.0
      %1269 = vmatpush1.xpose.msra.mxu0 0.0
      %1270 = vmatprep.subr.mxu0 0.0
      %1271 = vmatpush1.xpose.msra.mxu0 0.0
      %1272 = vmatprep.mubr.f32.mxu0 0.0
      %1273 = vmatmul.mubr.f32.gmra.mrb[0].mxu0 %v1203
      %v1274 = vpop.f32.mrb[0].mxu0
      %v1275 = vadd.f32 0.0, %v1274
      %v1276 = vpop.f32.mrb[0].mxu0
      %1277 = vdwg.mxu0
      %v1279 = vsel %vm649, %v1078, 0
      %v1282 = vsel %vm649, %v984, 0
      %1284 = vmatprep.subr.mxu0 0.0
      %1285 = vmatpush1.xpose.msra.mxu0 %v1282
      %1286 = vmatprep.subr.mxu0 0.0
      %1287 = vmatpush1.xpose.msra.mxu0 0.0
      %1288 = vmatprep.subr.mxu0 0.0
      %1289 = vmatpush1.xpose.msra.mxu0 0.0
      %1290 = vmatprep.subr.mxu0 0.0
      %1291 = vmatpush1.xpose.msra.mxu0 0.0
      %1292 = vmatprep.subr.mxu0 0.0
      %1293 = vmatpush1.xpose.msra.mxu0 0.0
      %1294 = vmatprep.subr.mxu0 0.0
      %1295 = vmatpush1.xpose.msra.mxu0 0.0
      %1296 = vmatprep.subr.mxu0 0.0
      %1297 = vmatpush1.xpose.msra.mxu0 0.0
      %1298 = vmatprep.subr.mxu0 0.0
      %1299 = vmatpush1.xpose.msra.mxu0 0.0
      %1300 = vmatprep.subr.mxu0 0.0
      %1301 = vmatpush1.xpose.msra.mxu0 0.0
      %1302 = vmatprep.subr.mxu0 0.0
      %1303 = vmatpush1.xpose.msra.mxu0 0.0
      %1304 = vmatprep.subr.mxu0 0.0
      %1305 = vmatpush1.xpose.msra.mxu0 0.0
      %1306 = vmatprep.subr.mxu0 0.0
      %1307 = vmatpush1.xpose.msra.mxu0 0.0
      %1308 = vmatprep.subr.mxu0 0.0
      %1309 = vmatpush1.xpose.msra.mxu0 0.0
      %1310 = vmatprep.subr.mxu0 0.0
      %1311 = vmatpush1.xpose.msra.mxu0 0.0
      %1312 = vmatprep.subr.mxu0 0.0
      %1313 = vmatpush1.xpose.msra.mxu0 0.0
      %1314 = vmatprep.subr.mxu0 0.0
      %1315 = vmatpush1.xpose.msra.mxu0 0.0
      %1316 = vmatprep.subr.mxu0 0.0
      %1317 = vmatpush1.xpose.msra.mxu0 0.0
      %1318 = vmatprep.subr.mxu0 0.0
      %1319 = vmatpush1.xpose.msra.mxu0 0.0
      %1320 = vmatprep.subr.mxu0 0.0
      %1321 = vmatpush1.xpose.msra.mxu0 0.0
      %1322 = vmatprep.subr.mxu0 0.0
      %1323 = vmatpush1.xpose.msra.mxu0 0.0
      %1324 = vmatprep.subr.mxu0 0.0
      %1325 = vmatpush1.xpose.msra.mxu0 0.0
      %1326 = vmatprep.subr.mxu0 0.0
      %1327 = vmatpush1.xpose.msra.mxu0 0.0
      %1328 = vmatprep.subr.mxu0 0.0
      %1329 = vmatpush1.xpose.msra.mxu0 0.0
      %1330 = vmatprep.subr.mxu0 0.0
      %1331 = vmatpush1.xpose.msra.mxu0 0.0
      %1332 = vmatprep.subr.mxu0 0.0
      %1333 = vmatpush1.xpose.msra.mxu0 0.0
      %1334 = vmatprep.subr.mxu0 0.0
      %1335 = vmatpush1.xpose.msra.mxu0 0.0
      %1336 = vmatprep.subr.mxu0 0.0
      %1337 = vmatpush1.xpose.msra.mxu0 0.0
      %1338 = vmatprep.subr.mxu0 0.0
      %1339 = vmatpush1.xpose.msra.mxu0 0.0
      %1340 = vmatprep.subr.mxu0 0.0
      %1341 = vmatpush1.xpose.msra.mxu0 0.0
      %1342 = vmatprep.subr.mxu0 0.0
      %1343 = vmatpush1.xpose.msra.mxu0 0.0
      %1344 = vmatprep.subr.mxu0 0.0
      %1345 = vmatpush1.xpose.msra.mxu0 0.0
      %1346 = vmatprep.subr.mxu0 0.0
      %1347 = vmatpush1.xpose.msra.mxu0 0.0
      %1348 = vmatprep.mubr.f32.mxu0 0.0
      %1349 = vmatmul.mubr.f32.gmra.mrb[0].mxu0 %v1279
      %v1350 = vpop.f32.mrb[0].mxu0
      %v1351 = vadd.f32 0.0, %v1350
      %v1352 = vpop.f32.mrb[0].mxu0
      %1353 = vdwg.mxu0
      %v1355 = vsel %vm649, %v1110, 0
      %v1358 = vsel %vm649, %v985, 0
      %1360 = vmatprep.subr.mxu0 0.0
      %1361 = vmatpush1.xpose.msra.mxu0 %v1358
      %1362 = vmatprep.subr.mxu0 0.0
      %1363 = vmatpush1.xpose.msra.mxu0 0.0
      %1364 = vmatprep.subr.mxu0 0.0
      %1365 = vmatpush1.xpose.msra.mxu0 0.0
      %1366 = vmatprep.subr.mxu0 0.0
      %1367 = vmatpush1.xpose.msra.mxu0 0.0
      %1368 = vmatprep.subr.mxu0 0.0
      %1369 = vmatpush1.xpose.msra.mxu0 0.0
      %1370 = vmatprep.subr.mxu0 0.0
      %1371 = vmatpush1.xpose.msra.mxu0 0.0
      %1372 = vmatprep.subr.mxu0 0.0
      %1373 = vmatpush1.xpose.msra.mxu0 0.0
      %1374 = vmatprep.subr.mxu0 0.0
      %1375 = vmatpush1.xpose.msra.mxu0 0.0
      %1376 = vmatprep.subr.mxu0 0.0
      %1377 = vmatpush1.xpose.msra.mxu0 0.0
      %1378 = vmatprep.subr.mxu0 0.0
      %1379 = vmatpush1.xpose.msra.mxu0 0.0
      %1380 = vmatprep.subr.mxu0 0.0
      %1381 = vmatpush1.xpose.msra.mxu0 0.0
      %1382 = vmatprep.subr.mxu0 0.0
      %1383 = vmatpush1.xpose.msra.mxu0 0.0
      %1384 = vmatprep.subr.mxu0 0.0
      %1385 = vmatpush1.xpose.msra.mxu0 0.0
      %1386 = vmatprep.subr.mxu0 0.0
      %1387 = vmatpush1.xpose.msra.mxu0 0.0
      %1388 = vmatprep.subr.mxu0 0.0
      %1389 = vmatpush1.xpose.msra.mxu0 0.0
      %1390 = vmatprep.subr.mxu0 0.0
      %1391 = vmatpush1.xpose.msra.mxu0 0.0
      %1392 = vmatprep.subr.mxu0 0.0
      %1393 = vmatpush1.xpose.msra.mxu0 0.0
      %1394 = vmatprep.subr.mxu0 0.0
      %1395 = vmatpush1.xpose.msra.mxu0 0.0
      %1396 = vmatprep.subr.mxu0 0.0
      %1397 = vmatpush1.xpose.msra.mxu0 0.0
      %1398 = vmatprep.subr.mxu0 0.0
      %1399 = vmatpush1.xpose.msra.mxu0 0.0
      %1400 = vmatprep.subr.mxu0 0.0
      %1401 = vmatpush1.xpose.msra.mxu0 0.0
      %1402 = vmatprep.subr.mxu0 0.0
      %1403 = vmatpush1.xpose.msra.mxu0 0.0
      %1404 = vmatprep.subr.mxu0 0.0
      %1405 = vmatpush1.xpose.msra.mxu0 0.0
      %1406 = vmatprep.subr.mxu0 0.0
      %1407 = vmatpush1.xpose.msra.mxu0 0.0
      %1408 = vmatprep.subr.mxu0 0.0
      %1409 = vmatpush1.xpose.msra.mxu0 0.0
      %1410 = vmatprep.subr.mxu0 0.0
      %1411 = vmatpush1.xpose.msra.mxu0 0.0
      %1412 = vmatprep.subr.mxu0 0.0
      %1413 = vmatpush1.xpose.msra.mxu0 0.0
      %1414 = vmatprep.subr.mxu0 0.0
      %1415 = vmatpush1.xpose.msra.mxu0 0.0
      %1416 = vmatprep.subr.mxu0 0.0
      %1417 = vmatpush1.xpose.msra.mxu0 0.0
      %1418 = vmatprep.subr.mxu0 0.0
      %1419 = vmatpush1.xpose.msra.mxu0 0.0
      %1420 = vmatprep.subr.mxu0 0.0
      %1421 = vmatpush1.xpose.msra.mxu0 0.0
      %1422 = vmatprep.subr.mxu0 0.0
      %1423 = vmatpush1.xpose.msra.mxu0 0.0
      %1424 = vmatprep.mubr.f32.mxu0 0.0
      %1425 = vmatmul.mubr.f32.gmra.mrb[0].mxu0 %v1355
      %v1426 = vpop.f32.mrb[0].mxu0
      %v1427 = vadd.f32 0.0, %v1426
      %v1428 = vpop.f32.mrb[0].mxu0
      %1429 = vdwg.mxu0
      %1430 = vxpose.xlu0.b32.start [1/16] %v1199, 128
      %1431 = vxpose.xlu0.b32.cont [2/16] 0.0, 128
      %1432 = vxpose.xlu0.b32.cont [3/16] 0.0, 128
      %1433 = vxpose.xlu0.b32.cont [4/16] 0.0, 128
      %1434 = vxpose.xlu0.b32.cont [5/16] 0.0, 128
      %1435 = vxpose.xlu0.b32.cont [6/16] 0.0, 128
      %1436 = vxpose.xlu0.b32.cont [7/16] 0.0, 128
      %1437 = vxpose.xlu0.b32.cont [8/16] 0.0, 128
      %1438 = vxpose.xlu0.b32.cont [9/16] 0.0, 128
      %1439 = vxpose.xlu0.b32.cont [10/16] 0.0, 128
      %1440 = vxpose.xlu0.b32.cont [11/16] 0.0, 128
      %1441 = vxpose.xlu0.b32.cont [12/16] 0.0, 128
      %1442 = vxpose.xlu0.b32.cont [13/16] 0.0, 128
      %1443 = vxpose.xlu0.b32.cont [14/16] 0.0, 128
      %1444 = vxpose.xlu0.b32.cont [15/16] 0.0, 128
      %1445 = vxpose.xlu0.b32.end [16/16] 0.0, 128
      %v1446 = vpop.trf.xlu0
      %v1447 = vpop.trf.xlu0
      %v1448 = vpop.trf.xlu0
      %v1449 = vpop.trf.xlu0
      %v1450 = vpop.trf.xlu0
      %v1451 = vpop.trf.xlu0
      %v1452 = vpop.trf.xlu0
      %v1453 = vpop.trf.xlu0
      %v1454 = vpop.trf.xlu0
      %v1455 = vpop.trf.xlu0
      %v1456 = vpop.trf.xlu0
      %v1457 = vpop.trf.xlu0
      %v1458 = vpop.trf.xlu0
      %v1459 = vpop.trf.xlu0
      %v1460 = vpop.trf.xlu0
      %v1461 = vpop.trf.xlu0
      %1462 = vxpose.xlu0.b32.start [1/16] %v1275, 128
      %1463 = vxpose.xlu0.b32.cont [2/16] 0.0, 128
      %1464 = vxpose.xlu0.b32.cont [3/16] 0.0, 128
      %1465 = vxpose.xlu0.b32.cont [4/16] 0.0, 128
      %1466 = vxpose.xlu0.b32.cont [5/16] 0.0, 128
      %1467 = vxpose.xlu0.b32.cont [6/16] 0.0, 128
      %1468 = vxpose.xlu0.b32.cont [7/16] 0.0, 128
      %1469 = vxpose.xlu0.b32.cont [8/16] 0.0, 128
      %1470 = vxpose.xlu0.b32.cont [9/16] 0.0, 128
      %1471 = vxpose.xlu0.b32.cont [10/16] 0.0, 128
      %1472 = vxpose.xlu0.b32.cont [11/16] 0.0, 128
      %1473 = vxpose.xlu0.b32.cont [12/16] 0.0, 128
      %1474 = vxpose.xlu0.b32.cont [13/16] 0.0, 128
      %1475 = vxpose.xlu0.b32.cont [14/16] 0.0, 128
      %1476 = vxpose.xlu0.b32.cont [15/16] 0.0, 128
      %1477 = vxpose.xlu0.b32.end [16/16] 0.0, 128
      %v1478 = vpop.trf.xlu0
      %v1479 = vpop.trf.xlu0
      %v1480 = vpop.trf.xlu0
      %v1481 = vpop.trf.xlu0
      %v1482 = vpop.trf.xlu0
      %v1483 = vpop.trf.xlu0
      %v1484 = vpop.trf.xlu0
      %v1485 = vpop.trf.xlu0
      %v1486 = vpop.trf.xlu0
      %v1487 = vpop.trf.xlu0
      %v1488 = vpop.trf.xlu0
      %v1489 = vpop.trf.xlu0
      %v1490 = vpop.trf.xlu0
      %v1491 = vpop.trf.xlu0
      %v1492 = vpop.trf.xlu0
      %v1493 = vpop.trf.xlu0
      %1494 = vxpose.xlu0.b32.start [1/16] %v1351, 128
      %1495 = vxpose.xlu0.b32.cont [2/16] 0.0, 128
      %1496 = vxpose.xlu0.b32.cont [3/16] 0.0, 128
      %1497 = vxpose.xlu0.b32.cont [4/16] 0.0, 128
      %1498 = vxpose.xlu0.b32.cont [5/16] 0.0, 128
      %1499 = vxpose.xlu0.b32.cont [6/16] 0.0, 128
      %1500 = vxpose.xlu0.b32.cont [7/16] 0.0, 128
      %1501 = vxpose.xlu0.b32.cont [8/16] 0.0, 128
      %1502 = vxpose.xlu0.b32.cont [9/16] 0.0, 128
      %1503 = vxpose.xlu0.b32.cont [10/16] 0.0, 128
      %1504 = vxpose.xlu0.b32.cont [11/16] 0.0, 128
      %1505 = vxpose.xlu0.b32.cont [12/16] 0.0, 128
      %1506 = vxpose.xlu0.b32.cont [13/16] 0.0, 128
      %1507 = vxpose.xlu0.b32.cont [14/16] 0.0, 128
      %1508 = vxpose.xlu0.b32.cont [15/16] 0.0, 128
      %1509 = vxpose.xlu0.b32.end [16/16] 0.0, 128
      %v1510 = vpop.trf.xlu0
      %v1511 = vpop.trf.xlu0
      %v1512 = vpop.trf.xlu0
      %v1513 = vpop.trf.xlu0
      %v1514 = vpop.trf.xlu0
      %v1515 = vpop.trf.xlu0
      %v1516 = vpop.trf.xlu0
      %v1517 = vpop.trf.xlu0
      %v1518 = vpop.trf.xlu0
      %v1519 = vpop.trf.xlu0
      %v1520 = vpop.trf.xlu0
      %v1521 = vpop.trf.xlu0
      %v1522 = vpop.trf.xlu0
      %v1523 = vpop.trf.xlu0
      %v1524 = vpop.trf.xlu0
      %v1525 = vpop.trf.xlu0
      %1526 = vxpose.xlu0.b32.start [1/16] %v1427, 128
      %1527 = vxpose.xlu0.b32.cont [2/16] 0.0, 128
      %1528 = vxpose.xlu0.b32.cont [3/16] 0.0, 128
      %1529 = vxpose.xlu0.b32.cont [4/16] 0.0, 128
      %1530 = vxpose.xlu0.b32.cont [5/16] 0.0, 128
      %1531 = vxpose.xlu0.b32.cont [6/16] 0.0, 128
      %1532 = vxpose.xlu0.b32.cont [7/16] 0.0, 128
      %1533 = vxpose.xlu0.b32.cont [8/16] 0.0, 128
      %1534 = vxpose.xlu0.b32.cont [9/16] 0.0, 128
      %1535 = vxpose.xlu0.b32.cont [10/16] 0.0, 128
      %1536 = vxpose.xlu0.b32.cont [11/16] 0.0, 128
      %1537 = vxpose.xlu0.b32.cont [12/16] 0.0, 128
      %1538 = vxpose.xlu0.b32.cont [13/16] 0.0, 128
      %1539 = vxpose.xlu0.b32.cont [14/16] 0.0, 128
      %1540 = vxpose.xlu0.b32.cont [15/16] 0.0, 128
      %1541 = vxpose.xlu0.b32.end [16/16] 0.0, 128
      %v1542 = vpop.trf.xlu0
      %v1543 = vpop.trf.xlu0
      %v1544 = vpop.trf.xlu0
      %v1545 = vpop.trf.xlu0
      %v1546 = vpop.trf.xlu0
      %v1547 = vpop.trf.xlu0
      %v1548 = vpop.trf.xlu0
      %v1549 = vpop.trf.xlu0
      %v1550 = vpop.trf.xlu0
      %v1551 = vpop.trf.xlu0
      %v1552 = vpop.trf.xlu0
      %v1553 = vpop.trf.xlu0
      %v1554 = vpop.trf.xlu0
      %v1555 = vpop.trf.xlu0
      %v1556 = vpop.trf.xlu0
      %v1557 = vpop.trf.xlu0
      %v1558 = vcombine.low %v1446, %v1510
      %v1559 = vcombine.high %v1446, %v1510
      %v1561 = vunpack.c.l.s4 1983009808
      %v1562 = vunpack.c.0.s8 %v1561
      %v1563 = vlaneseq
      %v1564 = vshrl.u32 %v1563, 7
      %v1565 = vsub.s32 %v1562, %v1564
      %v1566 = vrot.slane %v1558, %v1565
      %v1568 = vunpack.c.l.s4 1983009808
      %v1569 = vunpack.c.0.s8 %v1568
      %v1570 = vlaneseq
      %v1571 = vshrl.u32 %v1570, 7
      %v1572 = vsub.s32 %v1569, %v1571
      %v1573 = vrot.slane %v1559, %v1572
      %v1574 = vcombine.low %v1478, %v1542
      %v1575 = vcombine.high %v1478, %v1542
      %v1577 = vunpack.c.l.s4 1983009808
      %v1578 = vunpack.c.0.s8 %v1577
      %v1579 = vlaneseq
      %v1580 = vshrl.u32 %v1579, 7
      %v1581 = vsub.s32 %v1578, %v1580
      %v1582 = vrot.slane %v1574, %v1581
      %v1584 = vunpack.c.l.s4 1983009808
      %v1585 = vunpack.c.0.s8 %v1584
      %v1586 = vlaneseq
      %v1587 = vshrl.u32 %v1586, 7
      %v1588 = vsub.s32 %v1585, %v1587
      %v1589 = vrot.slane %v1575, %v1588
      %v1590 = vcombine.low %v1566, %v1582
      %v1591 = vcombine.high %v1566, %v1582
      %v1593 = vunpack.c.l.s4 1934713408
      %v1594 = vunpack.c.0.s8 %v1593
      %v1595 = vlaneseq
      %v1596 = vshrl.u32 %v1595, 7
      %v1597 = vsub.s32 %v1594, %v1596
      %v1598 = vrot.slane %v1590, %v1597
      %v1600 = vunpack.c.l.s4 1934713408
      %v1601 = vunpack.c.0.s8 %v1600
      %v1602 = vlaneseq
      %v1603 = vshrl.u32 %v1602, 7
      %v1604 = vsub.s32 %v1601, %v1603
      %v1605 = vrot.slane %v1591, %v1604
      %v1606 = vcombine.low %v1573, %v1589
      %v1607 = vcombine.high %v1573, %v1589
      %v1609 = vunpack.c.l.s4 1934713408
      %v1610 = vunpack.c.0.s8 %v1609
      %v1611 = vlaneseq
      %v1612 = vshrl.u32 %v1611, 7
      %v1613 = vsub.s32 %v1610, %v1612
      %v1614 = vrot.slane %v1606, %v1613
      %v1616 = vunpack.c.l.s4 1934713408
      %v1617 = vunpack.c.0.s8 %v1616
      %v1618 = vlaneseq
      %v1619 = vshrl.u32 %v1618, 7
      %v1620 = vsub.s32 %v1617, %v1619
      %v1621 = vrot.slane %v1607, %v1620
      %v1622 = vcombine.high %v1598, 0.0
      %v1623 = vcombine.high %v1605, 0.0
      %v1624 = vcombine.high %v1614, 0.0
      %v1625 = vcombine.high %v1621, 0.0
      %v1626 = vcombine.low %v1598, %v1605
      %v1628 = vunpack.c.l.s4 1983009808
      %v1629 = vunpack.c.0.s8 %v1628
      %v1630 = vlaneseq
      %v1631 = vshrl.u32 %v1630, 7
      %v1632 = vsub.s32 %v1629, %v1631
      %v1633 = vrot.slane %v1626, %v1632
      %v1634 = vcombine.low %v1622, %v1623
      %v1636 = vunpack.c.l.s4 1983009808
      %v1637 = vunpack.c.0.s8 %v1636
      %v1638 = vlaneseq
      %v1639 = vshrl.u32 %v1638, 7
      %v1640 = vsub.s32 %v1637, %v1639
      %v1641 = vrot.slane %v1634, %v1640
      %v1642 = vcombine.low %v1614, %v1621
      %v1644 = vunpack.c.l.s4 1983009808
      %v1645 = vunpack.c.0.s8 %v1644
      %v1646 = vlaneseq
      %v1647 = vshrl.u32 %v1646, 7
      %v1648 = vsub.s32 %v1645, %v1647
      %v1649 = vrot.slane %v1642, %v1648
      %v1650 = vcombine.low %v1624, %v1625
      %v1652 = vunpack.c.l.s4 1983009808
      %v1653 = vunpack.c.0.s8 %v1652
      %v1654 = vlaneseq
      %v1655 = vshrl.u32 %v1654, 7
      %v1656 = vsub.s32 %v1653, %v1655
      %v1657 = vrot.slane %v1650, %v1656
      %v1658 = vcombine.low %v1633, %v1641
      %v1659 = vcombine.high %v1633, %v1641
      %v1661 = vunpack.c.l.s4 1934713408
      %v1662 = vunpack.c.0.s8 %v1661
      %v1663 = vlaneseq
      %v1664 = vshrl.u32 %v1663, 7
      %v1665 = vsub.s32 %v1662, %v1664
      %v1666 = vrot.slane %v1658, %v1665
      %v1668 = vunpack.c.l.s4 1934713408
      %v1669 = vunpack.c.0.s8 %v1668
      %v1670 = vlaneseq
      %v1671 = vshrl.u32 %v1670, 7
      %v1672 = vsub.s32 %v1669, %v1671
      %v1673 = vrot.slane %v1659, %v1672
      %v1674 = vcombine.low %v1649, %v1657
      %v1675 = vcombine.high %v1649, %v1657
      %v1677 = vunpack.c.l.s4 1934713408
      %v1678 = vunpack.c.0.s8 %v1677
      %v1679 = vlaneseq
      %v1680 = vshrl.u32 %v1679, 7
      %v1681 = vsub.s32 %v1678, %v1680
      %v1682 = vrot.slane %v1674, %v1681
      %v1684 = vunpack.c.l.s4 1934713408
      %v1685 = vunpack.c.0.s8 %v1684
      %v1686 = vlaneseq
      %v1687 = vshrl.u32 %v1686, 7
      %v1688 = vsub.s32 %v1685, %v1687
      %v1689 = vrot.slane %v1675, %v1688
      %v1690 = vcombine.low %v1666, %v1682
      %v1691 = vcombine.high %v1666, %v1682
      %v1692 = vcombine.low %v1673, %v1689
      %v1693 = vcombine.high %v1673, %v1689
      %1695 = vrot.lane.b32.xlu0 %v1691, 8
      %v1696 = vpop.permute.xlu0 %1695
      %1699 = vrot.lane.b32.xlu0 %v1692, 16
      %v1700 = vpop.permute.xlu0 %1699
      %1703 = vrot.lane.b32.xlu0 %v1693, 24
      %v1704 = vpop.permute.xlu0 %1703
      %v1706 = vsel %vm649, %v1690, %v1696
      %vm1707 = vcmask 130048
      %v1708 = vsel %vm1707, %v1706, %v1700
      %vm1709 = vcmask 195584
      %v1710 = vsel %vm1709, %v1708, %v1704
      %v1712 = vlaneseq
      %v1713 = vshrl.u32 %v1712, 7
      %v1714 = vsub.s32 0, %v1713
      %v1715 = vrot.slane %v501, %v1714
      %v1718 = vsel %vm331, %v1710, 0
      %1720 = vmatprep.subr.mxu0 0.0
      %1721 = vmatpush1.msra.mxu0 %v497
      %1722 = vmatprep.subr.mxu0 0.0
      %1723 = vmatpush1.msra.mxu0 %v498
      %1724 = vmatprep.subr.mxu0 0.0
      %1725 = vmatpush1.msra.mxu0 %v499
      %1726 = vmatprep.subr.mxu0 0.0
      %1727 = vmatpush1.msra.mxu0 %v500
      %1728 = vmatprep.subr.mxu0 0.0
      %1729 = vmatpush1.msra.mxu0 0.0
      %1730 = vmatprep.subr.mxu0 0.0
      %1731 = vmatpush1.msra.mxu0 0.0
      %1732 = vmatprep.subr.mxu0 0.0
      %1733 = vmatpush1.msra.mxu0 0.0
      %1734 = vmatprep.subr.mxu0 0.0
      %1735 = vmatpush1.msra.mxu0 0.0
      %1736 = vmatprep.subr.mxu0 0.0
      %1737 = vmatpush1.msra.mxu0 0.0
      %1738 = vmatprep.subr.mxu0 0.0
      %1739 = vmatpush1.msra.mxu0 0.0
      %1740 = vmatprep.subr.mxu0 0.0
      %1741 = vmatpush1.msra.mxu0 0.0
      %1742 = vmatprep.subr.mxu0 0.0
      %1743 = vmatpush1.msra.mxu0 0.0
      %1744 = vmatprep.subr.mxu0 0.0
      %1745 = vmatpush1.msra.mxu0 0.0
      %1746 = vmatprep.subr.mxu0 0.0
      %1747 = vmatpush1.msra.mxu0 0.0
      %1748 = vmatprep.subr.mxu0 0.0
      %1749 = vmatpush1.msra.mxu0 0.0
      %1750 = vmatprep.subr.mxu0 0.0
      %1751 = vmatpush1.msra.mxu0 0.0
      %1752 = vmatprep.subr.mxu0 0.0
      %1753 = vmatpush1.msra.mxu0 0.0
      %1754 = vmatprep.subr.mxu0 0.0
      %1755 = vmatpush1.msra.mxu0 0.0
      %1756 = vmatprep.subr.mxu0 0.0
      %1757 = vmatpush1.msra.mxu0 0.0
      %1758 = vmatprep.subr.mxu0 0.0
      %1759 = vmatpush1.msra.mxu0 0.0
      %1760 = vmatprep.subr.mxu0 0.0
      %1761 = vmatpush1.msra.mxu0 0.0
      %1762 = vmatprep.subr.mxu0 0.0
      %1763 = vmatpush1.msra.mxu0 0.0
      %1764 = vmatprep.subr.mxu0 0.0
      %1765 = vmatpush1.msra.mxu0 0.0
      %1766 = vmatprep.subr.mxu0 0.0
      %1767 = vmatpush1.msra.mxu0 0.0
      %1768 = vmatprep.subr.mxu0 0.0
      %1769 = vmatpush1.msra.mxu0 0.0
      %1770 = vmatprep.subr.mxu0 0.0
      %1771 = vmatpush1.msra.mxu0 0.0
      %1772 = vmatprep.subr.mxu0 0.0
      %1773 = vmatpush1.msra.mxu0 0.0
      %1774 = vmatprep.subr.mxu0 0.0
      %1775 = vmatpush1.msra.mxu0 0.0
      %1776 = vmatprep.subr.mxu0 0.0
      %1777 = vmatpush1.msra.mxu0 0.0
      %1778 = vmatprep.subr.mxu0 0.0
      %1779 = vmatpush1.msra.mxu0 0.0
      %1780 = vmatprep.subr.mxu0 0.0
      %1781 = vmatpush1.msra.mxu0 0.0
      %1782 = vmatprep.subr.mxu0 0.0
      %1783 = vmatpush1.msra.mxu0 0.0
      %1784 = vmatprep.mubr.f32.mxu0 0.0
      %1785 = vmatmul.mubr.f32.gmra.mrb[0].mxu0 %v1718
      %v1786 = vpop.f32.mrb[0].mxu0
      %v1787 = vadd.f32 %v1715, %v1786
      %v1788 = vpop.f32.mrb[0].mxu0
      %1789 = vdwg.mxu0
      %v1790 = vadd.f32 %v318, %v1787
      %v1791 = vsel %vm331, %v1790, 0.0
      %1792 = vadd.xlane.f32.xlu0 %v1791
      %v1793 = vpop.xlane.xlu0 %1792
      %v1794 = vrcp.pop 32.0
      %v1795 = vmul.f32 %v1793, %v1794
      %v1796 = vsub.f32 %v1790, %v1795
      %v1797 = vmul.f32 %v1796, %v1796
      %v1798 = vsel %vm331, %v1797, 0.0
      %1799 = vadd.xlane.f32.xlu0 %v1798
      %v1800 = vpop.xlane.xlu0 %1799
      %v1801 = vmul.f32 %v1800, %v1794
      %v1802 = vadd.f32 %v1801, 1e-05
      %v1803 = vrsqrt.pop %v1802
      %v1804 = vmul.f32 %v1796, %v1803
      %v1806 = vlaneseq
      %v1807 = vshrl.u32 %v1806, 7
      %v1808 = vsub.s32 0, %v1807
      %v1809 = vrot.slane %v502, %v1808
      %v1811 = vmul.f32 %v1804, %v1809
      %v1813 = vlaneseq
      %v1814 = vshrl.u32 %v1813, 7
      %v1815 = vsub.s32 0, %v1814
      %v1816 = vrot.slane %v503, %v1815
      %v1818 = vadd.f32 %v1811, %v1816
      %1819 = vst.msk [vmem:[%s317] sm:$0xff] %vm331, %v1818
      %p1820 = scmp.lt.s32.totalorder %s19, 1
      %s1821 = scalar_select %p1820, %s19, 1
      %s1822 = smul.addr %s1821, 8
      %s1823 = scalar_lea.vmem %s8, %s1822
      // Predicated region
      $region53: #{decoder_forward.7} parent=51 // pred_check
        %p1824 = pneg %p215
      $region54: #{decoder_forward.7} parent=51 // pred_check_branch
        %1826 = sbr.rel (%p1824) target = $region56
      $region55: #{decoder_forward.7} parent=51 // pred_region
        _
      $region56: #{decoder_forward.7} parent=51 // pred_fallthru
        _
    $region52: #{decoder_forward.7} parent=5 // pred_fallthru
      _
    %p1827 = scmp.le.s32.totalorder 2, %s14
    // Predicated region
    $region57: #{decoder_forward.7} parent=5 // pred_check
      %p1828 = pneg %p1827
    $region58: #{decoder_forward.7} parent=5 // pred_check_branch
      %1830 = sbr.rel (%p1828) target = $region60
    $region59: #{decoder_forward.7} parent=5 // pred_region
      %s1831 = ssub.s32 %s14, 2
      // Predicated region
      $region61: #{decoder_forward.7} parent=59 // pred_check
        %p1832 = pneg %p221
      $region62: #{decoder_forward.7} parent=59 // pred_check_branch
        %1834 = sbr.rel (%p1832) target = $region64
      $region63: #{decoder_forward.7} parent=59 // pred_region
        %p1835 = scmp.lt.s32.totalorder %s20, 1
        %s1836 = scalar_select %p1835, %s20, 1
        %s1837 = smul.addr %s1836, 8
        %s1838 = scalar_lea.vmem %s8, %s1837
      $region64: #{decoder_forward.7} parent=59 // pred_fallthru
        _
    $region60: #{decoder_forward.7} parent=5 // pred_fallthru
      _
  $region6: #{decoder_forward.7} parent=0 // loop_footer
    %s18 = sadd.s32 1, %s14
  $region7: #{decoder_forward.7} parent=0 // loop_footer_branch
    %13 = sbr.rel target = $region3
  $region8: #{decoder_forward.7} parent=0 // loop_exit
    _

</llo_original>
